<compile_context>
chip_gen: v6e
topology: v6e:2x2x1
jax: 0.10.0
libtpu: 0.0.40
codegen_flags: <defaults>
</compile_context>

<pallas_src>
import functools

import jax
import jax.numpy as jnp
from jax.experimental import pallas as pl
from jax.experimental.pallas import tpu as pltpu


def _basic_block_kernel(xp_ref, xid_ref, w1_ref, s1_ref, b1_ref,
                        w2_ref, s2_ref, b2_ref, o_ref, mid_ref, *, H, W, C):
    """One batch element per grid step (C = channels padded to a multiple of 128).

    xp_ref : (1, H+2, W+2, C) bf16   spatially padded input (NHWC)
    xid_ref: (1, H,   W,   C) f32    unpadded input (residual branch)
    w1_ref : (9*C, C)         bf16   conv1 weights, im2col layout
    s1_ref : (1, C)           f32    folded BN1 scale
    b1_ref : (1, C)           f32    folded BN1 bias
    w2_ref : (9*C, C)         bf16   conv2 weights, im2col layout
    s2_ref : (1, C)           f32    folded BN2 scale
    b2_ref : (1, C)           f32    folded BN2 bias
    o_ref  : (1, H, W, C)     f32    output (NHWC)
    mid_ref: (H+2, W+2, C)    f32    VMEM scratch: padded intermediate
    """
    # ---- conv1 (3x3, pad=1) as a single im2col MXU matmul: K = 9*C ----
    patch1 = jnp.concatenate(
        [xp_ref[0, dy:dy + H, dx:dx + W, :].reshape(H * W, C)
         for dy in range(3) for dx in range(3)], axis=-1)          # (H*W, 9*C) bf16
    acc1 = jnp.dot(patch1, w1_ref[...], preferred_element_type=jnp.float32)
    out1 = jnp.maximum(acc1 * s1_ref[...] + b1_ref[...], 0.0)       # bn1 + relu (f32)

    # Stage the padded intermediate in VMEM scratch.  Only the 1-pixel border
    # needs zeroing (the interior is fully overwritten every step).  Zeroing
    # the border per step is cheap and remains correct if the "parallel"
    # batch axis is split across TensorCores (a pid==0-only init would not
    # run on every core).
    zrow = jnp.zeros((1, W + 2, C), mid_ref.dtype)
    zcol = jnp.zeros((H + 2, 1, C), mid_ref.dtype)
    mid_ref[0:1, :, :] = zrow
    mid_ref[H + 1:H + 2, :, :] = zrow
    mid_ref[:, 0:1, :] = zcol
    mid_ref[:, W + 1:W + 2, :] = zcol
    mid_ref[1:H + 1, 1:W + 1, :] = out1.reshape(H, W, C)

    # ---- conv2 (3x3, pad=1), same im2col structure, bf16 MXU feed ----
    patch2 = jnp.concatenate(
        [mid_ref[dy:dy + H, dx:dx + W, :].reshape(H * W, C)
         for dy in range(3) for dx in range(3)], axis=-1).astype(jnp.bfloat16)
    acc2 = jnp.dot(patch2, w2_ref[...], preferred_element_type=jnp.float32)
    out2 = acc2 * s2_ref[...] + b2_ref[...]                          # bn2 (f32)

    # ---- residual add (lane-aligned f32 identity) + final relu ----
    identity = xid_ref[...].reshape(H * W, C)
    o_ref[...] = jnp.maximum(out2 + identity, 0.0).reshape(1, H, W, C)


def basic_block_forward(x_nchw, w1, bn1, w2, bn2, *, eps=1e-5):
    """x_nchw: (N, C, H, W) f32.  w*: (Cout, Cin, 3, 3) PyTorch layout.
    bn*: dict with gamma, beta, mean, var (each shape (Cout,)), eval mode."""
    N, Cin, H, W = x_nchw.shape
    Cout = w1.shape[0]
    assert Cin == Cout, "BasicBlock with downsample=None requires inplanes == planes"

    LANE = 128
    Cp = ((Cout + LANE - 1) // LANE) * LANE  # lane-dense channel padding

    # NCHW -> NHWC, pad channels to Cp (zeros), keep an f32 copy for the residual.
    x_nhwc = jnp.transpose(x_nchw, (0, 2, 3, 1)).astype(jnp.float32)
    x_res = jnp.pad(x_nhwc, ((0, 0), (0, 0), (0, 0), (0, Cp - Cin)))
    # Spatially padded (halo=1) bf16 copy feeds the MXU.
    xp = jnp.pad(x_res, ((0, 0), (1, 1), (1, 1), (0, 0))).astype(jnp.bfloat16)

    def prep_w(w):
        # (Cout, Cin, 3, 3) -> (3, 3, Cin, Cout) -> pad channels -> (9*Cp, Cp)
        # Row index = (dy*3 + dx)*Cp + cin, matching the im2col concat order.
        wt = jnp.transpose(w, (2, 3, 1, 0)).astype(jnp.float32)
        wt = jnp.pad(wt, ((0, 0), (0, 0), (0, Cp - Cin), (0, Cp - Cout)))
        return wt.reshape(9 * Cp, Cp).astype(jnp.bfloat16)

    w1m, w2m = prep_w(w1), prep_w(w2)

    def fold(bn):
        scale = bn["gamma"] / jnp.sqrt(bn["var"] + eps)
        bias = bn["beta"] - bn["mean"] * scale
        scale = jnp.pad(scale, (0, Cp - Cout)).reshape(1, Cp).astype(jnp.float32)
        bias = jnp.pad(bias, (0, Cp - Cout)).reshape(1, Cp).astype(jnp.float32)
        return scale, bias

    s1, b1 = fold(bn1)
    s2, b2 = fold(bn2)

    kernel = functools.partial(_basic_block_kernel, H=H, W=W, C=Cp)

    out_nhwc = pl.pallas_call(
        kernel,
        out_shape=jax.ShapeDtypeStruct((N, H, W, Cp), jnp.float32),
        grid_spec=pltpu.PrefetchScalarGridSpec(
            num_scalar_prefetch=0,
            grid=(N,),
            in_specs=[
                pl.BlockSpec((1, H + 2, W + 2, Cp), lambda n: (n, 0, 0, 0)),
                pl.BlockSpec((1, H, W, Cp), lambda n: (n, 0, 0, 0)),
                pl.BlockSpec((9 * Cp, Cp), lambda n: (0, 0)),
                pl.BlockSpec((1, Cp), lambda n: (0, 0)),
                pl.BlockSpec((1, Cp), lambda n: (0, 0)),
                pl.BlockSpec((9 * Cp, Cp), lambda n: (0, 0)),
                pl.BlockSpec((1, Cp), lambda n: (0, 0)),
                pl.BlockSpec((1, Cp), lambda n: (0, 0)),
            ],
            out_specs=pl.BlockSpec((1, H, W, Cp), lambda n: (n, 0, 0, 0)),
            scratch_shapes=[pltpu.VMEM((H + 2, W + 2, Cp), jnp.float32)],
        ),
        compiler_params=pltpu.CompilerParams(
            dimension_semantics=("parallel",)),
    )(xp, x_res, w1m, s1, b1, w2m, s2, b2)

    # Drop channel padding, NHWC -> NCHW to match the PyTorch module.
    return jnp.transpose(out_nhwc[..., :Cout], (0, 3, 1, 2))


def _reference(x, w1, bn1, w2, bn2, eps=1e-5):
    """Pure-JAX (XLA) reference of the BasicBlock forward (eval-mode BN)."""
    def conv(inp, w):
        return jax.lax.conv_general_dilated(
            inp, w, window_strides=(1, 1), padding=((1, 1), (1, 1)),
            dimension_numbers=("NCHW", "OIHW", "NCHW"))

    def bn(inp, p):
        scale = p["gamma"] / jnp.sqrt(p["var"] + eps)
        bias = p["beta"] - p["mean"] * scale
        return inp * scale.reshape(1, -1, 1, 1) + bias.reshape(1, -1, 1, 1)

    out = jnp.maximum(bn(conv(x, w1), bn1), 0.0)
    out = bn(conv(out, w2), bn2)
    return jnp.maximum(out + x, 0.0)


if __name__ == "__main__":
    key = jax.random.PRNGKey(0)
    N, C, H, W = 2, 8, 16, 16   # inplanes == planes == 8, stride=1, downsample=None

    ks = jax.random.split(key, 11)
    x = jax.random.normal(ks[0], (N, C, H, W), dtype=jnp.float32)

    # conv weights in PyTorch layout (Cout, Cin, 3, 3)
    w1 = 0.1 * jax.random.normal(ks[1], (C, C, 3, 3), dtype=jnp.float32)
    w2 = 0.1 * jax.random.normal(ks[2], (C, C, 3, 3), dtype=jnp.float32)

    # eval-mode BatchNorm parameters / running stats (deterministic, non-trivial)
    bn1 = dict(
        gamma=1.0 + 0.1 * jax.random.normal(ks[3], (C,), dtype=jnp.float32),
        beta=0.1 * jax.random.normal(ks[4], (C,), dtype=jnp.float32),
        mean=0.1 * jax.random.normal(ks[5], (C,), dtype=jnp.float32),
        var=jnp.abs(jax.random.normal(ks[6], (C,), dtype=jnp.float32)) + 0.5,
    )
    bn2 = dict(
        gamma=1.0 + 0.1 * jax.random.normal(ks[7], (C,), dtype=jnp.float32),
        beta=0.1 * jax.random.normal(ks[8], (C,), dtype=jnp.float32),
        mean=0.1 * jax.random.normal(ks[9], (C,), dtype=jnp.float32),
        var=jnp.abs(jax.random.normal(ks[10], (C,), dtype=jnp.float32)) + 0.5,
    )

    out = basic_block_forward(x, w1, bn1, w2, bn2)
    out = jax.block_until_ready(out)
    assert out.shape == (N, C, H, W)

    # Loose tolerance: kernel feeds the MXU bf16 while the reference runs f32.
    ref = jax.block_until_ready(_reference(x, w1, bn1, w2, bn2))
    max_err = float(jnp.max(jnp.abs(out - ref)))
    assert max_err < 1e-1, f"max abs err {max_err}"

    print("KERNEL_OK")
</pallas_src>

<mosaic_0001>
module attributes {stable_mosaic.version = 11 : i64} {
  func.func @_basic_block_kernel(%arg0: i32, %arg1: memref<1x18x18x128xbf16, #tpu.memory_space<vmem>>, %arg2: memref<1x16x16x128xf32, #tpu.memory_space<vmem>>, %arg3: memref<1152x128xbf16, #tpu.memory_space<vmem>>, %arg4: memref<1x128xf32, #tpu.memory_space<vmem>>, %arg5: memref<1x128xf32, #tpu.memory_space<vmem>>, %arg6: memref<1152x128xbf16, #tpu.memory_space<vmem>>, %arg7: memref<1x128xf32, #tpu.memory_space<vmem>>, %arg8: memref<1x128xf32, #tpu.memory_space<vmem>>, %arg9: memref<1x16x16x128xf32, #tpu.memory_space<vmem>>, %arg10: memref<18x18x128xf32, #tpu.memory_space<vmem>>) attributes {dimension_semantics = [#tpu.dimension_semantics<parallel>], iteration_bounds = array<i64: 2>, scalar_prefetch = 0 : i64, scratch_operands = 1 : i64, tpu.core_type = #tpu.core_type<tc>, window_params = [{transform_indices = @transform_0, window_bounds = array<i64: 1, 18, 18, 128>}, {transform_indices = @transform_1, window_bounds = array<i64: 1, 16, 16, 128>}, {pipeline_mode = #tpu.pipeline_mode<synchronous>, transform_indices = @transform_2, window_bounds = array<i64: 1152, 128>}, {pipeline_mode = #tpu.pipeline_mode<synchronous>, transform_indices = @transform_3, window_bounds = array<i64: 1, 128>}, {pipeline_mode = #tpu.pipeline_mode<synchronous>, transform_indices = @transform_4, window_bounds = array<i64: 1, 128>}, {pipeline_mode = #tpu.pipeline_mode<synchronous>, transform_indices = @transform_5, window_bounds = array<i64: 1152, 128>}, {pipeline_mode = #tpu.pipeline_mode<synchronous>, transform_indices = @transform_6, window_bounds = array<i64: 1, 128>}, {pipeline_mode = #tpu.pipeline_mode<synchronous>, transform_indices = @transform_7, window_bounds = array<i64: 1, 128>}, {transform_indices = @transform_8, window_bounds = array<i64: 1, 16, 16, 128>}]} {
    %c0 = arith.constant 0 : index
    %c0_0 = arith.constant 0 : index
    %c0_1 = arith.constant 0 : index
    %c0_2 = arith.constant 0 : index
    %0 = vector.load %arg1[%c0, %c0_0, %c0_1, %c0_2] : memref<1x18x18x128xbf16, #tpu.memory_space<vmem>>, vector<1x16x16x128xbf16>
    %1 = vector.shape_cast %0 : vector<1x16x16x128xbf16> to vector<16x16x128xbf16>
    %2 = vector.shape_cast %1 : vector<16x16x128xbf16> to vector<256x128xbf16>
    %c0_3 = arith.constant 0 : index
    %c0_4 = arith.constant 0 : index
    %c1 = arith.constant 1 : index
    %c0_5 = arith.constant 0 : index
    %3 = vector.load %arg1[%c0_3, %c0_4, %c1, %c0_5] : memref<1x18x18x128xbf16, #tpu.memory_space<vmem>>, vector<1x16x16x128xbf16>
    %4 = vector.shape_cast %3 : vector<1x16x16x128xbf16> to vector<16x16x128xbf16>
    %5 = vector.shape_cast %4 : vector<16x16x128xbf16> to vector<256x128xbf16>
    %c0_6 = arith.constant 0 : index
    %c0_7 = arith.constant 0 : index
    %c2 = arith.constant 2 : index
    %c0_8 = arith.constant 0 : index
    %6 = vector.load %arg1[%c0_6, %c0_7, %c2, %c0_8] : memref<1x18x18x128xbf16, #tpu.memory_space<vmem>>, vector<1x16x16x128xbf16>
    %7 = vector.shape_cast %6 : vector<1x16x16x128xbf16> to vector<16x16x128xbf16>
    %8 = vector.shape_cast %7 : vector<16x16x128xbf16> to vector<256x128xbf16>
    %c0_9 = arith.constant 0 : index
    %c1_10 = arith.constant 1 : index
    %c0_11 = arith.constant 0 : index
    %c0_12 = arith.constant 0 : index
    %9 = vector.load %arg1[%c0_9, %c1_10, %c0_11, %c0_12] : memref<1x18x18x128xbf16, #tpu.memory_space<vmem>>, vector<1x16x16x128xbf16>
    %10 = vector.shape_cast %9 : vector<1x16x16x128xbf16> to vector<16x16x128xbf16>
    %11 = vector.shape_cast %10 : vector<16x16x128xbf16> to vector<256x128xbf16>
    %c0_13 = arith.constant 0 : index
    %c1_14 = arith.constant 1 : index
    %c1_15 = arith.constant 1 : index
    %c0_16 = arith.constant 0 : index
    %12 = vector.load %arg1[%c0_13, %c1_14, %c1_15, %c0_16] : memref<1x18x18x128xbf16, #tpu.memory_space<vmem>>, vector<1x16x16x128xbf16>
    %13 = vector.shape_cast %12 : vector<1x16x16x128xbf16> to vector<16x16x128xbf16>
    %14 = vector.shape_cast %13 : vector<16x16x128xbf16> to vector<256x128xbf16>
    %c0_17 = arith.constant 0 : index
    %c1_18 = arith.constant 1 : index
    %c2_19 = arith.constant 2 : index
    %c0_20 = arith.constant 0 : index
    %15 = vector.load %arg1[%c0_17, %c1_18, %c2_19, %c0_20] : memref<1x18x18x128xbf16, #tpu.memory_space<vmem>>, vector<1x16x16x128xbf16>
    %16 = vector.shape_cast %15 : vector<1x16x16x128xbf16> to vector<16x16x128xbf16>
    %17 = vector.shape_cast %16 : vector<16x16x128xbf16> to vector<256x128xbf16>
    %c0_21 = arith.constant 0 : index
    %c2_22 = arith.constant 2 : index
    %c0_23 = arith.constant 0 : index
    %c0_24 = arith.constant 0 : index
    %18 = vector.load %arg1[%c0_21, %c2_22, %c0_23, %c0_24] : memref<1x18x18x128xbf16, #tpu.memory_space<vmem>>, vector<1x16x16x128xbf16>
    %19 = vector.shape_cast %18 : vector<1x16x16x128xbf16> to vector<16x16x128xbf16>
    %20 = vector.shape_cast %19 : vector<16x16x128xbf16> to vector<256x128xbf16>
    %c0_25 = arith.constant 0 : index
    %c2_26 = arith.constant 2 : index
    %c1_27 = arith.constant 1 : index
    %c0_28 = arith.constant 0 : index
    %21 = vector.load %arg1[%c0_25, %c2_26, %c1_27, %c0_28] : memref<1x18x18x128xbf16, #tpu.memory_space<vmem>>, vector<1x16x16x128xbf16>
    %22 = vector.shape_cast %21 : vector<1x16x16x128xbf16> to vector<16x16x128xbf16>
    %23 = vector.shape_cast %22 : vector<16x16x128xbf16> to vector<256x128xbf16>
    %c0_29 = arith.constant 0 : index
    %c2_30 = arith.constant 2 : index
    %c2_31 = arith.constant 2 : index
    %c0_32 = arith.constant 0 : index
    %24 = vector.load %arg1[%c0_29, %c2_30, %c2_31, %c0_32] : memref<1x18x18x128xbf16, #tpu.memory_space<vmem>>, vector<1x16x16x128xbf16>
    %25 = vector.shape_cast %24 : vector<1x16x16x128xbf16> to vector<16x16x128xbf16>
    %26 = vector.shape_cast %25 : vector<16x16x128xbf16> to vector<256x128xbf16>
    %27 = tpu.concatenate %2, %5, %8, %11, %14, %17, %20, %23, %26 in 1 : vector<256x128xbf16>, vector<256x128xbf16>, vector<256x128xbf16>, vector<256x128xbf16>, vector<256x128xbf16>, vector<256x128xbf16>, vector<256x128xbf16>, vector<256x128xbf16>, vector<256x128xbf16> -> vector<256x1152xbf16>
    %c0_33 = arith.constant 0 : index
    %c0_34 = arith.constant 0 : index
    %28 = vector.load %arg3[%c0_33, %c0_34] : memref<1152x128xbf16, #tpu.memory_space<vmem>>, vector<1152x128xbf16>
    %cst = arith.constant dense<0.000000e+00> : vector<256x128xf32>
    %29 = tpu.matmul %27, %28, %cst {dimension_numbers = #tpu.dot_dimension_numbers<[1], [0], [0], [1], [0, 0, 1, 1], [], []>} : vector<256x1152xbf16>, vector<1152x128xbf16>, vector<256x128xf32> -> vector<256x128xf32>
    %c0_35 = arith.constant 0 : index
    %c0_36 = arith.constant 0 : index
    %30 = vector.load %arg4[%c0_35, %c0_36] : memref<1x128xf32, #tpu.memory_space<vmem>>, vector<1x128xf32>
    %31 = vector.broadcast %30 : vector<1x128xf32> to vector<256x128xf32>
    %32 = arith.mulf %29, %31 : vector<256x128xf32>
    %c0_37 = arith.constant 0 : index
    %c0_38 = arith.constant 0 : index
    %33 = vector.load %arg5[%c0_37, %c0_38] : memref<1x128xf32, #tpu.memory_space<vmem>>, vector<1x128xf32>
    %34 = vector.broadcast %33 : vector<1x128xf32> to vector<256x128xf32>
    %35 = arith.addf %32, %34 : vector<256x128xf32>
    %cst_39 = arith.constant 0.000000e+00 : f32
    %36 = vector.broadcast %cst_39 : f32 to vector<256x128xf32>
    %37 = arith.maximumf %35, %36 : vector<256x128xf32>
    %cst_40 = arith.constant 0.000000e+00 : f32
    %38 = vector.broadcast %cst_40 : f32 to vector<1x18x128xf32>
    %cst_41 = arith.constant 0.000000e+00 : f32
    %39 = vector.broadcast %cst_41 : f32 to vector<18x1x128xf32>
    %c0_42 = arith.constant 0 : index
    %c0_43 = arith.constant 0 : index
    %c0_44 = arith.constant 0 : index
    %40 = vector.load %arg10[%c0_42, %c0_43, %c0_44] : memref<18x18x128xf32, #tpu.memory_space<vmem>>, vector<1x18x128xf32>
    tpu.vector_store %arg10[%c0_42, %c0_43, %c0_44], %38 {strides = array<i32>} : memref<18x18x128xf32, #tpu.memory_space<vmem>>, vector<1x18x128xf32>,
    %c17 = arith.constant 17 : index
    %c0_45 = arith.constant 0 : index
    %c0_46 = arith.constant 0 : index
    %41 = vector.load %arg10[%c17, %c0_45, %c0_46] : memref<18x18x128xf32, #tpu.memory_space<vmem>>, vector<1x18x128xf32>
    tpu.vector_store %arg10[%c17, %c0_45, %c0_46], %38 {strides = array<i32>} : memref<18x18x128xf32, #tpu.memory_space<vmem>>, vector<1x18x128xf32>,
    %c0_47 = arith.constant 0 : index
    %c0_48 = arith.constant 0 : index
    %c0_49 = arith.constant 0 : index
    %42 = vector.load %arg10[%c0_47, %c0_48, %c0_49] : memref<18x18x128xf32, #tpu.memory_space<vmem>>, vector<18x1x128xf32>
    tpu.vector_store %arg10[%c0_47, %c0_48, %c0_49], %39 {strides = array<i32>} : memref<18x18x128xf32, #tpu.memory_space<vmem>>, vector<18x1x128xf32>,
    %c0_50 = arith.constant 0 : index
    %c17_51 = arith.constant 17 : index
    %c0_52 = arith.constant 0 : index
    %43 = vector.load %arg10[%c0_50, %c17_51, %c0_52] : memref<18x18x128xf32, #tpu.memory_space<vmem>>, vector<18x1x128xf32>
    tpu.vector_store %arg10[%c0_50, %c17_51, %c0_52], %39 {strides = array<i32>} : memref<18x18x128xf32, #tpu.memory_space<vmem>>, vector<18x1x128xf32>,
    %44 = vector.shape_cast %37 : vector<256x128xf32> to vector<16x16x128xf32>
    %c1_53 = arith.constant 1 : index
    %c1_54 = arith.constant 1 : index
    %c0_55 = arith.constant 0 : index
    %45 = vector.load %arg10[%c1_53, %c1_54, %c0_55] : memref<18x18x128xf32, #tpu.memory_space<vmem>>, vector<16x16x128xf32>
    tpu.vector_store %arg10[%c1_53, %c1_54, %c0_55], %44 {strides = array<i32>} : memref<18x18x128xf32, #tpu.memory_space<vmem>>, vector<16x16x128xf32>,
    %c0_56 = arith.constant 0 : index
    %c0_57 = arith.constant 0 : index
    %c0_58 = arith.constant 0 : index
    %46 = vector.load %arg10[%c0_56, %c0_57, %c0_58] : memref<18x18x128xf32, #tpu.memory_space<vmem>>, vector<16x16x128xf32>
    %47 = vector.shape_cast %46 : vector<16x16x128xf32> to vector<256x128xf32>
    %c0_59 = arith.constant 0 : index
    %c1_60 = arith.constant 1 : index
    %c0_61 = arith.constant 0 : index
    %48 = vector.load %arg10[%c0_59, %c1_60, %c0_61] : memref<18x18x128xf32, #tpu.memory_space<vmem>>, vector<16x16x128xf32>
    %49 = vector.shape_cast %48 : vector<16x16x128xf32> to vector<256x128xf32>
    %c0_62 = arith.constant 0 : index
    %c2_63 = arith.constant 2 : index
    %c0_64 = arith.constant 0 : index
    %50 = vector.load %arg10[%c0_62, %c2_63, %c0_64] : memref<18x18x128xf32, #tpu.memory_space<vmem>>, vector<16x16x128xf32>
    %51 = vector.shape_cast %50 : vector<16x16x128xf32> to vector<256x128xf32>
    %c1_65 = arith.constant 1 : index
    %c0_66 = arith.constant 0 : index
    %c0_67 = arith.constant 0 : index
    %52 = vector.load %arg10[%c1_65, %c0_66, %c0_67] : memref<18x18x128xf32, #tpu.memory_space<vmem>>, vector<16x16x128xf32>
    %53 = vector.shape_cast %52 : vector<16x16x128xf32> to vector<256x128xf32>
    %c1_68 = arith.constant 1 : index
    %c1_69 = arith.constant 1 : index
    %c0_70 = arith.constant 0 : index
    %54 = vector.load %arg10[%c1_68, %c1_69, %c0_70] : memref<18x18x128xf32, #tpu.memory_space<vmem>>, vector<16x16x128xf32>
    %55 = vector.shape_cast %54 : vector<16x16x128xf32> to vector<256x128xf32>
    %c1_71 = arith.constant 1 : index
    %c2_72 = arith.constant 2 : index
    %c0_73 = arith.constant 0 : index
    %56 = vector.load %arg10[%c1_71, %c2_72, %c0_73] : memref<18x18x128xf32, #tpu.memory_space<vmem>>, vector<16x16x128xf32>
    %57 = vector.shape_cast %56 : vector<16x16x128xf32> to vector<256x128xf32>
    %c2_74 = arith.constant 2 : index
    %c0_75 = arith.constant 0 : index
    %c0_76 = arith.constant 0 : index
    %58 = vector.load %arg10[%c2_74, %c0_75, %c0_76] : memref<18x18x128xf32, #tpu.memory_space<vmem>>, vector<16x16x128xf32>
    %59 = vector.shape_cast %58 : vector<16x16x128xf32> to vector<256x128xf32>
    %c2_77 = arith.constant 2 : index
    %c1_78 = arith.constant 1 : index
    %c0_79 = arith.constant 0 : index
    %60 = vector.load %arg10[%c2_77, %c1_78, %c0_79] : memref<18x18x128xf32, #tpu.memory_space<vmem>>, vector<16x16x128xf32>
    %61 = vector.shape_cast %60 : vector<16x16x128xf32> to vector<256x128xf32>
    %c2_80 = arith.constant 2 : index
    %c2_81 = arith.constant 2 : index
    %c0_82 = arith.constant 0 : index
    %62 = vector.load %arg10[%c2_80, %c2_81, %c0_82] : memref<18x18x128xf32, #tpu.memory_space<vmem>>, vector<16x16x128xf32>
    %63 = vector.shape_cast %62 : vector<16x16x128xf32> to vector<256x128xf32>
    %64 = tpu.concatenate %47, %49, %51, %53, %55, %57, %59, %61, %63 in 1 : vector<256x128xf32>, vector<256x128xf32>, vector<256x128xf32>, vector<256x128xf32>, vector<256x128xf32>, vector<256x128xf32>, vector<256x128xf32>, vector<256x128xf32>, vector<256x128xf32> -> vector<256x1152xf32>
    %65 = arith.truncf %64 : vector<256x1152xf32> to vector<256x1152xbf16>
    %c0_83 = arith.constant 0 : index
    %c0_84 = arith.constant 0 : index
    %66 = vector.load %arg6[%c0_83, %c0_84] : memref<1152x128xbf16, #tpu.memory_space<vmem>>, vector<1152x128xbf16>
    %cst_85 = arith.constant dense<0.000000e+00> : vector<256x128xf32>
    %67 = tpu.matmul %65, %66, %cst_85 {dimension_numbers = #tpu.dot_dimension_numbers<[1], [0], [0], [1], [0, 0, 1, 1], [], []>} : vector<256x1152xbf16>, vector<1152x128xbf16>, vector<256x128xf32> -> vector<256x128xf32>
    %c0_86 = arith.constant 0 : index
    %c0_87 = arith.constant 0 : index
    %68 = vector.load %arg7[%c0_86, %c0_87] : memref<1x128xf32, #tpu.memory_space<vmem>>, vector<1x128xf32>
    %69 = vector.broadcast %68 : vector<1x128xf32> to vector<256x128xf32>
    %70 = arith.mulf %67, %69 : vector<256x128xf32>
    %c0_88 = arith.constant 0 : index
    %c0_89 = arith.constant 0 : index
    %71 = vector.load %arg8[%c0_88, %c0_89] : memref<1x128xf32, #tpu.memory_space<vmem>>, vector<1x128xf32>
    %72 = vector.broadcast %71 : vector<1x128xf32> to vector<256x128xf32>
    %73 = arith.addf %70, %72 : vector<256x128xf32>
    %c0_90 = arith.constant 0 : index
    %c0_91 = arith.constant 0 : index
    %c0_92 = arith.constant 0 : index
    %c0_93 = arith.constant 0 : index
    %74 = vector.load %arg2[%c0_90, %c0_91, %c0_92, %c0_93] : memref<1x16x16x128xf32, #tpu.memory_space<vmem>>, vector<1x16x16x128xf32>
    %75 = vector.shape_cast %74 : vector<1x16x16x128xf32> to vector<256x128xf32>
    %76 = arith.addf %73, %75 : vector<256x128xf32>
    %cst_94 = arith.constant 0.000000e+00 : f32
    %77 = vector.broadcast %cst_94 : f32 to vector<256x128xf32>
    %78 = arith.maximumf %76, %77 : vector<256x128xf32>
    %79 = vector.shape_cast %78 : vector<256x128xf32> to vector<1x16x16x128xf32>
    %c0_95 = arith.constant 0 : index
    %c0_96 = arith.constant 0 : index
    %c0_97 = arith.constant 0 : index
    %c0_98 = arith.constant 0 : index
    %80 = vector.load %arg9[%c0_95, %c0_96, %c0_97, %c0_98] : memref<1x16x16x128xf32, #tpu.memory_space<vmem>>, vector<1x16x16x128xf32>
    tpu.vector_store %arg9[%c0_95, %c0_96, %c0_97, %c0_98], %79 {strides = array<i32>} : memref<1x16x16x128xf32, #tpu.memory_space<vmem>>, vector<1x16x16x128xf32>,
    return
  }
  func.func @transform_0(%arg0: i32) -> (i32, i32, i32, i32) {
    %c0_i32 = arith.constant 0 : i32
    %c0_i32_0 = arith.constant 0 : i32
    %c0_i32_1 = arith.constant 0 : i32
    %c0_i32_2 = arith.constant 0 : i32
    return %arg0, %c0_i32, %c0_i32_0, %c0_i32_1 : i32, i32, i32, i32
  }
  func.func @transform_1(%arg0: i32) -> (i32, i32, i32, i32) {
    %c0_i32 = arith.constant 0 : i32
    %c0_i32_0 = arith.constant 0 : i32
    %c0_i32_1 = arith.constant 0 : i32
    %c0_i32_2 = arith.constant 0 : i32
    return %arg0, %c0_i32, %c0_i32_0, %c0_i32_1 : i32, i32, i32, i32
  }
  func.func @transform_2(%arg0: i32) -> (i32, i32) {
    %c0_i32 = arith.constant 0 : i32
    %c0_i32_0 = arith.constant 0 : i32
    %c0_i32_1 = arith.constant 0 : i32
    return %c0_i32, %c0_i32_0 : i32, i32
  }
  func.func @transform_3(%arg0: i32) -> (i32, i32) {
    %c0_i32 = arith.constant 0 : i32
    %c0_i32_0 = arith.constant 0 : i32
    %c0_i32_1 = arith.constant 0 : i32
    return %c0_i32, %c0_i32_0 : i32, i32
  }
  func.func @transform_4(%arg0: i32) -> (i32, i32) {
    %c0_i32 = arith.constant 0 : i32
    %c0_i32_0 = arith.constant 0 : i32
    %c0_i32_1 = arith.constant 0 : i32
    return %c0_i32, %c0_i32_0 : i32, i32
  }
  func.func @transform_5(%arg0: i32) -> (i32, i32) {
    %c0_i32 = arith.constant 0 : i32
    %c0_i32_0 = arith.constant 0 : i32
    %c0_i32_1 = arith.constant 0 : i32
    return %c0_i32, %c0_i32_0 : i32, i32
  }
  func.func @transform_6(%arg0: i32) -> (i32, i32) {
    %c0_i32 = arith.constant 0 : i32
    %c0_i32_0 = arith.constant 0 : i32
    %c0_i32_1 = arith.constant 0 : i32
    return %c0_i32, %c0_i32_0 : i32, i32
  }
  func.func @transform_7(%arg0: i32) -> (i32, i32) {
    %c0_i32 = arith.constant 0 : i32
    %c0_i32_0 = arith.constant 0 : i32
    %c0_i32_1 = arith.constant 0 : i32
    return %c0_i32, %c0_i32_0 : i32, i32
  }
  func.func @transform_8(%arg0: i32) -> (i32, i32, i32, i32) {
    %c0_i32 = arith.constant 0 : i32
    %c0_i32_0 = arith.constant 0 : i32
    %c0_i32_1 = arith.constant 0 : i32
    %c0_i32_2 = arith.constant 0 : i32
    return %arg0, %c0_i32, %c0_i32_0, %c0_i32_1 : i32, i32, i32, i32
  }
}

</mosaic_0001>

<llo_original>
// kernel: tpu_custom_call.1
$region0: #{tpu_custom_call.1}
  #allocation0 [shape = 'u32[]', space=smem, size = 0x4, offset = 0x4, fixed_abs, tag = 'smem constant byte address 0x4 - core index']
  #allocation1 [shape = 'u32[144,128]{1,0:T(1,128)}', space=vmem, size = 0x12000, scoped, tag = 'internal scratch']
  #allocation2 [shape = 'f32[18,18,128]{2,1,0:T(8,128)}', space=vmem, size = 0x36000, scoped, tag = 'scratch operand']
  %s0 = inlined_call_operand.vmem [shape: bf16[2,18,18,128], index: 0, kind: input, shape index: {}]
  %s1 = inlined_call_operand.hbm [shape: f32[2,16,16,128], index: 1, kind: input, shape index: {}]
  %s2 = inlined_call_operand.vmem [shape: bf16[1152,128], index: 2, kind: input, shape index: {}]
  %s3 = inlined_call_operand.vmem [shape: f32[1,128], index: 3, kind: input, shape index: {}]
  %s4 = inlined_call_operand.vmem [shape: f32[1,128], index: 4, kind: input, shape index: {}]
  %s5 = inlined_call_operand.hbm [shape: bf16[1152,128], index: 5, kind: input, shape index: {}]
  %s6 = inlined_call_operand.vmem [shape: f32[1,128], index: 6, kind: input, shape index: {}]
  %s7 = inlined_call_operand.vmem [shape: f32[1,128], index: 7, kind: input, shape index: {}]
  %s8 = inlined_call_operand.hbm [shape: f32[2,16,16,128], index: 8, kind: output, shape index: {}]
  %s9 = sld [smem:[#allocation0]]
  $region73: #{tpu_custom_call.1} parent=0
    _
  %s11 = ssub.s32 1, %s9
  %s12 = scalar_select 0, %s11, %s9
  $region1: #{tpu_custom_call.1} parent=0
    #allocation3 [shape = 'u8[262144]{0}', space=vmem, size = 0x40000, scoped, tag = 'input window, operand 1']
    #allocation4 [shape = 's32[2]{0}', space=sflag, size = 0x8, scoped, tag = 'scoped memory for tpu_custom_call.1']
    #allocation5 [shape = 's32[2]{0}', space=sflag, size = 0x8, scoped, tag = 'scoped memory for tpu_custom_call.1']
    #allocation6 [shape = 'u8[294912]{0}', space=vmem, size = 0x48000, scoped, tag = 'input window, operand 5, single buffered']
    #allocation7 [shape = 's32[1]{0}', space=sflag, size = 0x4, scoped, tag = 'scoped memory for tpu_custom_call.1']
    #allocation8 [shape = 'u8[262144]{0}', space=vmem, size = 0x40000, scoped, tag = 'output window, operand 0']
    %13 = vsyncpa [#allocation4], 0
    %s14 = scalar_lea.sflag [#allocation4], 1
    %15 = vsyncpa %s14, 0
    %16 = vsyncpa [#allocation7], 0
    %17 = vsyncpa [#allocation5], 0
    %s18 = scalar_lea.sflag [#allocation5], 1
    %19 = vsyncpa %s18, 0
    loop: start=0, step=1, limit=4
    $region2: #{tpu_custom_call.1} parent=1 // loop_pre_header
      _
    $region3: #{tpu_custom_call.1} parent=1 // loop_header
      %s21 = sphi 0, %s25
      %p22 = scmp.ge.s32.totalorder %s21, 4
      %s31 = sphi 0, %s33
      %s34 = sphi 0, %s31
      %s35 = sphi 0, %s34
      %s51 = sphi 0, %s35
      %s57 = sphi 0, %s59
      %s60 = sphi 0, %s57
      %s61 = sphi 0, %s60
      %s77 = sphi 0, %s61
      %s81 = sphi 0, %s81
      %s83 = sphi 0, %s81
      %s84 = sphi 0, %s83
      %s98 = sphi 0, %s84
      %s102 = sphi 0, %s102
      %s104 = sphi 0, %s102
      %s105 = sphi 0, %s104
      %s119 = sphi 0, %s105
      %s123 = sphi 0, %s123
      %s125 = sphi 0, %s123
      %s126 = sphi 0, %s125
      %s140 = sphi 0, %s126
      %s144 = sphi 0, %s144
      %s146 = sphi 0, %s144
      %s147 = sphi 0, %s146
      %s161 = sphi 0, %s147
      %s165 = sphi 0, %s165
      %s167 = sphi 0, %s165
      %s168 = sphi 0, %s167
      %s182 = sphi 0, %s168
      %s186 = sphi 0, %s186
      %s188 = sphi 0, %s186
      %s189 = sphi 0, %s188
      %s203 = sphi 0, %s189
      %s209 = sphi 0, %s211
      %s212 = sphi 0, %s209
      %s213 = sphi 0, %s212
      %s229 = sphi 0, %s213
    $region4: #{tpu_custom_call.1} parent=1 // loop_header_branch
      %24 = sbr.rel (%p22) target = $region8
    $region5: #{tpu_custom_call.1} parent=1 // loop_body
      %s26 = ssub.s32 %s21, 1
      %s27 = ssub.s32 %s21, 2
      %s28 = sadd.s32 %s21, 1
      %s29 = ssub.s32 %s21, %s28
      %p30 = scmp.eq.s32.totalorder %s29, 0
      %s32 = sadd.s32 %s31, 1
      %s33 = scalar_select %p30, %s31, %s32
      %p36 = pneg %p30
      %p37 = scmp.eq.s32.totalorder %s21, 1
      %p38 = por %p36, %p37
      %p39 = scmp.ne.s32.totalorder %s31, %s34
      %p40 = scmp.eq.s32.totalorder %s21, 0
      %p41 = por %p39, %p40
      %p42 = scmp.ne.s32.totalorder %s31, %s34
      %p43 = scmp.eq.s32.totalorder %s26, 1
      %p44 = por %p42, %p43
      %p45 = scmp.ne.s32.totalorder %s34, %s35
      %p46 = scmp.eq.s32.totalorder %s26, 0
      %p47 = por %p45, %p46
      %p48 = scmp.ne.s32.totalorder %s34, %s35
      %p49 = scmp.eq.s32.totalorder %s27, 1
      %p50 = por %p48, %p49
      %p52 = scmp.ne.s32.totalorder %s35, %s51
      %p53 = scmp.eq.s32.totalorder %s27, 0
      %p54 = por %p52, %p53
      %s55 = ssub.s32 %s21, %s28
      %p56 = scmp.eq.s32.totalorder %s55, 0
      %s58 = sadd.s32 %s57, 1
      %s59 = scalar_select %p56, %s57, %s58
      %p62 = pneg %p56
      %p63 = scmp.eq.s32.totalorder %s21, 1
      %p64 = por %p62, %p63
      %p65 = scmp.ne.s32.totalorder %s57, %s60
      %p66 = scmp.eq.s32.totalorder %s21, 0
      %p67 = por %p65, %p66
      %p68 = scmp.ne.s32.totalorder %s57, %s60
      %p69 = scmp.eq.s32.totalorder %s26, 1
      %p70 = por %p68, %p69
      %p71 = scmp.ne.s32.totalorder %s60, %s61
      %p72 = scmp.eq.s32.totalorder %s26, 0
      %p73 = por %p71, %p72
      %p74 = scmp.ne.s32.totalorder %s60, %s61
      %p75 = scmp.eq.s32.totalorder %s27, 1
      %p76 = por %p74, %p75
      %p78 = scmp.ne.s32.totalorder %s61, %s77
      %p79 = scmp.eq.s32.totalorder %s27, 0
      %p80 = por %p78, %p79
      %s82 = sadd.s32 %s81, 1
      %p85 = scmp.eq.s32.totalorder %s21, 1
      %p86 = scmp.ne.s32.totalorder %s81, %s83
      %p87 = scmp.eq.s32.totalorder %s21, 0
      %p88 = por %p86, %p87
      %p89 = scmp.ne.s32.totalorder %s81, %s83
      %p90 = scmp.eq.s32.totalorder %s26, 1
      %p91 = por %p89, %p90
      %p92 = scmp.ne.s32.totalorder %s83, %s84
      %p93 = scmp.eq.s32.totalorder %s26, 0
      %p94 = por %p92, %p93
      %p95 = scmp.ne.s32.totalorder %s83, %s84
      %p96 = scmp.eq.s32.totalorder %s27, 1
      %p97 = por %p95, %p96
      %p99 = scmp.ne.s32.totalorder %s84, %s98
      %p100 = scmp.eq.s32.totalorder %s27, 0
      %p101 = por %p99, %p100
      %s103 = sadd.s32 %s102, 1
      %p106 = scmp.eq.s32.totalorder %s21, 1
      %p107 = scmp.ne.s32.totalorder %s102, %s104
      %p108 = scmp.eq.s32.totalorder %s21, 0
      %p109 = por %p107, %p108
      %p110 = scmp.ne.s32.totalorder %s102, %s104
      %p111 = scmp.eq.s32.totalorder %s26, 1
      %p112 = por %p110, %p111
      %p113 = scmp.ne.s32.totalorder %s104, %s105
      %p114 = scmp.eq.s32.totalorder %s26, 0
      %p115 = por %p113, %p114
      %p116 = scmp.ne.s32.totalorder %s104, %s105
      %p117 = scmp.eq.s32.totalorder %s27, 1
      %p118 = por %p116, %p117
      %p120 = scmp.ne.s32.totalorder %s105, %s119
      %p121 = scmp.eq.s32.totalorder %s27, 0
      %p122 = por %p120, %p121
      %s124 = sadd.s32 %s123, 1
      %p127 = scmp.eq.s32.totalorder %s21, 1
      %p128 = scmp.ne.s32.totalorder %s123, %s125
      %p129 = scmp.eq.s32.totalorder %s21, 0
      %p130 = por %p128, %p129
      %p131 = scmp.ne.s32.totalorder %s123, %s125
      %p132 = scmp.eq.s32.totalorder %s26, 1
      %p133 = por %p131, %p132
      %p134 = scmp.ne.s32.totalorder %s125, %s126
      %p135 = scmp.eq.s32.totalorder %s26, 0
      %p136 = por %p134, %p135
      %p137 = scmp.ne.s32.totalorder %s125, %s126
      %p138 = scmp.eq.s32.totalorder %s27, 1
      %p139 = por %p137, %p138
      %p141 = scmp.ne.s32.totalorder %s126, %s140
      %p142 = scmp.eq.s32.totalorder %s27, 0
      %p143 = por %p141, %p142
      %s145 = sadd.s32 %s144, 1
      %p148 = scmp.eq.s32.totalorder %s21, 1
      %p149 = scmp.ne.s32.totalorder %s144, %s146
      %p150 = scmp.eq.s32.totalorder %s21, 0
      %p151 = por %p149, %p150
      %p152 = scmp.ne.s32.totalorder %s144, %s146
      %p153 = scmp.eq.s32.totalorder %s26, 1
      %p154 = por %p152, %p153
      %p155 = scmp.ne.s32.totalorder %s146, %s147
      %p156 = scmp.eq.s32.totalorder %s26, 0
      %p157 = por %p155, %p156
      %p158 = scmp.ne.s32.totalorder %s146, %s147
      %p159 = scmp.eq.s32.totalorder %s27, 1
      %p160 = por %p158, %p159
      %p162 = scmp.ne.s32.totalorder %s147, %s161
      %p163 = scmp.eq.s32.totalorder %s27, 0
      %p164 = por %p162, %p163
      %s166 = sadd.s32 %s165, 1
      %p169 = scmp.eq.s32.totalorder %s21, 1
      %p170 = scmp.ne.s32.totalorder %s165, %s167
      %p171 = scmp.eq.s32.totalorder %s21, 0
      %p172 = por %p170, %p171
      %p173 = scmp.ne.s32.totalorder %s165, %s167
      %p174 = scmp.eq.s32.totalorder %s26, 1
      %p175 = por %p173, %p174
      %p176 = scmp.ne.s32.totalorder %s167, %s168
      %p177 = scmp.eq.s32.totalorder %s26, 0
      %p178 = por %p176, %p177
      %p179 = scmp.ne.s32.totalorder %s167, %s168
      %p180 = scmp.eq.s32.totalorder %s27, 1
      %p181 = por %p179, %p180
      %p183 = scmp.ne.s32.totalorder %s168, %s182
      %p184 = scmp.eq.s32.totalorder %s27, 0
      %p185 = por %p183, %p184
      %s187 = sadd.s32 %s186, 1
      %p190 = scmp.eq.s32.totalorder %s21, 1
      %p191 = scmp.ne.s32.totalorder %s186, %s188
      %p192 = scmp.eq.s32.totalorder %s21, 0
      %p193 = por %p191, %p192
      %p194 = scmp.ne.s32.totalorder %s186, %s188
      %p195 = scmp.eq.s32.totalorder %s26, 1
      %p196 = por %p194, %p195
      %p197 = scmp.ne.s32.totalorder %s188, %s189
      %p198 = scmp.eq.s32.totalorder %s26, 0
      %p199 = por %p197, %p198
      %p200 = scmp.ne.s32.totalorder %s188, %s189
      %p201 = scmp.eq.s32.totalorder %s27, 1
      %p202 = por %p200, %p201
      %p204 = scmp.ne.s32.totalorder %s189, %s203
      %p205 = scmp.eq.s32.totalorder %s27, 0
      %p206 = por %p204, %p205
      %s207 = ssub.s32 %s21, %s28
      %p208 = scmp.eq.s32.totalorder %s207, 0
      %s210 = sadd.s32 %s209, 1
      %s211 = scalar_select %p208, %s209, %s210
      %p214 = pneg %p208
      %p215 = scmp.eq.s32.totalorder %s21, 1
      %p216 = por %p214, %p215
      %p217 = scmp.ne.s32.totalorder %s209, %s212
      %p218 = scmp.eq.s32.totalorder %s21, 0
      %p219 = por %p217, %p218
      %p220 = scmp.ne.s32.totalorder %s209, %s212
      %p221 = scmp.eq.s32.totalorder %s26, 1
      %p222 = por %p220, %p221
      %p223 = scmp.ne.s32.totalorder %s212, %s213
      %p224 = scmp.eq.s32.totalorder %s26, 0
      %p225 = por %p223, %p224
      %p226 = scmp.ne.s32.totalorder %s212, %s213
      %p227 = scmp.eq.s32.totalorder %s27, 1
      %p228 = por %p226, %p227
      %p230 = scmp.ne.s32.totalorder %s213, %s229
      %p231 = scmp.eq.s32.totalorder %s27, 0
      %p232 = por %p230, %p231
      %p233 = scmp.le.s32.totalorder 1, %s21
      %p234 = scmp.lt.s32.totalorder %s21, 3
      %p235 = pnand %p233, %p234
      %p236 = pneg %p235
      // Predicated region
      $region9: #{tpu_custom_call.1} parent=5 // pred_check
        _
      $region10: #{tpu_custom_call.1} parent=5 // pred_check_branch
        %238 = sbr.rel (%p235) target = $region12
      $region11: #{tpu_custom_call.1} parent=5 // pred_region
        %s239 = ssub.s32 %s21, 1
        // Predicated region
        $region13: #{tpu_custom_call.1} parent=11 // pred_check
          %p240 = pneg %p94
        $region14: #{tpu_custom_call.1} parent=11 // pred_check_branch
          %242 = sbr.rel (%p240) target = $region16
        $region15: #{tpu_custom_call.1} parent=11 // pred_region
          _
        $region16: #{tpu_custom_call.1} parent=11 // pred_fallthru
          _
        // Predicated region
        $region17: #{tpu_custom_call.1} parent=11 // pred_check
          %p243 = pneg %p115
        $region18: #{tpu_custom_call.1} parent=11 // pred_check_branch
          %245 = sbr.rel (%p243) target = $region20
        $region19: #{tpu_custom_call.1} parent=11 // pred_region
          _
        $region20: #{tpu_custom_call.1} parent=11 // pred_fallthru
          _
        // Predicated region
        $region21: #{tpu_custom_call.1} parent=11 // pred_check
          %p246 = pneg %p136
        $region22: #{tpu_custom_call.1} parent=11 // pred_check_branch
          %248 = sbr.rel (%p246) target = $region24
        $region23: #{tpu_custom_call.1} parent=11 // pred_region
          _
        $region24: #{tpu_custom_call.1} parent=11 // pred_fallthru
          _
        // Predicated region
        $region25: #{tpu_custom_call.1} parent=11 // pred_check
          %p249 = pneg %p157
        $region26: #{tpu_custom_call.1} parent=11 // pred_check_branch
          %251 = sbr.rel (%p249) target = $region28
        $region27: #{tpu_custom_call.1} parent=11 // pred_region
          %s253 = ssub.s32 9216, 9216
          %254 = vsyncadd [#allocation7], %s253
          %s255 = sshll.u32 [#allocation6], 4
          %s256 = int_to_ptr.vmem [resolvable:$true] %s255
          %261 = dma.hbm_to_vmem [thread:$0]  %s5, 9216, %s256, [#allocation7], 64, 64, 4
        $region28: #{tpu_custom_call.1} parent=11 // pred_fallthru
          _
        // Predicated region
        $region29: #{tpu_custom_call.1} parent=11 // pred_check
          %p262 = pneg %p178
        $region30: #{tpu_custom_call.1} parent=11 // pred_check_branch
          %264 = sbr.rel (%p262) target = $region32
        $region31: #{tpu_custom_call.1} parent=11 // pred_region
          _
        $region32: #{tpu_custom_call.1} parent=11 // pred_fallthru
          _
        // Predicated region
        $region33: #{tpu_custom_call.1} parent=11 // pred_check
          %p265 = pneg %p199
        $region34: #{tpu_custom_call.1} parent=11 // pred_check_branch
          %267 = sbr.rel (%p265) target = $region36
        $region35: #{tpu_custom_call.1} parent=11 // pred_region
          _
        $region36: #{tpu_custom_call.1} parent=11 // pred_fallthru
          _
      $region12: #{tpu_custom_call.1} parent=5 // pred_fallthru
        _
      %p268 = scmp.lt.s32.totalorder %s21, 2
      // Predicated region
      $region37: #{tpu_custom_call.1} parent=5 // pred_check
        %p269 = pneg %p268
      $region38: #{tpu_custom_call.1} parent=5 // pred_check_branch
        %271 = sbr.rel (%p269) target = $region40
      $region39: #{tpu_custom_call.1} parent=5 // pred_region
        // Predicated region
        $region41: #{tpu_custom_call.1} parent=39 // pred_check
          %p272 = pneg %p41
        $region42: #{tpu_custom_call.1} parent=39 // pred_check_branch
          %274 = sbr.rel (%p272) target = $region44
        $region43: #{tpu_custom_call.1} parent=39 // pred_region
          %p275 = scmp.lt.s32.totalorder %s21, 1
          %s276 = scalar_select %p275, %s21, 1
          %s277 = smul.addr %s276, 54
          %s278 = smul.addr %s277, 4
          %s279 = scalar_lea.vmem %s0, %s278
        $region44: #{tpu_custom_call.1} parent=39 // pred_fallthru
          _
        // Predicated region
        $region45: #{tpu_custom_call.1} parent=39 // pred_check
          %p280 = pneg %p67
        $region46: #{tpu_custom_call.1} parent=39 // pred_check_branch
          %282 = sbr.rel (%p280) target = $region48
        $region47: #{tpu_custom_call.1} parent=39 // pred_region
          %s283 = sand.u32 %s57, 1
          %s284 = scalar_lea.sflag [#allocation4], %s283
          %s285 = sand.u32 %s57, 1
          %s286 = smul.addr %s285, 256
          %s287 = scalar_lea.vmem [#allocation3], %s286
          %s289 = ssub.s32 4096, 4096
          %290 = vsyncadd %s284, %s289
          %s291 = smul.addr %s21, 32
          %s292 = smul.addr %s291, 128
          %s293 = scalar_lea.hbm %s1, %s292
          %s294 = sshll.u32 %s287, 4
          %s295 = int_to_ptr.vmem [resolvable:$true] %s294
          %300 = dma.hbm_to_vmem [thread:$0]  %s293, 4096, %s295, %s284, 128, 128, 8
        $region48: #{tpu_custom_call.1} parent=39 // pred_fallthru
          _
      $region40: #{tpu_custom_call.1} parent=5 // pred_fallthru
        _
      %p301 = scmp.le.s32.totalorder 1, %s21
      %p302 = scmp.lt.s32.totalorder %s21, 3
      %p303 = pnand %p301, %p302
      %p304 = pneg %p303
      // Predicated region
      $region49: #{tpu_custom_call.1} parent=5 // pred_check
        _
      $region50: #{tpu_custom_call.1} parent=5 // pred_check_branch
        %306 = sbr.rel (%p303) target = $region52
      $region51: #{tpu_custom_call.1} parent=5 // pred_region
        %s307 = ssub.s32 %s21, 1
        %s308 = sand.u32 %s60, 1
        %s309 = scalar_lea.sflag [#allocation4], %s308
        %s310 = sand.u32 %s60, 1
        %s311 = smul.addr %s310, 256
        %s312 = scalar_lea.vmem [#allocation3], %s311
        // Predicated region
        $region53: #{tpu_custom_call.1} parent=51 // pred_check
          %p313 = pneg %p73
        $region54: #{tpu_custom_call.1} parent=51 // pred_check_branch
          %315 = sbr.rel (%p313) target = $region56
        $region55: #{tpu_custom_call.1} parent=51 // pred_region
          %316 = dma.done %s309, 4096
        $region56: #{tpu_custom_call.1} parent=51 // pred_fallthru
          _
        // Predicated region
        $region57: #{tpu_custom_call.1} parent=51 // pred_check
          %p317 = pneg %p157
        $region58: #{tpu_custom_call.1} parent=51 // pred_check_branch
          %319 = sbr.rel (%p317) target = $region60
        $region59: #{tpu_custom_call.1} parent=51 // pred_region
          %320 = dma.done [#allocation7], 9216
        $region60: #{tpu_custom_call.1} parent=51 // pred_fallthru
          _
        %p321 = scmp.lt.s32.totalorder %s26, 1
        %s322 = scalar_select %p321, %s26, 1
        %s323 = smul.addr %s322, 54
        %s324 = smul.addr %s323, 4
        %s325 = scalar_lea.vmem %s0, %s324
        %p326 = pneg %p47
        %p327 = pneg %p44
        %s328 = sand.u32 %s60, 1
        %s329 = scalar_lea.sflag [#allocation4], %s328
        %s330 = sand.u32 %s60, 1
        %s331 = smul.addr %s330, 256
        %s332 = scalar_lea.vmem [#allocation3], %s331
        %p333 = pneg %p73
        %p334 = pneg %p70
        %p335 = pneg %p94
        %p336 = pneg %p91
        %p337 = pneg %p115
        %p338 = pneg %p112
        %p339 = pneg %p136
        %p340 = pneg %p133
        %p341 = pneg %p157
        %p342 = pneg %p154
        %p343 = pneg %p178
        %p344 = pneg %p175
        %p345 = pneg %p199
        %p346 = pneg %p196
        %p347 = pneg %p225
        %p348 = pneg %p222
        %s349 = sand.u32 %s212, 1
        %s350 = scalar_lea.sflag [#allocation5], %s349
        %s351 = sand.u32 %s212, 1
        %s352 = smul.addr %s351, 256
        %s353 = scalar_lea.vmem [#allocation8], %s352
        %p354 = scmp.lt.s32.totalorder %s26, 1
        %s355 = scalar_select %p354, %s26, 1
        %s356 = smul.addr %s355, 54
        %s357 = smul.addr %s356, 4
        %s358 = scalar_lea.vmem %s0, %s357
        %v360 = vld [vmem:[%s358] sm:$0xf]
        %v361 = vld [vmem:[%s358 + $0x4] sm:$0xf]
        %v362 = vld [vmem:[%s358 + $0xc] sm:$0xf]
        %v363 = vld [vmem:[%s358 + $0x10] sm:$0xf]
        %v364 = vld [vmem:[%s358 + $0x18] sm:$0xf]
        %v365 = vld [vmem:[%s358 + $0x1c] sm:$0xf]
        %v366 = vld [vmem:[%s358 + $0x24] sm:$0xf]
        %v367 = vld [vmem:[%s358 + $0x28] sm:$0xf]
        %v368 = vld [vmem:[%s358 + $0x30] sm:$0xf]
        %v369 = vld [vmem:[%s358 + $0x34] sm:$0xf]
        %v370 = vld [vmem:[%s358 + $0x3c] sm:$0xf]
        %v371 = vld [vmem:[%s358 + $0x40] sm:$0xf]
        %v372 = vld [vmem:[%s358 + $0x48] sm:$0xf]
        %v373 = vld [vmem:[%s358 + $0x4c] sm:$0xf]
        %v374 = vld [vmem:[%s358 + $0x54] sm:$0xf]
        %v375 = vld [vmem:[%s358 + $0x58] sm:$0xf]
        %v376 = vld [vmem:[%s358 + $0x60] sm:$0xf]
        %v377 = vld [vmem:[%s358 + $0x64] sm:$0xf]
        %v378 = vld [vmem:[%s358 + $0x6c] sm:$0xf]
        %v379 = vld [vmem:[%s358 + $0x70] sm:$0xf]
        %v380 = vld [vmem:[%s358 + $0x78] sm:$0xf]
        %v381 = vld [vmem:[%s358 + $0x7c] sm:$0xf]
        %v382 = vld [vmem:[%s358 + $0x84] sm:$0xf]
        %v383 = vld [vmem:[%s358 + $0x88] sm:$0xf]
        %v384 = vld [vmem:[%s358 + $0x90] sm:$0xf]
        %v385 = vld [vmem:[%s358 + $0x94] sm:$0xf]
        %v386 = vld [vmem:[%s358 + $0x9c] sm:$0xf]
        %v387 = vld [vmem:[%s358 + $0xa0] sm:$0xf]
        %v388 = vld [vmem:[%s358 + $0xa8] sm:$0xf]
        %v389 = vld [vmem:[%s358 + $0xac] sm:$0xf]
        %v390 = vld [vmem:[%s358 + $0xb4] sm:$0xf]
        %v391 = vld [vmem:[%s358 + $0xb8] sm:$0xf]
        %v392 = vld [vmem:[%s358 + $0x8] sm:$0x1]
        %v393 = vld [vmem:[%s358 + $0x14] sm:$0x1]
        %v394 = vld [vmem:[%s358 + $0x20] sm:$0x1]
        %v395 = vld [vmem:[%s358 + $0x2c] sm:$0x1]
        %v396 = vld [vmem:[%s358 + $0x38] sm:$0x1]
        %v397 = vld [vmem:[%s358 + $0x44] sm:$0x1]
        %v398 = vld [vmem:[%s358 + $0x50] sm:$0x1]
        %v399 = vld [vmem:[%s358 + $0x5c] sm:$0x1]
        %v400 = vld [vmem:[%s358 + $0x68] sm:$0x1]
        %v401 = vld [vmem:[%s358 + $0x74] sm:$0x1]
        %v402 = vld [vmem:[%s358 + $0x80] sm:$0x1]
        %v403 = vld [vmem:[%s358 + $0x8c] sm:$0x1]
        %v404 = vld [vmem:[%s358 + $0x98] sm:$0x1]
        %v405 = vld [vmem:[%s358 + $0xa4] sm:$0x1]
        %v406 = vld [vmem:[%s358 + $0xb0] sm:$0x1]
        %v407 = vld [vmem:[%s358 + $0xbc] sm:$0x1]
        %vm408 = vsmask.f32 3328
        %vm409 = vsmask.f32 7440
        %vm410 = vmor %vm408, %vm409
        %v412 = vshrl.u32 %v360, 16
        %v414 = vrot.slane %v412, 4
        %v415 = vshll.u32 %v360, 16
        %v417 = vrot.slane %v415, 5
        %v418 = vor.u32 %v414, %v417
        %v419 = vrot.slane %v418, 4
        %v421 = vshll.u32 %v361, 16
        %v423 = vrot.slane %v421, 5
        %v424 = vsel %vm410, %v419, %v423
        %v425 = vshrl.u32 %v361, 16
        %v427 = vrot.slane %v425, 4
        %v428 = vor.u32 %v427, %v423
        %v429 = vrot.slane %v428, 4
        %v431 = vshll.u32 %v392, 16
        %v433 = vrot.slane %v431, 5
        %v434 = vsel %vm410, %v429, %v433
        %v436 = vshrl.u32 %v362, 16
        %v438 = vrot.slane %v436, 4
        %v439 = vshll.u32 %v362, 16
        %v441 = vrot.slane %v439, 5
        %v442 = vor.u32 %v438, %v441
        %v443 = vrot.slane %v442, 4
        %v445 = vshll.u32 %v363, 16
        %v447 = vrot.slane %v445, 5
        %v448 = vsel %vm410, %v443, %v447
        %v449 = vshrl.u32 %v363, 16
        %v451 = vrot.slane %v449, 4
        %v452 = vor.u32 %v451, %v447
        %v453 = vrot.slane %v452, 4
        %v455 = vshll.u32 %v393, 16
        %v457 = vrot.slane %v455, 5
        %v458 = vsel %vm410, %v453, %v457
        %v460 = vshrl.u32 %v364, 16
        %v462 = vrot.slane %v460, 4
        %v463 = vshll.u32 %v364, 16
        %v465 = vrot.slane %v463, 5
        %v466 = vor.u32 %v462, %v465
        %v467 = vrot.slane %v466, 4
        %v469 = vshll.u32 %v365, 16
        %v471 = vrot.slane %v469, 5
        %v472 = vsel %vm410, %v467, %v471
        %v473 = vshrl.u32 %v365, 16
        %v475 = vrot.slane %v473, 4
        %v476 = vor.u32 %v475, %v471
        %v477 = vrot.slane %v476, 4
        %v479 = vshll.u32 %v394, 16
        %v481 = vrot.slane %v479, 5
        %v482 = vsel %vm410, %v477, %v481
        %v484 = vshrl.u32 %v366, 16
        %v486 = vrot.slane %v484, 4
        %v487 = vshll.u32 %v366, 16
        %v489 = vrot.slane %v487, 5
        %v490 = vor.u32 %v486, %v489
        %v491 = vrot.slane %v490, 4
        %v493 = vshll.u32 %v367, 16
        %v495 = vrot.slane %v493, 5
        %v496 = vsel %vm410, %v491, %v495
        %v497 = vshrl.u32 %v367, 16
        %v499 = vrot.slane %v497, 4
        %v500 = vor.u32 %v499, %v495
        %v501 = vrot.slane %v500, 4
        %v503 = vshll.u32 %v395, 16
        %v505 = vrot.slane %v503, 5
        %v506 = vsel %vm410, %v501, %v505
        %v508 = vshrl.u32 %v368, 16
        %v510 = vrot.slane %v508, 4
        %v511 = vshll.u32 %v368, 16
        %v513 = vrot.slane %v511, 5
        %v514 = vor.u32 %v510, %v513
        %v515 = vrot.slane %v514, 4
        %v517 = vshll.u32 %v369, 16
        %v519 = vrot.slane %v517, 5
        %v520 = vsel %vm410, %v515, %v519
        %v521 = vshrl.u32 %v369, 16
        %v523 = vrot.slane %v521, 4
        %v524 = vor.u32 %v523, %v519
        %v525 = vrot.slane %v524, 4
        %v527 = vshll.u32 %v396, 16
        %v529 = vrot.slane %v527, 5
        %v530 = vsel %vm410, %v525, %v529
        %v532 = vshrl.u32 %v370, 16
        %v534 = vrot.slane %v532, 4
        %v535 = vshll.u32 %v370, 16
        %v537 = vrot.slane %v535, 5
        %v538 = vor.u32 %v534, %v537
        %v539 = vrot.slane %v538, 4
        %v541 = vshll.u32 %v371, 16
        %v543 = vrot.slane %v541, 5
        %v544 = vsel %vm410, %v539, %v543
        %v545 = vshrl.u32 %v371, 16
        %v547 = vrot.slane %v545, 4
        %v548 = vor.u32 %v547, %v543
        %v549 = vrot.slane %v548, 4
        %v551 = vshll.u32 %v397, 16
        %v553 = vrot.slane %v551, 5
        %v554 = vsel %vm410, %v549, %v553
        %v556 = vshrl.u32 %v372, 16
        %v558 = vrot.slane %v556, 4
        %v559 = vshll.u32 %v372, 16
        %v561 = vrot.slane %v559, 5
        %v562 = vor.u32 %v558, %v561
        %v563 = vrot.slane %v562, 4
        %v565 = vshll.u32 %v373, 16
        %v567 = vrot.slane %v565, 5
        %v568 = vsel %vm410, %v563, %v567
        %v569 = vshrl.u32 %v373, 16
        %v571 = vrot.slane %v569, 4
        %v572 = vor.u32 %v571, %v567
        %v573 = vrot.slane %v572, 4
        %v575 = vshll.u32 %v398, 16
        %v577 = vrot.slane %v575, 5
        %v578 = vsel %vm410, %v573, %v577
        %v580 = vshrl.u32 %v374, 16
        %v582 = vrot.slane %v580, 4
        %v583 = vshll.u32 %v374, 16
        %v585 = vrot.slane %v583, 5
        %v586 = vor.u32 %v582, %v585
        %v587 = vrot.slane %v586, 4
        %v589 = vshll.u32 %v375, 16
        %v591 = vrot.slane %v589, 5
        %v592 = vsel %vm410, %v587, %v591
        %v593 = vshrl.u32 %v375, 16
        %v595 = vrot.slane %v593, 4
        %v596 = vor.u32 %v595, %v591
        %v597 = vrot.slane %v596, 4
        %v599 = vshll.u32 %v399, 16
        %v601 = vrot.slane %v599, 5
        %v602 = vsel %vm410, %v597, %v601
        %v604 = vshrl.u32 %v376, 16
        %v606 = vrot.slane %v604, 4
        %v607 = vshll.u32 %v376, 16
        %v609 = vrot.slane %v607, 5
        %v610 = vor.u32 %v606, %v609
        %v611 = vrot.slane %v610, 4
        %v613 = vshll.u32 %v377, 16
        %v615 = vrot.slane %v613, 5
        %v616 = vsel %vm410, %v611, %v615
        %v617 = vshrl.u32 %v377, 16
        %v619 = vrot.slane %v617, 4
        %v620 = vor.u32 %v619, %v615
        %v621 = vrot.slane %v620, 4
        %v623 = vshll.u32 %v400, 16
        %v625 = vrot.slane %v623, 5
        %v626 = vsel %vm410, %v621, %v625
        %v628 = vshrl.u32 %v378, 16
        %v630 = vrot.slane %v628, 4
        %v631 = vshll.u32 %v378, 16
        %v633 = vrot.slane %v631, 5
        %v634 = vor.u32 %v630, %v633
        %v635 = vrot.slane %v634, 4
        %v637 = vshll.u32 %v379, 16
        %v639 = vrot.slane %v637, 5
        %v640 = vsel %vm410, %v635, %v639
        %v641 = vshrl.u32 %v379, 16
        %v643 = vrot.slane %v641, 4
        %v644 = vor.u32 %v643, %v639
        %v645 = vrot.slane %v644, 4
        %v647 = vshll.u32 %v401, 16
        %v649 = vrot.slane %v647, 5
        %v650 = vsel %vm410, %v645, %v649
        %v652 = vshrl.u32 %v380, 16
        %v654 = vrot.slane %v652, 4
        %v655 = vshll.u32 %v380, 16
        %v657 = vrot.slane %v655, 5
        %v658 = vor.u32 %v654, %v657
        %v659 = vrot.slane %v658, 4
        %v661 = vshll.u32 %v381, 16
        %v663 = vrot.slane %v661, 5
        %v664 = vsel %vm410, %v659, %v663
        %v665 = vshrl.u32 %v381, 16
        %v667 = vrot.slane %v665, 4
        %v668 = vor.u32 %v667, %v663
        %v669 = vrot.slane %v668, 4
        %v671 = vshll.u32 %v402, 16
        %v673 = vrot.slane %v671, 5
        %v674 = vsel %vm410, %v669, %v673
        %v676 = vshrl.u32 %v382, 16
        %v678 = vrot.slane %v676, 4
        %v679 = vshll.u32 %v382, 16
        %v681 = vrot.slane %v679, 5
        %v682 = vor.u32 %v678, %v681
        %v683 = vrot.slane %v682, 4
        %v685 = vshll.u32 %v383, 16
        %v687 = vrot.slane %v685, 5
        %v688 = vsel %vm410, %v683, %v687
        %v689 = vshrl.u32 %v383, 16
        %v691 = vrot.slane %v689, 4
        %v692 = vor.u32 %v691, %v687
        %v693 = vrot.slane %v692, 4
        %v695 = vshll.u32 %v403, 16
        %v697 = vrot.slane %v695, 5
        %v698 = vsel %vm410, %v693, %v697
        %v700 = vshrl.u32 %v384, 16
        %v702 = vrot.slane %v700, 4
        %v703 = vshll.u32 %v384, 16
        %v705 = vrot.slane %v703, 5
        %v706 = vor.u32 %v702, %v705
        %v707 = vrot.slane %v706, 4
        %v709 = vshll.u32 %v385, 16
        %v711 = vrot.slane %v709, 5
        %v712 = vsel %vm410, %v707, %v711
        %v713 = vshrl.u32 %v385, 16
        %v715 = vrot.slane %v713, 4
        %v716 = vor.u32 %v715, %v711
        %v717 = vrot.slane %v716, 4
        %v719 = vshll.u32 %v404, 16
        %v721 = vrot.slane %v719, 5
        %v722 = vsel %vm410, %v717, %v721
        %v724 = vshrl.u32 %v386, 16
        %v726 = vrot.slane %v724, 4
        %v727 = vshll.u32 %v386, 16
        %v729 = vrot.slane %v727, 5
        %v730 = vor.u32 %v726, %v729
        %v731 = vrot.slane %v730, 4
        %v733 = vshll.u32 %v387, 16
        %v735 = vrot.slane %v733, 5
        %v736 = vsel %vm410, %v731, %v735
        %v737 = vshrl.u32 %v387, 16
        %v739 = vrot.slane %v737, 4
        %v740 = vor.u32 %v739, %v735
        %v741 = vrot.slane %v740, 4
        %v743 = vshll.u32 %v405, 16
        %v745 = vrot.slane %v743, 5
        %v746 = vsel %vm410, %v741, %v745
        %v748 = vshrl.u32 %v388, 16
        %v750 = vrot.slane %v748, 4
        %v751 = vshll.u32 %v388, 16
        %v753 = vrot.slane %v751, 5
        %v754 = vor.u32 %v750, %v753
        %v755 = vrot.slane %v754, 4
        %v757 = vshll.u32 %v389, 16
        %v759 = vrot.slane %v757, 5
        %v760 = vsel %vm410, %v755, %v759
        %v761 = vshrl.u32 %v389, 16
        %v763 = vrot.slane %v761, 4
        %v764 = vor.u32 %v763, %v759
        %v765 = vrot.slane %v764, 4
        %v767 = vshll.u32 %v406, 16
        %v769 = vrot.slane %v767, 5
        %v770 = vsel %vm410, %v765, %v769
        %v772 = vshrl.u32 %v390, 16
        %v774 = vrot.slane %v772, 4
        %v775 = vshll.u32 %v390, 16
        %v777 = vrot.slane %v775, 5
        %v778 = vor.u32 %v774, %v777
        %v779 = vrot.slane %v778, 4
        %v781 = vshll.u32 %v391, 16
        %v783 = vrot.slane %v781, 5
        %v784 = vsel %vm410, %v779, %v783
        %v785 = vshrl.u32 %v391, 16
        %v787 = vrot.slane %v785, 4
        %v788 = vor.u32 %v787, %v783
        %v789 = vrot.slane %v788, 4
        %v791 = vshll.u32 %v407, 16
        %v793 = vrot.slane %v791, 5
        %v794 = vsel %vm410, %v789, %v793
        %v795 = vld [vmem:[%s358] sm:$0xe]
        %v796 = vld [vmem:[%s358 + $0xc] sm:$0xe]
        %v797 = vld [vmem:[%s358 + $0x18] sm:$0xe]
        %v798 = vld [vmem:[%s358 + $0x24] sm:$0xe]
        %v799 = vld [vmem:[%s358 + $0x30] sm:$0xe]
        %v800 = vld [vmem:[%s358 + $0x3c] sm:$0xe]
        %v801 = vld [vmem:[%s358 + $0x48] sm:$0xe]
        %v802 = vld [vmem:[%s358 + $0x54] sm:$0xe]
        %v803 = vld [vmem:[%s358 + $0x60] sm:$0xe]
        %v804 = vld [vmem:[%s358 + $0x6c] sm:$0xe]
        %v805 = vld [vmem:[%s358 + $0x78] sm:$0xe]
        %v806 = vld [vmem:[%s358 + $0x84] sm:$0xe]
        %v807 = vld [vmem:[%s358 + $0x90] sm:$0xe]
        %v808 = vld [vmem:[%s358 + $0x9c] sm:$0xe]
        %v809 = vld [vmem:[%s358 + $0xa8] sm:$0xe]
        %v810 = vld [vmem:[%s358 + $0xb4] sm:$0xe]
        %vm859 = vcmask 1042432
        %vm860 = vcmask 1046532
        %vm861 = vmor %vm859, %vm860
        %v862 = vrot.slane %v795, 5
        %v863 = vrot.slane %v862, 4
        %v864 = vrot.slane %v361, 5
        %v865 = vsel %vm861, %v863, %v864
        %v866 = vrot.slane %v864, 4
        %v867 = vrot.slane %v392, 5
        %v868 = vsel %vm861, %v866, %v867
        %v869 = vrot.slane %v796, 5
        %v870 = vrot.slane %v869, 4
        %v871 = vrot.slane %v363, 5
        %v872 = vsel %vm861, %v870, %v871
        %v873 = vrot.slane %v871, 4
        %v874 = vrot.slane %v393, 5
        %v875 = vsel %vm861, %v873, %v874
        %v876 = vrot.slane %v797, 5
        %v877 = vrot.slane %v876, 4
        %v878 = vrot.slane %v365, 5
        %v879 = vsel %vm861, %v877, %v878
        %v880 = vrot.slane %v878, 4
        %v881 = vrot.slane %v394, 5
        %v882 = vsel %vm861, %v880, %v881
        %v883 = vrot.slane %v798, 5
        %v884 = vrot.slane %v883, 4
        %v885 = vrot.slane %v367, 5
        %v886 = vsel %vm861, %v884, %v885
        %v887 = vrot.slane %v885, 4
        %v888 = vrot.slane %v395, 5
        %v889 = vsel %vm861, %v887, %v888
        %v890 = vrot.slane %v799, 5
        %v891 = vrot.slane %v890, 4
        %v892 = vrot.slane %v369, 5
        %v893 = vsel %vm861, %v891, %v892
        %v894 = vrot.slane %v892, 4
        %v895 = vrot.slane %v396, 5
        %v896 = vsel %vm861, %v894, %v895
        %v897 = vrot.slane %v800, 5
        %v898 = vrot.slane %v897, 4
        %v899 = vrot.slane %v371, 5
        %v900 = vsel %vm861, %v898, %v899
        %v901 = vrot.slane %v899, 4
        %v902 = vrot.slane %v397, 5
        %v903 = vsel %vm861, %v901, %v902
        %v904 = vrot.slane %v801, 5
        %v905 = vrot.slane %v904, 4
        %v906 = vrot.slane %v373, 5
        %v907 = vsel %vm861, %v905, %v906
        %v908 = vrot.slane %v906, 4
        %v909 = vrot.slane %v398, 5
        %v910 = vsel %vm861, %v908, %v909
        %v911 = vrot.slane %v802, 5
        %v912 = vrot.slane %v911, 4
        %v913 = vrot.slane %v375, 5
        %v914 = vsel %vm861, %v912, %v913
        %v915 = vrot.slane %v913, 4
        %v916 = vrot.slane %v399, 5
        %v917 = vsel %vm861, %v915, %v916
        %v918 = vrot.slane %v803, 5
        %v919 = vrot.slane %v918, 4
        %v920 = vrot.slane %v377, 5
        %v921 = vsel %vm861, %v919, %v920
        %v922 = vrot.slane %v920, 4
        %v923 = vrot.slane %v400, 5
        %v924 = vsel %vm861, %v922, %v923
        %v925 = vrot.slane %v804, 5
        %v926 = vrot.slane %v925, 4
        %v927 = vrot.slane %v379, 5
        %v928 = vsel %vm861, %v926, %v927
        %v929 = vrot.slane %v927, 4
        %v930 = vrot.slane %v401, 5
        %v931 = vsel %vm861, %v929, %v930
        %v932 = vrot.slane %v805, 5
        %v933 = vrot.slane %v932, 4
        %v934 = vrot.slane %v381, 5
        %v935 = vsel %vm861, %v933, %v934
        %v936 = vrot.slane %v934, 4
        %v937 = vrot.slane %v402, 5
        %v938 = vsel %vm861, %v936, %v937
        %v939 = vrot.slane %v806, 5
        %v940 = vrot.slane %v939, 4
        %v941 = vrot.slane %v383, 5
        %v942 = vsel %vm861, %v940, %v941
        %v943 = vrot.slane %v941, 4
        %v944 = vrot.slane %v403, 5
        %v945 = vsel %vm861, %v943, %v944
        %v946 = vrot.slane %v807, 5
        %v947 = vrot.slane %v946, 4
        %v948 = vrot.slane %v385, 5
        %v949 = vsel %vm861, %v947, %v948
        %v950 = vrot.slane %v948, 4
        %v951 = vrot.slane %v404, 5
        %v952 = vsel %vm861, %v950, %v951
        %v953 = vrot.slane %v808, 5
        %v954 = vrot.slane %v953, 4
        %v955 = vrot.slane %v387, 5
        %v956 = vsel %vm861, %v954, %v955
        %v957 = vrot.slane %v955, 4
        %v958 = vrot.slane %v405, 5
        %v959 = vsel %vm861, %v957, %v958
        %v960 = vrot.slane %v809, 5
        %v961 = vrot.slane %v960, 4
        %v962 = vrot.slane %v389, 5
        %v963 = vsel %vm861, %v961, %v962
        %v964 = vrot.slane %v962, 4
        %v965 = vrot.slane %v406, 5
        %v966 = vsel %vm861, %v964, %v965
        %v967 = vrot.slane %v810, 5
        %v968 = vrot.slane %v967, 4
        %v969 = vrot.slane %v391, 5
        %v970 = vsel %vm861, %v968, %v969
        %v971 = vrot.slane %v969, 4
        %v972 = vrot.slane %v407, 5
        %v973 = vsel %vm861, %v971, %v972
        %s974 = scalar_lea.vmem %s358, 12
        %v975 = vld [vmem:[%s974] sm:$0xf]
        %v976 = vld [vmem:[%s974 + $0x4] sm:$0xf]
        %v977 = vld [vmem:[%s974 + $0xc] sm:$0xf]
        %v978 = vld [vmem:[%s974 + $0x10] sm:$0xf]
        %v979 = vld [vmem:[%s974 + $0x18] sm:$0xf]
        %v980 = vld [vmem:[%s974 + $0x1c] sm:$0xf]
        %v981 = vld [vmem:[%s974 + $0x24] sm:$0xf]
        %v982 = vld [vmem:[%s974 + $0x28] sm:$0xf]
        %v983 = vld [vmem:[%s974 + $0x30] sm:$0xf]
        %v984 = vld [vmem:[%s974 + $0x34] sm:$0xf]
        %v985 = vld [vmem:[%s974 + $0x3c] sm:$0xf]
        %v986 = vld [vmem:[%s974 + $0x40] sm:$0xf]
        %v987 = vld [vmem:[%s974 + $0x48] sm:$0xf]
        %v988 = vld [vmem:[%s974 + $0x4c] sm:$0xf]
        %v989 = vld [vmem:[%s974 + $0x54] sm:$0xf]
        %v990 = vld [vmem:[%s974 + $0x58] sm:$0xf]
        %v991 = vld [vmem:[%s974 + $0x60] sm:$0xf]
        %v992 = vld [vmem:[%s974 + $0x64] sm:$0xf]
        %v993 = vld [vmem:[%s974 + $0x6c] sm:$0xf]
        %v994 = vld [vmem:[%s974 + $0x70] sm:$0xf]
        %v995 = vld [vmem:[%s974 + $0x78] sm:$0xf]
        %v996 = vld [vmem:[%s974 + $0x7c] sm:$0xf]
        %v997 = vld [vmem:[%s974 + $0x84] sm:$0xf]
        %v998 = vld [vmem:[%s974 + $0x88] sm:$0xf]
        %v999 = vld [vmem:[%s974 + $0x90] sm:$0xf]
        %v1000 = vld [vmem:[%s974 + $0x94] sm:$0xf]
        %v1001 = vld [vmem:[%s974 + $0x9c] sm:$0xf]
        %v1002 = vld [vmem:[%s974 + $0xa0] sm:$0xf]
        %v1003 = vld [vmem:[%s974 + $0xa8] sm:$0xf]
        %v1004 = vld [vmem:[%s974 + $0xac] sm:$0xf]
        %v1005 = vld [vmem:[%s974 + $0xb4] sm:$0xf]
        %v1006 = vld [vmem:[%s974 + $0xb8] sm:$0xf]
        %v1007 = vld [vmem:[%s974 + $0x8] sm:$0x1]
        %v1008 = vld [vmem:[%s974 + $0x14] sm:$0x1]
        %v1009 = vld [vmem:[%s974 + $0x20] sm:$0x1]
        %v1010 = vld [vmem:[%s974 + $0x2c] sm:$0x1]
        %v1011 = vld [vmem:[%s974 + $0x38] sm:$0x1]
        %v1012 = vld [vmem:[%s974 + $0x44] sm:$0x1]
        %v1013 = vld [vmem:[%s974 + $0x50] sm:$0x1]
        %v1014 = vld [vmem:[%s974 + $0x5c] sm:$0x1]
        %v1015 = vld [vmem:[%s974 + $0x68] sm:$0x1]
        %v1016 = vld [vmem:[%s974 + $0x74] sm:$0x1]
        %v1017 = vld [vmem:[%s974 + $0x80] sm:$0x1]
        %v1018 = vld [vmem:[%s974 + $0x8c] sm:$0x1]
        %v1019 = vld [vmem:[%s974 + $0x98] sm:$0x1]
        %v1020 = vld [vmem:[%s974 + $0xa4] sm:$0x1]
        %v1021 = vld [vmem:[%s974 + $0xb0] sm:$0x1]
        %v1022 = vld [vmem:[%s974 + $0xbc] sm:$0x1]
        %v1024 = vshrl.u32 %v975, 16
        %v1026 = vrot.slane %v1024, 4
        %v1027 = vshll.u32 %v975, 16
        %v1029 = vrot.slane %v1027, 5
        %v1030 = vor.u32 %v1026, %v1029
        %v1031 = vrot.slane %v1030, 4
        %v1033 = vshll.u32 %v976, 16
        %v1035 = vrot.slane %v1033, 5
        %v1036 = vsel %vm410, %v1031, %v1035
        %v1037 = vshrl.u32 %v976, 16
        %v1039 = vrot.slane %v1037, 4
        %v1040 = vor.u32 %v1039, %v1035
        %v1041 = vrot.slane %v1040, 4
        %v1043 = vshll.u32 %v1007, 16
        %v1045 = vrot.slane %v1043, 5
        %v1046 = vsel %vm410, %v1041, %v1045
        %v1048 = vshrl.u32 %v977, 16
        %v1050 = vrot.slane %v1048, 4
        %v1051 = vshll.u32 %v977, 16
        %v1053 = vrot.slane %v1051, 5
        %v1054 = vor.u32 %v1050, %v1053
        %v1055 = vrot.slane %v1054, 4
        %v1057 = vshll.u32 %v978, 16
        %v1059 = vrot.slane %v1057, 5
        %v1060 = vsel %vm410, %v1055, %v1059
        %v1061 = vshrl.u32 %v978, 16
        %v1063 = vrot.slane %v1061, 4
        %v1064 = vor.u32 %v1063, %v1059
        %v1065 = vrot.slane %v1064, 4
        %v1067 = vshll.u32 %v1008, 16
        %v1069 = vrot.slane %v1067, 5
        %v1070 = vsel %vm410, %v1065, %v1069
        %v1072 = vshrl.u32 %v979, 16
        %v1074 = vrot.slane %v1072, 4
        %v1075 = vshll.u32 %v979, 16
        %v1077 = vrot.slane %v1075, 5
        %v1078 = vor.u32 %v1074, %v1077
        %v1079 = vrot.slane %v1078, 4
        %v1081 = vshll.u32 %v980, 16
        %v1083 = vrot.slane %v1081, 5
        %v1084 = vsel %vm410, %v1079, %v1083
        %v1085 = vshrl.u32 %v980, 16
        %v1087 = vrot.slane %v1085, 4
        %v1088 = vor.u32 %v1087, %v1083
        %v1089 = vrot.slane %v1088, 4
        %v1091 = vshll.u32 %v1009, 16
        %v1093 = vrot.slane %v1091, 5
        %v1094 = vsel %vm410, %v1089, %v1093
        %v1096 = vshrl.u32 %v981, 16
        %v1098 = vrot.slane %v1096, 4
        %v1099 = vshll.u32 %v981, 16
        %v1101 = vrot.slane %v1099, 5
        %v1102 = vor.u32 %v1098, %v1101
        %v1103 = vrot.slane %v1102, 4
        %v1105 = vshll.u32 %v982, 16
        %v1107 = vrot.slane %v1105, 5
        %v1108 = vsel %vm410, %v1103, %v1107
        %v1109 = vshrl.u32 %v982, 16
        %v1111 = vrot.slane %v1109, 4
        %v1112 = vor.u32 %v1111, %v1107
        %v1113 = vrot.slane %v1112, 4
        %v1115 = vshll.u32 %v1010, 16
        %v1117 = vrot.slane %v1115, 5
        %v1118 = vsel %vm410, %v1113, %v1117
        %v1120 = vshrl.u32 %v983, 16
        %v1122 = vrot.slane %v1120, 4
        %v1123 = vshll.u32 %v983, 16
        %v1125 = vrot.slane %v1123, 5
        %v1126 = vor.u32 %v1122, %v1125
        %v1127 = vrot.slane %v1126, 4
        %v1129 = vshll.u32 %v984, 16
        %v1131 = vrot.slane %v1129, 5
        %v1132 = vsel %vm410, %v1127, %v1131
        %v1133 = vshrl.u32 %v984, 16
        %v1135 = vrot.slane %v1133, 4
        %v1136 = vor.u32 %v1135, %v1131
        %v1137 = vrot.slane %v1136, 4
        %v1139 = vshll.u32 %v1011, 16
        %v1141 = vrot.slane %v1139, 5
        %v1142 = vsel %vm410, %v1137, %v1141
        %v1144 = vshrl.u32 %v985, 16
        %v1146 = vrot.slane %v1144, 4
        %v1147 = vshll.u32 %v985, 16
        %v1149 = vrot.slane %v1147, 5
        %v1150 = vor.u32 %v1146, %v1149
        %v1151 = vrot.slane %v1150, 4
        %v1153 = vshll.u32 %v986, 16
        %v1155 = vrot.slane %v1153, 5
        %v1156 = vsel %vm410, %v1151, %v1155
        %v1157 = vshrl.u32 %v986, 16
        %v1159 = vrot.slane %v1157, 4
        %v1160 = vor.u32 %v1159, %v1155
        %v1161 = vrot.slane %v1160, 4
        %v1163 = vshll.u32 %v1012, 16
        %v1165 = vrot.slane %v1163, 5
        %v1166 = vsel %vm410, %v1161, %v1165
        %v1168 = vshrl.u32 %v987, 16
        %v1170 = vrot.slane %v1168, 4
        %v1171 = vshll.u32 %v987, 16
        %v1173 = vrot.slane %v1171, 5
        %v1174 = vor.u32 %v1170, %v1173
        %v1175 = vrot.slane %v1174, 4
        %v1177 = vshll.u32 %v988, 16
        %v1179 = vrot.slane %v1177, 5
        %v1180 = vsel %vm410, %v1175, %v1179
        %v1181 = vshrl.u32 %v988, 16
        %v1183 = vrot.slane %v1181, 4
        %v1184 = vor.u32 %v1183, %v1179
        %v1185 = vrot.slane %v1184, 4
        %v1187 = vshll.u32 %v1013, 16
        %v1189 = vrot.slane %v1187, 5
        %v1190 = vsel %vm410, %v1185, %v1189
        %v1192 = vshrl.u32 %v989, 16
        %v1194 = vrot.slane %v1192, 4
        %v1195 = vshll.u32 %v989, 16
        %v1197 = vrot.slane %v1195, 5
        %v1198 = vor.u32 %v1194, %v1197
        %v1199 = vrot.slane %v1198, 4
        %v1201 = vshll.u32 %v990, 16
        %v1203 = vrot.slane %v1201, 5
        %v1204 = vsel %vm410, %v1199, %v1203
        %v1205 = vshrl.u32 %v990, 16
        %v1207 = vrot.slane %v1205, 4
        %v1208 = vor.u32 %v1207, %v1203
        %v1209 = vrot.slane %v1208, 4
        %v1211 = vshll.u32 %v1014, 16
        %v1213 = vrot.slane %v1211, 5
        %v1214 = vsel %vm410, %v1209, %v1213
        %v1216 = vshrl.u32 %v991, 16
        %v1218 = vrot.slane %v1216, 4
        %v1219 = vshll.u32 %v991, 16
        %v1221 = vrot.slane %v1219, 5
        %v1222 = vor.u32 %v1218, %v1221
        %v1223 = vrot.slane %v1222, 4
        %v1225 = vshll.u32 %v992, 16
        %v1227 = vrot.slane %v1225, 5
        %v1228 = vsel %vm410, %v1223, %v1227
        %v1229 = vshrl.u32 %v992, 16
        %v1231 = vrot.slane %v1229, 4
        %v1232 = vor.u32 %v1231, %v1227
        %v1233 = vrot.slane %v1232, 4
        %v1235 = vshll.u32 %v1015, 16
        %v1237 = vrot.slane %v1235, 5
        %v1238 = vsel %vm410, %v1233, %v1237
        %v1240 = vshrl.u32 %v993, 16
        %v1242 = vrot.slane %v1240, 4
        %v1243 = vshll.u32 %v993, 16
        %v1245 = vrot.slane %v1243, 5
        %v1246 = vor.u32 %v1242, %v1245
        %v1247 = vrot.slane %v1246, 4
        %v1249 = vshll.u32 %v994, 16
        %v1251 = vrot.slane %v1249, 5
        %v1252 = vsel %vm410, %v1247, %v1251
        %v1253 = vshrl.u32 %v994, 16
        %v1255 = vrot.slane %v1253, 4
        %v1256 = vor.u32 %v1255, %v1251
        %v1257 = vrot.slane %v1256, 4
        %v1259 = vshll.u32 %v1016, 16
        %v1261 = vrot.slane %v1259, 5
        %v1262 = vsel %vm410, %v1257, %v1261
        %v1264 = vshrl.u32 %v995, 16
        %v1266 = vrot.slane %v1264, 4
        %v1267 = vshll.u32 %v995, 16
        %v1269 = vrot.slane %v1267, 5
        %v1270 = vor.u32 %v1266, %v1269
        %v1271 = vrot.slane %v1270, 4
        %v1273 = vshll.u32 %v996, 16
        %v1275 = vrot.slane %v1273, 5
        %v1276 = vsel %vm410, %v1271, %v1275
        %v1277 = vshrl.u32 %v996, 16
        %v1279 = vrot.slane %v1277, 4
        %v1280 = vor.u32 %v1279, %v1275
        %v1281 = vrot.slane %v1280, 4
        %v1283 = vshll.u32 %v1017, 16
        %v1285 = vrot.slane %v1283, 5
        %v1286 = vsel %vm410, %v1281, %v1285
        %v1288 = vshrl.u32 %v997, 16
        %v1290 = vrot.slane %v1288, 4
        %v1291 = vshll.u32 %v997, 16
        %v1293 = vrot.slane %v1291, 5
        %v1294 = vor.u32 %v1290, %v1293
        %v1295 = vrot.slane %v1294, 4
        %v1297 = vshll.u32 %v998, 16
        %v1299 = vrot.slane %v1297, 5
        %v1300 = vsel %vm410, %v1295, %v1299
        %v1301 = vshrl.u32 %v998, 16
        %v1303 = vrot.slane %v1301, 4
        %v1304 = vor.u32 %v1303, %v1299
        %v1305 = vrot.slane %v1304, 4
        %v1307 = vshll.u32 %v1018, 16
        %v1309 = vrot.slane %v1307, 5
        %v1310 = vsel %vm410, %v1305, %v1309
        %v1312 = vshrl.u32 %v999, 16
        %v1314 = vrot.slane %v1312, 4
        %v1315 = vshll.u32 %v999, 16
        %v1317 = vrot.slane %v1315, 5
        %v1318 = vor.u32 %v1314, %v1317
        %v1319 = vrot.slane %v1318, 4
        %v1321 = vshll.u32 %v1000, 16
        %v1323 = vrot.slane %v1321, 5
        %v1324 = vsel %vm410, %v1319, %v1323
        %v1325 = vshrl.u32 %v1000, 16
        %v1327 = vrot.slane %v1325, 4
        %v1328 = vor.u32 %v1327, %v1323
        %v1329 = vrot.slane %v1328, 4
        %v1331 = vshll.u32 %v1019, 16
        %v1333 = vrot.slane %v1331, 5
        %v1334 = vsel %vm410, %v1329, %v1333
        %v1336 = vshrl.u32 %v1001, 16
        %v1338 = vrot.slane %v1336, 4
        %v1339 = vshll.u32 %v1001, 16
        %v1341 = vrot.slane %v1339, 5
        %v1342 = vor.u32 %v1338, %v1341
        %v1343 = vrot.slane %v1342, 4
        %v1345 = vshll.u32 %v1002, 16
        %v1347 = vrot.slane %v1345, 5
        %v1348 = vsel %vm410, %v1343, %v1347
        %v1349 = vshrl.u32 %v1002, 16
        %v1351 = vrot.slane %v1349, 4
        %v1352 = vor.u32 %v1351, %v1347
        %v1353 = vrot.slane %v1352, 4
        %v1355 = vshll.u32 %v1020, 16
        %v1357 = vrot.slane %v1355, 5
        %v1358 = vsel %vm410, %v1353, %v1357
        %v1360 = vshrl.u32 %v1003, 16
        %v1362 = vrot.slane %v1360, 4
        %v1363 = vshll.u32 %v1003, 16
        %v1365 = vrot.slane %v1363, 5
        %v1366 = vor.u32 %v1362, %v1365
        %v1367 = vrot.slane %v1366, 4
        %v1369 = vshll.u32 %v1004, 16
        %v1371 = vrot.slane %v1369, 5
        %v1372 = vsel %vm410, %v1367, %v1371
        %v1373 = vshrl.u32 %v1004, 16
        %v1375 = vrot.slane %v1373, 4
        %v1376 = vor.u32 %v1375, %v1371
        %v1377 = vrot.slane %v1376, 4
        %v1379 = vshll.u32 %v1021, 16
        %v1381 = vrot.slane %v1379, 5
        %v1382 = vsel %vm410, %v1377, %v1381
        %v1384 = vshrl.u32 %v1005, 16
        %v1386 = vrot.slane %v1384, 4
        %v1387 = vshll.u32 %v1005, 16
        %v1389 = vrot.slane %v1387, 5
        %v1390 = vor.u32 %v1386, %v1389
        %v1391 = vrot.slane %v1390, 4
        %v1393 = vshll.u32 %v1006, 16
        %v1395 = vrot.slane %v1393, 5
        %v1396 = vsel %vm410, %v1391, %v1395
        %v1397 = vshrl.u32 %v1006, 16
        %v1399 = vrot.slane %v1397, 4
        %v1400 = vor.u32 %v1399, %v1395
        %v1401 = vrot.slane %v1400, 4
        %v1403 = vshll.u32 %v1022, 16
        %v1405 = vrot.slane %v1403, 5
        %v1406 = vsel %vm410, %v1401, %v1405
        %v1407 = vld [vmem:[%s974] sm:$0xe]
        %v1408 = vld [vmem:[%s974 + $0xc] sm:$0xe]
        %v1409 = vld [vmem:[%s974 + $0x18] sm:$0xe]
        %v1410 = vld [vmem:[%s974 + $0x24] sm:$0xe]
        %v1411 = vld [vmem:[%s974 + $0x30] sm:$0xe]
        %v1412 = vld [vmem:[%s974 + $0x3c] sm:$0xe]
        %v1413 = vld [vmem:[%s974 + $0x48] sm:$0xe]
        %v1414 = vld [vmem:[%s974 + $0x54] sm:$0xe]
        %v1415 = vld [vmem:[%s974 + $0x60] sm:$0xe]
        %v1416 = vld [vmem:[%s974 + $0x6c] sm:$0xe]
        %v1417 = vld [vmem:[%s974 + $0x78] sm:$0xe]
        %v1418 = vld [vmem:[%s974 + $0x84] sm:$0xe]
        %v1419 = vld [vmem:[%s974 + $0x90] sm:$0xe]
        %v1420 = vld [vmem:[%s974 + $0x9c] sm:$0xe]
        %v1421 = vld [vmem:[%s974 + $0xa8] sm:$0xe]
        %v1422 = vld [vmem:[%s974 + $0xb4] sm:$0xe]
        %v1471 = vrot.slane %v1407, 5
        %v1472 = vrot.slane %v1471, 4
        %v1473 = vrot.slane %v976, 5
        %v1474 = vsel %vm861, %v1472, %v1473
        %v1475 = vrot.slane %v1473, 4
        %v1476 = vrot.slane %v1007, 5
        %v1477 = vsel %vm861, %v1475, %v1476
        %v1478 = vrot.slane %v1408, 5
        %v1479 = vrot.slane %v1478, 4
        %v1480 = vrot.slane %v978, 5
        %v1481 = vsel %vm861, %v1479, %v1480
        %v1482 = vrot.slane %v1480, 4
        %v1483 = vrot.slane %v1008, 5
        %v1484 = vsel %vm861, %v1482, %v1483
        %v1485 = vrot.slane %v1409, 5
        %v1486 = vrot.slane %v1485, 4
        %v1487 = vrot.slane %v980, 5
        %v1488 = vsel %vm861, %v1486, %v1487
        %v1489 = vrot.slane %v1487, 4
        %v1490 = vrot.slane %v1009, 5
        %v1491 = vsel %vm861, %v1489, %v1490
        %v1492 = vrot.slane %v1410, 5
        %v1493 = vrot.slane %v1492, 4
        %v1494 = vrot.slane %v982, 5
        %v1495 = vsel %vm861, %v1493, %v1494
        %v1496 = vrot.slane %v1494, 4
        %v1497 = vrot.slane %v1010, 5
        %v1498 = vsel %vm861, %v1496, %v1497
        %v1499 = vrot.slane %v1411, 5
        %v1500 = vrot.slane %v1499, 4
        %v1501 = vrot.slane %v984, 5
        %v1502 = vsel %vm861, %v1500, %v1501
        %v1503 = vrot.slane %v1501, 4
        %v1504 = vrot.slane %v1011, 5
        %v1505 = vsel %vm861, %v1503, %v1504
        %v1506 = vrot.slane %v1412, 5
        %v1507 = vrot.slane %v1506, 4
        %v1508 = vrot.slane %v986, 5
        %v1509 = vsel %vm861, %v1507, %v1508
        %v1510 = vrot.slane %v1508, 4
        %v1511 = vrot.slane %v1012, 5
        %v1512 = vsel %vm861, %v1510, %v1511
        %v1513 = vrot.slane %v1413, 5
        %v1514 = vrot.slane %v1513, 4
        %v1515 = vrot.slane %v988, 5
        %v1516 = vsel %vm861, %v1514, %v1515
        %v1517 = vrot.slane %v1515, 4
        %v1518 = vrot.slane %v1013, 5
        %v1519 = vsel %vm861, %v1517, %v1518
        %v1520 = vrot.slane %v1414, 5
        %v1521 = vrot.slane %v1520, 4
        %v1522 = vrot.slane %v990, 5
        %v1523 = vsel %vm861, %v1521, %v1522
        %v1524 = vrot.slane %v1522, 4
        %v1525 = vrot.slane %v1014, 5
        %v1526 = vsel %vm861, %v1524, %v1525
        %v1527 = vrot.slane %v1415, 5
        %v1528 = vrot.slane %v1527, 4
        %v1529 = vrot.slane %v992, 5
        %v1530 = vsel %vm861, %v1528, %v1529
        %v1531 = vrot.slane %v1529, 4
        %v1532 = vrot.slane %v1015, 5
        %v1533 = vsel %vm861, %v1531, %v1532
        %v1534 = vrot.slane %v1416, 5
        %v1535 = vrot.slane %v1534, 4
        %v1536 = vrot.slane %v994, 5
        %v1537 = vsel %vm861, %v1535, %v1536
        %v1538 = vrot.slane %v1536, 4
        %v1539 = vrot.slane %v1016, 5
        %v1540 = vsel %vm861, %v1538, %v1539
        %v1541 = vrot.slane %v1417, 5
        %v1542 = vrot.slane %v1541, 4
        %v1543 = vrot.slane %v996, 5
        %v1544 = vsel %vm861, %v1542, %v1543
        %v1545 = vrot.slane %v1543, 4
        %v1546 = vrot.slane %v1017, 5
        %v1547 = vsel %vm861, %v1545, %v1546
        %v1548 = vrot.slane %v1418, 5
        %v1549 = vrot.slane %v1548, 4
        %v1550 = vrot.slane %v998, 5
        %v1551 = vsel %vm861, %v1549, %v1550
        %v1552 = vrot.slane %v1550, 4
        %v1553 = vrot.slane %v1018, 5
        %v1554 = vsel %vm861, %v1552, %v1553
        %v1555 = vrot.slane %v1419, 5
        %v1556 = vrot.slane %v1555, 4
        %v1557 = vrot.slane %v1000, 5
        %v1558 = vsel %vm861, %v1556, %v1557
        %v1559 = vrot.slane %v1557, 4
        %v1560 = vrot.slane %v1019, 5
        %v1561 = vsel %vm861, %v1559, %v1560
        %v1562 = vrot.slane %v1420, 5
        %v1563 = vrot.slane %v1562, 4
        %v1564 = vrot.slane %v1002, 5
        %v1565 = vsel %vm861, %v1563, %v1564
        %v1566 = vrot.slane %v1564, 4
        %v1567 = vrot.slane %v1020, 5
        %v1568 = vsel %vm861, %v1566, %v1567
        %v1569 = vrot.slane %v1421, 5
        %v1570 = vrot.slane %v1569, 4
        %v1571 = vrot.slane %v1004, 5
        %v1572 = vsel %vm861, %v1570, %v1571
        %v1573 = vrot.slane %v1571, 4
        %v1574 = vrot.slane %v1021, 5
        %v1575 = vsel %vm861, %v1573, %v1574
        %v1576 = vrot.slane %v1422, 5
        %v1577 = vrot.slane %v1576, 4
        %v1578 = vrot.slane %v1006, 5
        %v1579 = vsel %vm861, %v1577, %v1578
        %v1580 = vrot.slane %v1578, 4
        %v1581 = vrot.slane %v1022, 5
        %v1582 = vsel %vm861, %v1580, %v1581
        %s1583 = scalar_lea.vmem %s358, 24
        %v1584 = vld [vmem:[%s1583] sm:$0xf]
        %v1585 = vld [vmem:[%s1583 + $0x4] sm:$0xf]
        %v1586 = vld [vmem:[%s1583 + $0xc] sm:$0xf]
        %v1587 = vld [vmem:[%s1583 + $0x10] sm:$0xf]
        %v1588 = vld [vmem:[%s1583 + $0x18] sm:$0xf]
        %v1589 = vld [vmem:[%s1583 + $0x1c] sm:$0xf]
        %v1590 = vld [vmem:[%s1583 + $0x24] sm:$0xf]
        %v1591 = vld [vmem:[%s1583 + $0x28] sm:$0xf]
        %v1592 = vld [vmem:[%s1583 + $0x30] sm:$0xf]
        %v1593 = vld [vmem:[%s1583 + $0x34] sm:$0xf]
        %v1594 = vld [vmem:[%s1583 + $0x3c] sm:$0xf]
        %v1595 = vld [vmem:[%s1583 + $0x40] sm:$0xf]
        %v1596 = vld [vmem:[%s1583 + $0x48] sm:$0xf]
        %v1597 = vld [vmem:[%s1583 + $0x4c] sm:$0xf]
        %v1598 = vld [vmem:[%s1583 + $0x54] sm:$0xf]
        %v1599 = vld [vmem:[%s1583 + $0x58] sm:$0xf]
        %v1600 = vld [vmem:[%s1583 + $0x60] sm:$0xf]
        %v1601 = vld [vmem:[%s1583 + $0x64] sm:$0xf]
        %v1602 = vld [vmem:[%s1583 + $0x6c] sm:$0xf]
        %v1603 = vld [vmem:[%s1583 + $0x70] sm:$0xf]
        %v1604 = vld [vmem:[%s1583 + $0x78] sm:$0xf]
        %v1605 = vld [vmem:[%s1583 + $0x7c] sm:$0xf]
        %v1606 = vld [vmem:[%s1583 + $0x84] sm:$0xf]
        %v1607 = vld [vmem:[%s1583 + $0x88] sm:$0xf]
        %v1608 = vld [vmem:[%s1583 + $0x90] sm:$0xf]
        %v1609 = vld [vmem:[%s1583 + $0x94] sm:$0xf]
        %v1610 = vld [vmem:[%s1583 + $0x9c] sm:$0xf]
        %v1611 = vld [vmem:[%s1583 + $0xa0] sm:$0xf]
        %v1612 = vld [vmem:[%s1583 + $0xa8] sm:$0xf]
        %v1613 = vld [vmem:[%s1583 + $0xac] sm:$0xf]
        %v1614 = vld [vmem:[%s1583 + $0xb4] sm:$0xf]
        %v1615 = vld [vmem:[%s1583 + $0xb8] sm:$0xf]
        %v1616 = vld [vmem:[%s1583 + $0x8] sm:$0x1]
        %v1617 = vld [vmem:[%s1583 + $0x14] sm:$0x1]
        %v1618 = vld [vmem:[%s1583 + $0x20] sm:$0x1]
        %v1619 = vld [vmem:[%s1583 + $0x2c] sm:$0x1]
        %v1620 = vld [vmem:[%s1583 + $0x38] sm:$0x1]
        %v1621 = vld [vmem:[%s1583 + $0x44] sm:$0x1]
        %v1622 = vld [vmem:[%s1583 + $0x50] sm:$0x1]
        %v1623 = vld [vmem:[%s1583 + $0x5c] sm:$0x1]
        %v1624 = vld [vmem:[%s1583 + $0x68] sm:$0x1]
        %v1625 = vld [vmem:[%s1583 + $0x74] sm:$0x1]
        %v1626 = vld [vmem:[%s1583 + $0x80] sm:$0x1]
        %v1627 = vld [vmem:[%s1583 + $0x8c] sm:$0x1]
        %v1628 = vld [vmem:[%s1583 + $0x98] sm:$0x1]
        %v1629 = vld [vmem:[%s1583 + $0xa4] sm:$0x1]
        %v1630 = vld [vmem:[%s1583 + $0xb0] sm:$0x1]
        %v1631 = vld [vmem:[%s1583 + $0xbc] sm:$0x1]
        %v1633 = vshrl.u32 %v1584, 16
        %v1635 = vrot.slane %v1633, 4
        %v1636 = vshll.u32 %v1584, 16
        %v1638 = vrot.slane %v1636, 5
        %v1639 = vor.u32 %v1635, %v1638
        %v1640 = vrot.slane %v1639, 4
        %v1642 = vshll.u32 %v1585, 16
        %v1644 = vrot.slane %v1642, 5
        %v1645 = vsel %vm410, %v1640, %v1644
        %v1646 = vshrl.u32 %v1585, 16
        %v1648 = vrot.slane %v1646, 4
        %v1649 = vor.u32 %v1648, %v1644
        %v1650 = vrot.slane %v1649, 4
        %v1652 = vshll.u32 %v1616, 16
        %v1654 = vrot.slane %v1652, 5
        %v1655 = vsel %vm410, %v1650, %v1654
        %v1657 = vshrl.u32 %v1586, 16
        %v1659 = vrot.slane %v1657, 4
        %v1660 = vshll.u32 %v1586, 16
        %v1662 = vrot.slane %v1660, 5
        %v1663 = vor.u32 %v1659, %v1662
        %v1664 = vrot.slane %v1663, 4
        %v1666 = vshll.u32 %v1587, 16
        %v1668 = vrot.slane %v1666, 5
        %v1669 = vsel %vm410, %v1664, %v1668
        %v1670 = vshrl.u32 %v1587, 16
        %v1672 = vrot.slane %v1670, 4
        %v1673 = vor.u32 %v1672, %v1668
        %v1674 = vrot.slane %v1673, 4
        %v1676 = vshll.u32 %v1617, 16
        %v1678 = vrot.slane %v1676, 5
        %v1679 = vsel %vm410, %v1674, %v1678
        %v1681 = vshrl.u32 %v1588, 16
        %v1683 = vrot.slane %v1681, 4
        %v1684 = vshll.u32 %v1588, 16
        %v1686 = vrot.slane %v1684, 5
        %v1687 = vor.u32 %v1683, %v1686
        %v1688 = vrot.slane %v1687, 4
        %v1690 = vshll.u32 %v1589, 16
        %v1692 = vrot.slane %v1690, 5
        %v1693 = vsel %vm410, %v1688, %v1692
        %v1694 = vshrl.u32 %v1589, 16
        %v1696 = vrot.slane %v1694, 4
        %v1697 = vor.u32 %v1696, %v1692
        %v1698 = vrot.slane %v1697, 4
        %v1700 = vshll.u32 %v1618, 16
        %v1702 = vrot.slane %v1700, 5
        %v1703 = vsel %vm410, %v1698, %v1702
        %v1705 = vshrl.u32 %v1590, 16
        %v1707 = vrot.slane %v1705, 4
        %v1708 = vshll.u32 %v1590, 16
        %v1710 = vrot.slane %v1708, 5
        %v1711 = vor.u32 %v1707, %v1710
        %v1712 = vrot.slane %v1711, 4
        %v1714 = vshll.u32 %v1591, 16
        %v1716 = vrot.slane %v1714, 5
        %v1717 = vsel %vm410, %v1712, %v1716
        %v1718 = vshrl.u32 %v1591, 16
        %v1720 = vrot.slane %v1718, 4
        %v1721 = vor.u32 %v1720, %v1716
        %v1722 = vrot.slane %v1721, 4
        %v1724 = vshll.u32 %v1619, 16
        %v1726 = vrot.slane %v1724, 5
        %v1727 = vsel %vm410, %v1722, %v1726
        %v1729 = vshrl.u32 %v1592, 16
        %v1731 = vrot.slane %v1729, 4
        %v1732 = vshll.u32 %v1592, 16
        %v1734 = vrot.slane %v1732, 5
        %v1735 = vor.u32 %v1731, %v1734
        %v1736 = vrot.slane %v1735, 4
        %v1738 = vshll.u32 %v1593, 16
        %v1740 = vrot.slane %v1738, 5
        %v1741 = vsel %vm410, %v1736, %v1740
        %v1742 = vshrl.u32 %v1593, 16
        %v1744 = vrot.slane %v1742, 4
        %v1745 = vor.u32 %v1744, %v1740
        %v1746 = vrot.slane %v1745, 4
        %v1748 = vshll.u32 %v1620, 16
        %v1750 = vrot.slane %v1748, 5
        %v1751 = vsel %vm410, %v1746, %v1750
        %v1753 = vshrl.u32 %v1594, 16
        %v1755 = vrot.slane %v1753, 4
        %v1756 = vshll.u32 %v1594, 16
        %v1758 = vrot.slane %v1756, 5
        %v1759 = vor.u32 %v1755, %v1758
        %v1760 = vrot.slane %v1759, 4
        %v1762 = vshll.u32 %v1595, 16
        %v1764 = vrot.slane %v1762, 5
        %v1765 = vsel %vm410, %v1760, %v1764
        %v1766 = vshrl.u32 %v1595, 16
        %v1768 = vrot.slane %v1766, 4
        %v1769 = vor.u32 %v1768, %v1764
        %v1770 = vrot.slane %v1769, 4
        %v1772 = vshll.u32 %v1621, 16
        %v1774 = vrot.slane %v1772, 5
        %v1775 = vsel %vm410, %v1770, %v1774
        %v1777 = vshrl.u32 %v1596, 16
        %v1779 = vrot.slane %v1777, 4
        %v1780 = vshll.u32 %v1596, 16
        %v1782 = vrot.slane %v1780, 5
        %v1783 = vor.u32 %v1779, %v1782
        %v1784 = vrot.slane %v1783, 4
        %v1786 = vshll.u32 %v1597, 16
        %v1788 = vrot.slane %v1786, 5
        %v1789 = vsel %vm410, %v1784, %v1788
        %v1790 = vshrl.u32 %v1597, 16
        %v1792 = vrot.slane %v1790, 4
        %v1793 = vor.u32 %v1792, %v1788
        %v1794 = vrot.slane %v1793, 4
        %v1796 = vshll.u32 %v1622, 16
        %v1798 = vrot.slane %v1796, 5
        %v1799 = vsel %vm410, %v1794, %v1798
        %v1801 = vshrl.u32 %v1598, 16
        %v1803 = vrot.slane %v1801, 4
        %v1804 = vshll.u32 %v1598, 16
        %v1806 = vrot.slane %v1804, 5
        %v1807 = vor.u32 %v1803, %v1806
        %v1808 = vrot.slane %v1807, 4
        %v1810 = vshll.u32 %v1599, 16
        %v1812 = vrot.slane %v1810, 5
        %v1813 = vsel %vm410, %v1808, %v1812
        %v1814 = vshrl.u32 %v1599, 16
        %v1816 = vrot.slane %v1814, 4
        %v1817 = vor.u32 %v1816, %v1812
        %v1818 = vrot.slane %v1817, 4
        %v1820 = vshll.u32 %v1623, 16
        %v1822 = vrot.slane %v1820, 5
        %v1823 = vsel %vm410, %v1818, %v1822
        %v1825 = vshrl.u32 %v1600, 16
        %v1827 = vrot.slane %v1825, 4
        %v1828 = vshll.u32 %v1600, 16
        %v1830 = vrot.slane %v1828, 5
        %v1831 = vor.u32 %v1827, %v1830
        %v1832 = vrot.slane %v1831, 4
        %v1834 = vshll.u32 %v1601, 16
        %v1836 = vrot.slane %v1834, 5
        %v1837 = vsel %vm410, %v1832, %v1836
        %v1838 = vshrl.u32 %v1601, 16
        %v1840 = vrot.slane %v1838, 4
        %v1841 = vor.u32 %v1840, %v1836
        %v1842 = vrot.slane %v1841, 4
        %v1844 = vshll.u32 %v1624, 16
        %v1846 = vrot.slane %v1844, 5
        %v1847 = vsel %vm410, %v1842, %v1846
        %v1849 = vshrl.u32 %v1602, 16
        %v1851 = vrot.slane %v1849, 4
        %v1852 = vshll.u32 %v1602, 16
        %v1854 = vrot.slane %v1852, 5
        %v1855 = vor.u32 %v1851, %v1854
        %v1856 = vrot.slane %v1855, 4
        %v1858 = vshll.u32 %v1603, 16
        %v1860 = vrot.slane %v1858, 5
        %v1861 = vsel %vm410, %v1856, %v1860
        %v1862 = vshrl.u32 %v1603, 16
        %v1864 = vrot.slane %v1862, 4
        %v1865 = vor.u32 %v1864, %v1860
        %v1866 = vrot.slane %v1865, 4
        %v1868 = vshll.u32 %v1625, 16
        %v1870 = vrot.slane %v1868, 5
        %v1871 = vsel %vm410, %v1866, %v1870
        %v1873 = vshrl.u32 %v1604, 16
        %v1875 = vrot.slane %v1873, 4
        %v1876 = vshll.u32 %v1604, 16
        %v1878 = vrot.slane %v1876, 5
        %v1879 = vor.u32 %v1875, %v1878
        %v1880 = vrot.slane %v1879, 4
        %v1882 = vshll.u32 %v1605, 16
        %v1884 = vrot.slane %v1882, 5
        %v1885 = vsel %vm410, %v1880, %v1884
        %v1886 = vshrl.u32 %v1605, 16
        %v1888 = vrot.slane %v1886, 4
        %v1889 = vor.u32 %v1888, %v1884
        %v1890 = vrot.slane %v1889, 4
        %v1892 = vshll.u32 %v1626, 16
        %v1894 = vrot.slane %v1892, 5
        %v1895 = vsel %vm410, %v1890, %v1894
        %v1897 = vshrl.u32 %v1606, 16
        %v1899 = vrot.slane %v1897, 4
        %v1900 = vshll.u32 %v1606, 16
        %v1902 = vrot.slane %v1900, 5
        %v1903 = vor.u32 %v1899, %v1902
        %v1904 = vrot.slane %v1903, 4
        %v1906 = vshll.u32 %v1607, 16
        %v1908 = vrot.slane %v1906, 5
        %v1909 = vsel %vm410, %v1904, %v1908
        %v1910 = vshrl.u32 %v1607, 16
        %v1912 = vrot.slane %v1910, 4
        %v1913 = vor.u32 %v1912, %v1908
        %v1914 = vrot.slane %v1913, 4
        %v1916 = vshll.u32 %v1627, 16
        %v1918 = vrot.slane %v1916, 5
        %v1919 = vsel %vm410, %v1914, %v1918
        %v1921 = vshrl.u32 %v1608, 16
        %v1923 = vrot.slane %v1921, 4
        %v1924 = vshll.u32 %v1608, 16
        %v1926 = vrot.slane %v1924, 5
        %v1927 = vor.u32 %v1923, %v1926
        %v1928 = vrot.slane %v1927, 4
        %v1930 = vshll.u32 %v1609, 16
        %v1932 = vrot.slane %v1930, 5
        %v1933 = vsel %vm410, %v1928, %v1932
        %v1934 = vshrl.u32 %v1609, 16
        %v1936 = vrot.slane %v1934, 4
        %v1937 = vor.u32 %v1936, %v1932
        %v1938 = vrot.slane %v1937, 4
        %v1940 = vshll.u32 %v1628, 16
        %v1942 = vrot.slane %v1940, 5
        %v1943 = vsel %vm410, %v1938, %v1942
        %v1945 = vshrl.u32 %v1610, 16
        %v1947 = vrot.slane %v1945, 4
        %v1948 = vshll.u32 %v1610, 16
        %v1950 = vrot.slane %v1948, 5
        %v1951 = vor.u32 %v1947, %v1950
        %v1952 = vrot.slane %v1951, 4
        %v1954 = vshll.u32 %v1611, 16
        %v1956 = vrot.slane %v1954, 5
        %v1957 = vsel %vm410, %v1952, %v1956
        %v1958 = vshrl.u32 %v1611, 16
        %v1960 = vrot.slane %v1958, 4
        %v1961 = vor.u32 %v1960, %v1956
        %v1962 = vrot.slane %v1961, 4
        %v1964 = vshll.u32 %v1629, 16
        %v1966 = vrot.slane %v1964, 5
        %v1967 = vsel %vm410, %v1962, %v1966
        %v1969 = vshrl.u32 %v1612, 16
        %v1971 = vrot.slane %v1969, 4
        %v1972 = vshll.u32 %v1612, 16
        %v1974 = vrot.slane %v1972, 5
        %v1975 = vor.u32 %v1971, %v1974
        %v1976 = vrot.slane %v1975, 4
        %v1978 = vshll.u32 %v1613, 16
        %v1980 = vrot.slane %v1978, 5
        %v1981 = vsel %vm410, %v1976, %v1980
        %v1982 = vshrl.u32 %v1613, 16
        %v1984 = vrot.slane %v1982, 4
        %v1985 = vor.u32 %v1984, %v1980
        %v1986 = vrot.slane %v1985, 4
        %v1988 = vshll.u32 %v1630, 16
        %v1990 = vrot.slane %v1988, 5
        %v1991 = vsel %vm410, %v1986, %v1990
        %v1993 = vshrl.u32 %v1614, 16
        %v1995 = vrot.slane %v1993, 4
        %v1996 = vshll.u32 %v1614, 16
        %v1998 = vrot.slane %v1996, 5
        %v1999 = vor.u32 %v1995, %v1998
        %v2000 = vrot.slane %v1999, 4
        %v2002 = vshll.u32 %v1615, 16
        %v2004 = vrot.slane %v2002, 5
        %v2005 = vsel %vm410, %v2000, %v2004
        %v2006 = vshrl.u32 %v1615, 16
        %v2008 = vrot.slane %v2006, 4
        %v2009 = vor.u32 %v2008, %v2004
        %v2010 = vrot.slane %v2009, 4
        %v2012 = vshll.u32 %v1631, 16
        %v2014 = vrot.slane %v2012, 5
        %v2015 = vsel %vm410, %v2010, %v2014
        %v2016 = vld [vmem:[%s1583] sm:$0xe]
        %v2017 = vld [vmem:[%s1583 + $0xc] sm:$0xe]
        %v2018 = vld [vmem:[%s1583 + $0x18] sm:$0xe]
        %v2019 = vld [vmem:[%s1583 + $0x24] sm:$0xe]
        %v2020 = vld [vmem:[%s1583 + $0x30] sm:$0xe]
        %v2021 = vld [vmem:[%s1583 + $0x3c] sm:$0xe]
        %v2022 = vld [vmem:[%s1583 + $0x48] sm:$0xe]
        %v2023 = vld [vmem:[%s1583 + $0x54] sm:$0xe]
        %v2024 = vld [vmem:[%s1583 + $0x60] sm:$0xe]
        %v2025 = vld [vmem:[%s1583 + $0x6c] sm:$0xe]
        %v2026 = vld [vmem:[%s1583 + $0x78] sm:$0xe]
        %v2027 = vld [vmem:[%s1583 + $0x84] sm:$0xe]
        %v2028 = vld [vmem:[%s1583 + $0x90] sm:$0xe]
        %v2029 = vld [vmem:[%s1583 + $0x9c] sm:$0xe]
        %v2030 = vld [vmem:[%s1583 + $0xa8] sm:$0xe]
        %v2031 = vld [vmem:[%s1583 + $0xb4] sm:$0xe]
        %v2080 = vrot.slane %v2016, 5
        %v2081 = vrot.slane %v2080, 4
        %v2082 = vrot.slane %v1585, 5
        %v2083 = vsel %vm861, %v2081, %v2082
        %v2084 = vrot.slane %v2082, 4
        %v2085 = vrot.slane %v1616, 5
        %v2086 = vsel %vm861, %v2084, %v2085
        %v2087 = vrot.slane %v2017, 5
        %v2088 = vrot.slane %v2087, 4
        %v2089 = vrot.slane %v1587, 5
        %v2090 = vsel %vm861, %v2088, %v2089
        %v2091 = vrot.slane %v2089, 4
        %v2092 = vrot.slane %v1617, 5
        %v2093 = vsel %vm861, %v2091, %v2092
        %v2094 = vrot.slane %v2018, 5
        %v2095 = vrot.slane %v2094, 4
        %v2096 = vrot.slane %v1589, 5
        %v2097 = vsel %vm861, %v2095, %v2096
        %v2098 = vrot.slane %v2096, 4
        %v2099 = vrot.slane %v1618, 5
        %v2100 = vsel %vm861, %v2098, %v2099
        %v2101 = vrot.slane %v2019, 5
        %v2102 = vrot.slane %v2101, 4
        %v2103 = vrot.slane %v1591, 5
        %v2104 = vsel %vm861, %v2102, %v2103
        %v2105 = vrot.slane %v2103, 4
        %v2106 = vrot.slane %v1619, 5
        %v2107 = vsel %vm861, %v2105, %v2106
        %v2108 = vrot.slane %v2020, 5
        %v2109 = vrot.slane %v2108, 4
        %v2110 = vrot.slane %v1593, 5
        %v2111 = vsel %vm861, %v2109, %v2110
        %v2112 = vrot.slane %v2110, 4
        %v2113 = vrot.slane %v1620, 5
        %v2114 = vsel %vm861, %v2112, %v2113
        %v2115 = vrot.slane %v2021, 5
        %v2116 = vrot.slane %v2115, 4
        %v2117 = vrot.slane %v1595, 5
        %v2118 = vsel %vm861, %v2116, %v2117
        %v2119 = vrot.slane %v2117, 4
        %v2120 = vrot.slane %v1621, 5
        %v2121 = vsel %vm861, %v2119, %v2120
        %v2122 = vrot.slane %v2022, 5
        %v2123 = vrot.slane %v2122, 4
        %v2124 = vrot.slane %v1597, 5
        %v2125 = vsel %vm861, %v2123, %v2124
        %v2126 = vrot.slane %v2124, 4
        %v2127 = vrot.slane %v1622, 5
        %v2128 = vsel %vm861, %v2126, %v2127
        %v2129 = vrot.slane %v2023, 5
        %v2130 = vrot.slane %v2129, 4
        %v2131 = vrot.slane %v1599, 5
        %v2132 = vsel %vm861, %v2130, %v2131
        %v2133 = vrot.slane %v2131, 4
        %v2134 = vrot.slane %v1623, 5
        %v2135 = vsel %vm861, %v2133, %v2134
        %v2136 = vrot.slane %v2024, 5
        %v2137 = vrot.slane %v2136, 4
        %v2138 = vrot.slane %v1601, 5
        %v2139 = vsel %vm861, %v2137, %v2138
        %v2140 = vrot.slane %v2138, 4
        %v2141 = vrot.slane %v1624, 5
        %v2142 = vsel %vm861, %v2140, %v2141
        %v2143 = vrot.slane %v2025, 5
        %v2144 = vrot.slane %v2143, 4
        %v2145 = vrot.slane %v1603, 5
        %v2146 = vsel %vm861, %v2144, %v2145
        %v2147 = vrot.slane %v2145, 4
        %v2148 = vrot.slane %v1625, 5
        %v2149 = vsel %vm861, %v2147, %v2148
        %v2150 = vrot.slane %v2026, 5
        %v2151 = vrot.slane %v2150, 4
        %v2152 = vrot.slane %v1605, 5
        %v2153 = vsel %vm861, %v2151, %v2152
        %v2154 = vrot.slane %v2152, 4
        %v2155 = vrot.slane %v1626, 5
        %v2156 = vsel %vm861, %v2154, %v2155
        %v2157 = vrot.slane %v2027, 5
        %v2158 = vrot.slane %v2157, 4
        %v2159 = vrot.slane %v1607, 5
        %v2160 = vsel %vm861, %v2158, %v2159
        %v2161 = vrot.slane %v2159, 4
        %v2162 = vrot.slane %v1627, 5
        %v2163 = vsel %vm861, %v2161, %v2162
        %v2164 = vrot.slane %v2028, 5
        %v2165 = vrot.slane %v2164, 4
        %v2166 = vrot.slane %v1609, 5
        %v2167 = vsel %vm861, %v2165, %v2166
        %v2168 = vrot.slane %v2166, 4
        %v2169 = vrot.slane %v1628, 5
        %v2170 = vsel %vm861, %v2168, %v2169
        %v2171 = vrot.slane %v2029, 5
        %v2172 = vrot.slane %v2171, 4
        %v2173 = vrot.slane %v1611, 5
        %v2174 = vsel %vm861, %v2172, %v2173
        %v2175 = vrot.slane %v2173, 4
        %v2176 = vrot.slane %v1629, 5
        %v2177 = vsel %vm861, %v2175, %v2176
        %v2178 = vrot.slane %v2030, 5
        %v2179 = vrot.slane %v2178, 4
        %v2180 = vrot.slane %v1613, 5
        %v2181 = vsel %vm861, %v2179, %v2180
        %v2182 = vrot.slane %v2180, 4
        %v2183 = vrot.slane %v1630, 5
        %v2184 = vsel %vm861, %v2182, %v2183
        %v2185 = vrot.slane %v2031, 5
        %v2186 = vrot.slane %v2185, 4
        %v2187 = vrot.slane %v1615, 5
        %v2188 = vsel %vm861, %v2186, %v2187
        %v2189 = vrot.slane %v2187, 4
        %v2190 = vrot.slane %v1631, 5
        %v2191 = vsel %vm861, %v2189, %v2190
        %v2208 = vunpack.c.l.b16 %v360
        %v2209 = vunpack.c.l.b16 %v361
        %v2210 = vunpack.c.l.b16 %v362
        %v2211 = vunpack.c.l.b16 %v363
        %v2212 = vunpack.c.l.b16 %v364
        %v2213 = vunpack.c.l.b16 %v365
        %v2214 = vunpack.c.l.b16 %v366
        %v2215 = vunpack.c.l.b16 %v367
        %v2216 = vunpack.c.l.b16 %v368
        %v2217 = vunpack.c.l.b16 %v369
        %v2218 = vunpack.c.l.b16 %v370
        %v2219 = vunpack.c.l.b16 %v371
        %v2220 = vunpack.c.l.b16 %v372
        %v2221 = vunpack.c.l.b16 %v373
        %v2222 = vunpack.c.l.b16 %v374
        %v2223 = vunpack.c.l.b16 %v375
        %v2224 = vunpack.c.l.b16 %v376
        %v2225 = vunpack.c.l.b16 %v377
        %v2226 = vunpack.c.l.b16 %v378
        %v2227 = vunpack.c.l.b16 %v379
        %v2228 = vunpack.c.l.b16 %v380
        %v2229 = vunpack.c.l.b16 %v381
        %v2230 = vunpack.c.l.b16 %v382
        %v2231 = vunpack.c.l.b16 %v383
        %v2232 = vunpack.c.l.b16 %v384
        %v2233 = vunpack.c.l.b16 %v385
        %v2234 = vunpack.c.l.b16 %v386
        %v2235 = vunpack.c.l.b16 %v387
        %v2236 = vunpack.c.l.b16 %v388
        %v2237 = vunpack.c.l.b16 %v389
        %v2238 = vunpack.c.l.b16 %v390
        %v2239 = vunpack.c.l.b16 %v391
        %v2240 = vpack.c.b16 %v2209, %v2208
        %v2241 = vpack.c.b16 %v2211, %v2210
        %v2242 = vpack.c.b16 %v2213, %v2212
        %v2243 = vpack.c.b16 %v2215, %v2214
        %v2244 = vpack.c.b16 %v2217, %v2216
        %v2245 = vpack.c.b16 %v2219, %v2218
        %v2246 = vpack.c.b16 %v2221, %v2220
        %v2247 = vpack.c.b16 %v2223, %v2222
        %v2248 = vpack.c.b16 %v2225, %v2224
        %v2249 = vpack.c.b16 %v2227, %v2226
        %v2250 = vpack.c.b16 %v2229, %v2228
        %v2251 = vpack.c.b16 %v2231, %v2230
        %v2252 = vpack.c.b16 %v2233, %v2232
        %v2253 = vpack.c.b16 %v2235, %v2234
        %v2254 = vpack.c.b16 %v2237, %v2236
        %v2255 = vpack.c.b16 %v2239, %v2238
        %v2272 = vunpack.c.l.b16 %v424
        %v2273 = vunpack.c.l.b16 %v434
        %v2274 = vunpack.c.l.b16 %v448
        %v2275 = vunpack.c.l.b16 %v458
        %v2276 = vunpack.c.l.b16 %v472
        %v2277 = vunpack.c.l.b16 %v482
        %v2278 = vunpack.c.l.b16 %v496
        %v2279 = vunpack.c.l.b16 %v506
        %v2280 = vunpack.c.l.b16 %v520
        %v2281 = vunpack.c.l.b16 %v530
        %v2282 = vunpack.c.l.b16 %v544
        %v2283 = vunpack.c.l.b16 %v554
        %v2284 = vunpack.c.l.b16 %v568
        %v2285 = vunpack.c.l.b16 %v578
        %v2286 = vunpack.c.l.b16 %v592
        %v2287 = vunpack.c.l.b16 %v602
        %v2288 = vunpack.c.l.b16 %v616
        %v2289 = vunpack.c.l.b16 %v626
        %v2290 = vunpack.c.l.b16 %v640
        %v2291 = vunpack.c.l.b16 %v650
        %v2292 = vunpack.c.l.b16 %v664
        %v2293 = vunpack.c.l.b16 %v674
        %v2294 = vunpack.c.l.b16 %v688
        %v2295 = vunpack.c.l.b16 %v698
        %v2296 = vunpack.c.l.b16 %v712
        %v2297 = vunpack.c.l.b16 %v722
        %v2298 = vunpack.c.l.b16 %v736
        %v2299 = vunpack.c.l.b16 %v746
        %v2300 = vunpack.c.l.b16 %v760
        %v2301 = vunpack.c.l.b16 %v770
        %v2302 = vunpack.c.l.b16 %v784
        %v2303 = vunpack.c.l.b16 %v794
        %v2304 = vpack.c.b16 %v2273, %v2272
        %v2305 = vpack.c.b16 %v2275, %v2274
        %v2306 = vpack.c.b16 %v2277, %v2276
        %v2307 = vpack.c.b16 %v2279, %v2278
        %v2308 = vpack.c.b16 %v2281, %v2280
        %v2309 = vpack.c.b16 %v2283, %v2282
        %v2310 = vpack.c.b16 %v2285, %v2284
        %v2311 = vpack.c.b16 %v2287, %v2286
        %v2312 = vpack.c.b16 %v2289, %v2288
        %v2313 = vpack.c.b16 %v2291, %v2290
        %v2314 = vpack.c.b16 %v2293, %v2292
        %v2315 = vpack.c.b16 %v2295, %v2294
        %v2316 = vpack.c.b16 %v2297, %v2296
        %v2317 = vpack.c.b16 %v2299, %v2298
        %v2318 = vpack.c.b16 %v2301, %v2300
        %v2319 = vpack.c.b16 %v2303, %v2302
        %v2336 = vunpack.c.l.b16 %v865
        %v2337 = vunpack.c.l.b16 %v868
        %v2338 = vunpack.c.l.b16 %v872
        %v2339 = vunpack.c.l.b16 %v875
        %v2340 = vunpack.c.l.b16 %v879
        %v2341 = vunpack.c.l.b16 %v882
        %v2342 = vunpack.c.l.b16 %v886
        %v2343 = vunpack.c.l.b16 %v889
        %v2344 = vunpack.c.l.b16 %v893
        %v2345 = vunpack.c.l.b16 %v896
        %v2346 = vunpack.c.l.b16 %v900
        %v2347 = vunpack.c.l.b16 %v903
        %v2348 = vunpack.c.l.b16 %v907
        %v2349 = vunpack.c.l.b16 %v910
        %v2350 = vunpack.c.l.b16 %v914
        %v2351 = vunpack.c.l.b16 %v917
        %v2352 = vunpack.c.l.b16 %v921
        %v2353 = vunpack.c.l.b16 %v924
        %v2354 = vunpack.c.l.b16 %v928
        %v2355 = vunpack.c.l.b16 %v931
        %v2356 = vunpack.c.l.b16 %v935
        %v2357 = vunpack.c.l.b16 %v938
        %v2358 = vunpack.c.l.b16 %v942
        %v2359 = vunpack.c.l.b16 %v945
        %v2360 = vunpack.c.l.b16 %v949
        %v2361 = vunpack.c.l.b16 %v952
        %v2362 = vunpack.c.l.b16 %v956
        %v2363 = vunpack.c.l.b16 %v959
        %v2364 = vunpack.c.l.b16 %v963
        %v2365 = vunpack.c.l.b16 %v966
        %v2366 = vunpack.c.l.b16 %v970
        %v2367 = vunpack.c.l.b16 %v973
        %v2368 = vpack.c.b16 %v2337, %v2336
        %v2369 = vpack.c.b16 %v2339, %v2338
        %v2370 = vpack.c.b16 %v2341, %v2340
        %v2371 = vpack.c.b16 %v2343, %v2342
        %v2372 = vpack.c.b16 %v2345, %v2344
        %v2373 = vpack.c.b16 %v2347, %v2346
        %v2374 = vpack.c.b16 %v2349, %v2348
        %v2375 = vpack.c.b16 %v2351, %v2350
        %v2376 = vpack.c.b16 %v2353, %v2352
        %v2377 = vpack.c.b16 %v2355, %v2354
        %v2378 = vpack.c.b16 %v2357, %v2356
        %v2379 = vpack.c.b16 %v2359, %v2358
        %v2380 = vpack.c.b16 %v2361, %v2360
        %v2381 = vpack.c.b16 %v2363, %v2362
        %v2382 = vpack.c.b16 %v2365, %v2364
        %v2383 = vpack.c.b16 %v2367, %v2366
        %v2416 = vunpack.c.l.b16 %v975
        %v2417 = vunpack.c.l.b16 %v976
        %v2418 = vunpack.c.l.b16 %v977
        %v2419 = vunpack.c.l.b16 %v978
        %v2420 = vunpack.c.l.b16 %v979
        %v2421 = vunpack.c.l.b16 %v980
        %v2422 = vunpack.c.l.b16 %v981
        %v2423 = vunpack.c.l.b16 %v982
        %v2424 = vunpack.c.l.b16 %v983
        %v2425 = vunpack.c.l.b16 %v984
        %v2426 = vunpack.c.l.b16 %v985
        %v2427 = vunpack.c.l.b16 %v986
        %v2428 = vunpack.c.l.b16 %v987
        %v2429 = vunpack.c.l.b16 %v988
        %v2430 = vunpack.c.l.b16 %v989
        %v2431 = vunpack.c.l.b16 %v990
        %v2432 = vunpack.c.l.b16 %v991
        %v2433 = vunpack.c.l.b16 %v992
        %v2434 = vunpack.c.l.b16 %v993
        %v2435 = vunpack.c.l.b16 %v994
        %v2436 = vunpack.c.l.b16 %v995
        %v2437 = vunpack.c.l.b16 %v996
        %v2438 = vunpack.c.l.b16 %v997
        %v2439 = vunpack.c.l.b16 %v998
        %v2440 = vunpack.c.l.b16 %v999
        %v2441 = vunpack.c.l.b16 %v1000
        %v2442 = vunpack.c.l.b16 %v1001
        %v2443 = vunpack.c.l.b16 %v1002
        %v2444 = vunpack.c.l.b16 %v1003
        %v2445 = vunpack.c.l.b16 %v1004
        %v2446 = vunpack.c.l.b16 %v1005
        %v2447 = vunpack.c.l.b16 %v1006
        %v2448 = vpack.c.b16 %v2417, %v2416
        %v2449 = vpack.c.b16 %v2419, %v2418
        %v2450 = vpack.c.b16 %v2421, %v2420
        %v2451 = vpack.c.b16 %v2423, %v2422
        %v2452 = vpack.c.b16 %v2425, %v2424
        %v2453 = vpack.c.b16 %v2427, %v2426
        %v2454 = vpack.c.b16 %v2429, %v2428
        %v2455 = vpack.c.b16 %v2431, %v2430
        %v2456 = vpack.c.b16 %v2433, %v2432
        %v2457 = vpack.c.b16 %v2435, %v2434
        %v2458 = vpack.c.b16 %v2437, %v2436
        %v2459 = vpack.c.b16 %v2439, %v2438
        %v2460 = vpack.c.b16 %v2441, %v2440
        %v2461 = vpack.c.b16 %v2443, %v2442
        %v2462 = vpack.c.b16 %v2445, %v2444
        %v2463 = vpack.c.b16 %v2447, %v2446
        %v2480 = vunpack.c.l.b16 %v1036
        %v2481 = vunpack.c.l.b16 %v1046
        %v2482 = vunpack.c.l.b16 %v1060
        %v2483 = vunpack.c.l.b16 %v1070
        %v2484 = vunpack.c.l.b16 %v1084
        %v2485 = vunpack.c.l.b16 %v1094
        %v2486 = vunpack.c.l.b16 %v1108
        %v2487 = vunpack.c.l.b16 %v1118
        %v2488 = vunpack.c.l.b16 %v1132
        %v2489 = vunpack.c.l.b16 %v1142
        %v2490 = vunpack.c.l.b16 %v1156
        %v2491 = vunpack.c.l.b16 %v1166
        %v2492 = vunpack.c.l.b16 %v1180
        %v2493 = vunpack.c.l.b16 %v1190
        %v2494 = vunpack.c.l.b16 %v1204
        %v2495 = vunpack.c.l.b16 %v1214
        %v2496 = vunpack.c.l.b16 %v1228
        %v2497 = vunpack.c.l.b16 %v1238
        %v2498 = vunpack.c.l.b16 %v1252
        %v2499 = vunpack.c.l.b16 %v1262
        %v2500 = vunpack.c.l.b16 %v1276
        %v2501 = vunpack.c.l.b16 %v1286
        %v2502 = vunpack.c.l.b16 %v1300
        %v2503 = vunpack.c.l.b16 %v1310
        %v2504 = vunpack.c.l.b16 %v1324
        %v2505 = vunpack.c.l.b16 %v1334
        %v2506 = vunpack.c.l.b16 %v1348
        %v2507 = vunpack.c.l.b16 %v1358
        %v2508 = vunpack.c.l.b16 %v1372
        %v2509 = vunpack.c.l.b16 %v1382
        %v2510 = vunpack.c.l.b16 %v1396
        %v2511 = vunpack.c.l.b16 %v1406
        %v2512 = vpack.c.b16 %v2481, %v2480
        %v2513 = vpack.c.b16 %v2483, %v2482
        %v2514 = vpack.c.b16 %v2485, %v2484
        %v2515 = vpack.c.b16 %v2487, %v2486
        %v2516 = vpack.c.b16 %v2489, %v2488
        %v2517 = vpack.c.b16 %v2491, %v2490
        %v2518 = vpack.c.b16 %v2493, %v2492
        %v2519 = vpack.c.b16 %v2495, %v2494
        %v2520 = vpack.c.b16 %v2497, %v2496
        %v2521 = vpack.c.b16 %v2499, %v2498
        %v2522 = vpack.c.b16 %v2501, %v2500
        %v2523 = vpack.c.b16 %v2503, %v2502
        %v2524 = vpack.c.b16 %v2505, %v2504
        %v2525 = vpack.c.b16 %v2507, %v2506
        %v2526 = vpack.c.b16 %v2509, %v2508
        %v2527 = vpack.c.b16 %v2511, %v2510
        %v2544 = vunpack.c.l.b16 %v1474
        %v2545 = vunpack.c.l.b16 %v1477
        %v2546 = vunpack.c.l.b16 %v1481
        %v2547 = vunpack.c.l.b16 %v1484
        %v2548 = vunpack.c.l.b16 %v1488
        %v2549 = vunpack.c.l.b16 %v1491
        %v2550 = vunpack.c.l.b16 %v1495
        %v2551 = vunpack.c.l.b16 %v1498
        %v2552 = vunpack.c.l.b16 %v1502
        %v2553 = vunpack.c.l.b16 %v1505
        %v2554 = vunpack.c.l.b16 %v1509
        %v2555 = vunpack.c.l.b16 %v1512
        %v2556 = vunpack.c.l.b16 %v1516
        %v2557 = vunpack.c.l.b16 %v1519
        %v2558 = vunpack.c.l.b16 %v1523
        %v2559 = vunpack.c.l.b16 %v1526
        %v2560 = vunpack.c.l.b16 %v1530
        %v2561 = vunpack.c.l.b16 %v1533
        %v2562 = vunpack.c.l.b16 %v1537
        %v2563 = vunpack.c.l.b16 %v1540
        %v2564 = vunpack.c.l.b16 %v1544
        %v2565 = vunpack.c.l.b16 %v1547
        %v2566 = vunpack.c.l.b16 %v1551
        %v2567 = vunpack.c.l.b16 %v1554
        %v2568 = vunpack.c.l.b16 %v1558
        %v2569 = vunpack.c.l.b16 %v1561
        %v2570 = vunpack.c.l.b16 %v1565
        %v2571 = vunpack.c.l.b16 %v1568
        %v2572 = vunpack.c.l.b16 %v1572
        %v2573 = vunpack.c.l.b16 %v1575
        %v2574 = vunpack.c.l.b16 %v1579
        %v2575 = vunpack.c.l.b16 %v1582
        %v2576 = vpack.c.b16 %v2545, %v2544
        %v2577 = vpack.c.b16 %v2547, %v2546
        %v2578 = vpack.c.b16 %v2549, %v2548
        %v2579 = vpack.c.b16 %v2551, %v2550
        %v2580 = vpack.c.b16 %v2553, %v2552
        %v2581 = vpack.c.b16 %v2555, %v2554
        %v2582 = vpack.c.b16 %v2557, %v2556
        %v2583 = vpack.c.b16 %v2559, %v2558
        %v2584 = vpack.c.b16 %v2561, %v2560
        %v2585 = vpack.c.b16 %v2563, %v2562
        %v2586 = vpack.c.b16 %v2565, %v2564
        %v2587 = vpack.c.b16 %v2567, %v2566
        %v2588 = vpack.c.b16 %v2569, %v2568
        %v2589 = vpack.c.b16 %v2571, %v2570
        %v2590 = vpack.c.b16 %v2573, %v2572
        %v2591 = vpack.c.b16 %v2575, %v2574
        %v2624 = vunpack.c.l.b16 %v1584
        %v2625 = vunpack.c.l.b16 %v1585
        %v2626 = vunpack.c.l.b16 %v1586
        %v2627 = vunpack.c.l.b16 %v1587
        %v2628 = vunpack.c.l.b16 %v1588
        %v2629 = vunpack.c.l.b16 %v1589
        %v2630 = vunpack.c.l.b16 %v1590
        %v2631 = vunpack.c.l.b16 %v1591
        %v2632 = vunpack.c.l.b16 %v1592
        %v2633 = vunpack.c.l.b16 %v1593
        %v2634 = vunpack.c.l.b16 %v1594
        %v2635 = vunpack.c.l.b16 %v1595
        %v2636 = vunpack.c.l.b16 %v1596
        %v2637 = vunpack.c.l.b16 %v1597
        %v2638 = vunpack.c.l.b16 %v1598
        %v2639 = vunpack.c.l.b16 %v1599
        %v2640 = vunpack.c.l.b16 %v1600
        %v2641 = vunpack.c.l.b16 %v1601
        %v2642 = vunpack.c.l.b16 %v1602
        %v2643 = vunpack.c.l.b16 %v1603
        %v2644 = vunpack.c.l.b16 %v1604
        %v2645 = vunpack.c.l.b16 %v1605
        %v2646 = vunpack.c.l.b16 %v1606
        %v2647 = vunpack.c.l.b16 %v1607
        %v2648 = vunpack.c.l.b16 %v1608
        %v2649 = vunpack.c.l.b16 %v1609
        %v2650 = vunpack.c.l.b16 %v1610
        %v2651 = vunpack.c.l.b16 %v1611
        %v2652 = vunpack.c.l.b16 %v1612
        %v2653 = vunpack.c.l.b16 %v1613
        %v2654 = vunpack.c.l.b16 %v1614
        %v2655 = vunpack.c.l.b16 %v1615
        %v2656 = vpack.c.b16 %v2625, %v2624
        %v2657 = vpack.c.b16 %v2627, %v2626
        %v2658 = vpack.c.b16 %v2629, %v2628
        %v2659 = vpack.c.b16 %v2631, %v2630
        %v2660 = vpack.c.b16 %v2633, %v2632
        %v2661 = vpack.c.b16 %v2635, %v2634
        %v2662 = vpack.c.b16 %v2637, %v2636
        %v2663 = vpack.c.b16 %v2639, %v2638
        %v2664 = vpack.c.b16 %v2641, %v2640
        %v2665 = vpack.c.b16 %v2643, %v2642
        %v2666 = vpack.c.b16 %v2645, %v2644
        %v2667 = vpack.c.b16 %v2647, %v2646
        %v2668 = vpack.c.b16 %v2649, %v2648
        %v2669 = vpack.c.b16 %v2651, %v2650
        %v2670 = vpack.c.b16 %v2653, %v2652
        %v2671 = vpack.c.b16 %v2655, %v2654
        %v2688 = vunpack.c.l.b16 %v1645
        %v2689 = vunpack.c.l.b16 %v1655
        %v2690 = vunpack.c.l.b16 %v1669
        %v2691 = vunpack.c.l.b16 %v1679
        %v2692 = vunpack.c.l.b16 %v1693
        %v2693 = vunpack.c.l.b16 %v1703
        %v2694 = vunpack.c.l.b16 %v1717
        %v2695 = vunpack.c.l.b16 %v1727
        %v2696 = vunpack.c.l.b16 %v1741
        %v2697 = vunpack.c.l.b16 %v1751
        %v2698 = vunpack.c.l.b16 %v1765
        %v2699 = vunpack.c.l.b16 %v1775
        %v2700 = vunpack.c.l.b16 %v1789
        %v2701 = vunpack.c.l.b16 %v1799
        %v2702 = vunpack.c.l.b16 %v1813
        %v2703 = vunpack.c.l.b16 %v1823
        %v2704 = vunpack.c.l.b16 %v1837
        %v2705 = vunpack.c.l.b16 %v1847
        %v2706 = vunpack.c.l.b16 %v1861
        %v2707 = vunpack.c.l.b16 %v1871
        %v2708 = vunpack.c.l.b16 %v1885
        %v2709 = vunpack.c.l.b16 %v1895
        %v2710 = vunpack.c.l.b16 %v1909
        %v2711 = vunpack.c.l.b16 %v1919
        %v2712 = vunpack.c.l.b16 %v1933
        %v2713 = vunpack.c.l.b16 %v1943
        %v2714 = vunpack.c.l.b16 %v1957
        %v2715 = vunpack.c.l.b16 %v1967
        %v2716 = vunpack.c.l.b16 %v1981
        %v2717 = vunpack.c.l.b16 %v1991
        %v2718 = vunpack.c.l.b16 %v2005
        %v2719 = vunpack.c.l.b16 %v2015
        %v2720 = vpack.c.b16 %v2689, %v2688
        %v2721 = vpack.c.b16 %v2691, %v2690
        %v2722 = vpack.c.b16 %v2693, %v2692
        %v2723 = vpack.c.b16 %v2695, %v2694
        %v2724 = vpack.c.b16 %v2697, %v2696
        %v2725 = vpack.c.b16 %v2699, %v2698
        %v2726 = vpack.c.b16 %v2701, %v2700
        %v2727 = vpack.c.b16 %v2703, %v2702
        %v2728 = vpack.c.b16 %v2705, %v2704
        %v2729 = vpack.c.b16 %v2707, %v2706
        %v2730 = vpack.c.b16 %v2709, %v2708
        %v2731 = vpack.c.b16 %v2711, %v2710
        %v2732 = vpack.c.b16 %v2713, %v2712
        %v2733 = vpack.c.b16 %v2715, %v2714
        %v2734 = vpack.c.b16 %v2717, %v2716
        %v2735 = vpack.c.b16 %v2719, %v2718
        %v2752 = vunpack.c.l.b16 %v2083
        %v2753 = vunpack.c.l.b16 %v2086
        %v2754 = vunpack.c.l.b16 %v2090
        %v2755 = vunpack.c.l.b16 %v2093
        %v2756 = vunpack.c.l.b16 %v2097
        %v2757 = vunpack.c.l.b16 %v2100
        %v2758 = vunpack.c.l.b16 %v2104
        %v2759 = vunpack.c.l.b16 %v2107
        %v2760 = vunpack.c.l.b16 %v2111
        %v2761 = vunpack.c.l.b16 %v2114
        %v2762 = vunpack.c.l.b16 %v2118
        %v2763 = vunpack.c.l.b16 %v2121
        %v2764 = vunpack.c.l.b16 %v2125
        %v2765 = vunpack.c.l.b16 %v2128
        %v2766 = vunpack.c.l.b16 %v2132
        %v2767 = vunpack.c.l.b16 %v2135
        %v2768 = vunpack.c.l.b16 %v2139
        %v2769 = vunpack.c.l.b16 %v2142
        %v2770 = vunpack.c.l.b16 %v2146
        %v2771 = vunpack.c.l.b16 %v2149
        %v2772 = vunpack.c.l.b16 %v2153
        %v2773 = vunpack.c.l.b16 %v2156
        %v2774 = vunpack.c.l.b16 %v2160
        %v2775 = vunpack.c.l.b16 %v2163
        %v2776 = vunpack.c.l.b16 %v2167
        %v2777 = vunpack.c.l.b16 %v2170
        %v2778 = vunpack.c.l.b16 %v2174
        %v2779 = vunpack.c.l.b16 %v2177
        %v2780 = vunpack.c.l.b16 %v2181
        %v2781 = vunpack.c.l.b16 %v2184
        %v2782 = vunpack.c.l.b16 %v2188
        %v2783 = vunpack.c.l.b16 %v2191
        %v2784 = vpack.c.b16 %v2753, %v2752
        %v2785 = vpack.c.b16 %v2755, %v2754
        %v2786 = vpack.c.b16 %v2757, %v2756
        %v2787 = vpack.c.b16 %v2759, %v2758
        %v2788 = vpack.c.b16 %v2761, %v2760
        %v2789 = vpack.c.b16 %v2763, %v2762
        %v2790 = vpack.c.b16 %v2765, %v2764
        %v2791 = vpack.c.b16 %v2767, %v2766
        %v2792 = vpack.c.b16 %v2769, %v2768
        %v2793 = vpack.c.b16 %v2771, %v2770
        %v2794 = vpack.c.b16 %v2773, %v2772
        %v2795 = vpack.c.b16 %v2775, %v2774
        %v2796 = vpack.c.b16 %v2777, %v2776
        %v2797 = vpack.c.b16 %v2779, %v2778
        %v2798 = vpack.c.b16 %v2781, %v2780
        %v2799 = vpack.c.b16 %v2783, %v2782
        %v2816 = vld [vmem:[%s2] sm:$0xf]
        %v2817 = vld [vmem:[%s2 + $0x4] sm:$0xf]
        %v2818 = vld [vmem:[%s2 + $0x8] sm:$0xf]
        %v2819 = vld [vmem:[%s2 + $0xc] sm:$0xf]
        %v2820 = vld [vmem:[%s2 + $0x10] sm:$0xf]
        %v2821 = vld [vmem:[%s2 + $0x14] sm:$0xf]
        %v2822 = vld [vmem:[%s2 + $0x18] sm:$0xf]
        %v2823 = vld [vmem:[%s2 + $0x1c] sm:$0xf]
        %v2824 = vld [vmem:[%s2 + $0x20] sm:$0xf]
        %v2825 = vld [vmem:[%s2 + $0x24] sm:$0xf]
        %v2826 = vld [vmem:[%s2 + $0x28] sm:$0xf]
        %v2827 = vld [vmem:[%s2 + $0x2c] sm:$0xf]
        %v2828 = vld [vmem:[%s2 + $0x30] sm:$0xf]
        %v2829 = vld [vmem:[%s2 + $0x34] sm:$0xf]
        %v2830 = vld [vmem:[%s2 + $0x38] sm:$0xf]
        %v2831 = vld [vmem:[%s2 + $0x3c] sm:$0xf]
        %v2832 = vld [vmem:[%s2 + $0x40] sm:$0xf]
        %v2833 = vld [vmem:[%s2 + $0x44] sm:$0xf]
        %v2834 = vld [vmem:[%s2 + $0x48] sm:$0xf]
        %v2835 = vld [vmem:[%s2 + $0x4c] sm:$0xf]
        %v2836 = vld [vmem:[%s2 + $0x50] sm:$0xf]
        %v2837 = vld [vmem:[%s2 + $0x54] sm:$0xf]
        %v2838 = vld [vmem:[%s2 + $0x58] sm:$0xf]
        %v2839 = vld [vmem:[%s2 + $0x5c] sm:$0xf]
        %v2840 = vld [vmem:[%s2 + $0x60] sm:$0xf]
        %v2841 = vld [vmem:[%s2 + $0x64] sm:$0xf]
        %v2842 = vld [vmem:[%s2 + $0x68] sm:$0xf]
        %v2843 = vld [vmem:[%s2 + $0x6c] sm:$0xf]
        %v2844 = vld [vmem:[%s2 + $0x70] sm:$0xf]
        %v2845 = vld [vmem:[%s2 + $0x74] sm:$0xf]
        %v2846 = vld [vmem:[%s2 + $0x78] sm:$0xf]
        %v2847 = vld [vmem:[%s2 + $0x7c] sm:$0xf]
        %v2848 = vld [vmem:[%s2 + $0x80] sm:$0xf]
        %v2849 = vld [vmem:[%s2 + $0x84] sm:$0xf]
        %v2850 = vld [vmem:[%s2 + $0x88] sm:$0xf]
        %v2851 = vld [vmem:[%s2 + $0x8c] sm:$0xf]
        %v2852 = vld [vmem:[%s2 + $0x90] sm:$0xf]
        %v2853 = vld [vmem:[%s2 + $0x94] sm:$0xf]
        %v2854 = vld [vmem:[%s2 + $0x98] sm:$0xf]
        %v2855 = vld [vmem:[%s2 + $0x9c] sm:$0xf]
        %v2856 = vld [vmem:[%s2 + $0xa0] sm:$0xf]
        %v2857 = vld [vmem:[%s2 + $0xa4] sm:$0xf]
        %v2858 = vld [vmem:[%s2 + $0xa8] sm:$0xf]
        %v2859 = vld [vmem:[%s2 + $0xac] sm:$0xf]
        %v2860 = vld [vmem:[%s2 + $0xb0] sm:$0xf]
        %v2861 = vld [vmem:[%s2 + $0xb4] sm:$0xf]
        %v2862 = vld [vmem:[%s2 + $0xb8] sm:$0xf]
        %v2863 = vld [vmem:[%s2 + $0xbc] sm:$0xf]
        %v2864 = vld [vmem:[%s2 + $0xc0] sm:$0xf]
        %v2865 = vld [vmem:[%s2 + $0xc4] sm:$0xf]
        %v2866 = vld [vmem:[%s2 + $0xc8] sm:$0xf]
        %v2867 = vld [vmem:[%s2 + $0xcc] sm:$0xf]
        %v2868 = vld [vmem:[%s2 + $0xd0] sm:$0xf]
        %v2869 = vld [vmem:[%s2 + $0xd4] sm:$0xf]
        %v2870 = vld [vmem:[%s2 + $0xd8] sm:$0xf]
        %v2871 = vld [vmem:[%s2 + $0xdc] sm:$0xf]
        %v2872 = vld [vmem:[%s2 + $0xe0] sm:$0xf]
        %v2873 = vld [vmem:[%s2 + $0xe4] sm:$0xf]
        %v2874 = vld [vmem:[%s2 + $0xe8] sm:$0xf]
        %v2875 = vld [vmem:[%s2 + $0xec] sm:$0xf]
        %v2876 = vld [vmem:[%s2 + $0xf0] sm:$0xf]
        %v2877 = vld [vmem:[%s2 + $0xf4] sm:$0xf]
        %v2878 = vld [vmem:[%s2 + $0xf8] sm:$0xf]
        %v2879 = vld [vmem:[%s2 + $0xfc] sm:$0xf]
        %v2880 = vld [vmem:[%s2 + $0x100] sm:$0xf]
        %v2881 = vld [vmem:[%s2 + $0x104] sm:$0xf]
        %v2882 = vld [vmem:[%s2 + $0x108] sm:$0xf]
        %v2883 = vld [vmem:[%s2 + $0x10c] sm:$0xf]
        %v2884 = vld [vmem:[%s2 + $0x110] sm:$0xf]
        %v2885 = vld [vmem:[%s2 + $0x114] sm:$0xf]
        %v2886 = vld [vmem:[%s2 + $0x118] sm:$0xf]
        %v2887 = vld [vmem:[%s2 + $0x11c] sm:$0xf]
        %v2888 = vld [vmem:[%s2 + $0x120] sm:$0xf]
        %v2889 = vld [vmem:[%s2 + $0x124] sm:$0xf]
        %v2890 = vld [vmem:[%s2 + $0x128] sm:$0xf]
        %v2891 = vld [vmem:[%s2 + $0x12c] sm:$0xf]
        %v2892 = vld [vmem:[%s2 + $0x130] sm:$0xf]
        %v2893 = vld [vmem:[%s2 + $0x134] sm:$0xf]
        %v2894 = vld [vmem:[%s2 + $0x138] sm:$0xf]
        %v2895 = vld [vmem:[%s2 + $0x13c] sm:$0xf]
        %v2896 = vld [vmem:[%s2 + $0x140] sm:$0xf]
        %v2897 = vld [vmem:[%s2 + $0x144] sm:$0xf]
        %v2898 = vld [vmem:[%s2 + $0x148] sm:$0xf]
        %v2899 = vld [vmem:[%s2 + $0x14c] sm:$0xf]
        %v2900 = vld [vmem:[%s2 + $0x150] sm:$0xf]
        %v2901 = vld [vmem:[%s2 + $0x154] sm:$0xf]
        %v2902 = vld [vmem:[%s2 + $0x158] sm:$0xf]
        %v2903 = vld [vmem:[%s2 + $0x15c] sm:$0xf]
        %v2904 = vld [vmem:[%s2 + $0x160] sm:$0xf]
        %v2905 = vld [vmem:[%s2 + $0x164] sm:$0xf]
        %v2906 = vld [vmem:[%s2 + $0x168] sm:$0xf]
        %v2907 = vld [vmem:[%s2 + $0x16c] sm:$0xf]
        %v2908 = vld [vmem:[%s2 + $0x170] sm:$0xf]
        %v2909 = vld [vmem:[%s2 + $0x174] sm:$0xf]
        %v2910 = vld [vmem:[%s2 + $0x178] sm:$0xf]
        %v2911 = vld [vmem:[%s2 + $0x17c] sm:$0xf]
        %v2912 = vld [vmem:[%s2 + $0x180] sm:$0xf]
        %v2913 = vld [vmem:[%s2 + $0x184] sm:$0xf]
        %v2914 = vld [vmem:[%s2 + $0x188] sm:$0xf]
        %v2915 = vld [vmem:[%s2 + $0x18c] sm:$0xf]
        %v2916 = vld [vmem:[%s2 + $0x190] sm:$0xf]
        %v2917 = vld [vmem:[%s2 + $0x194] sm:$0xf]
        %v2918 = vld [vmem:[%s2 + $0x198] sm:$0xf]
        %v2919 = vld [vmem:[%s2 + $0x19c] sm:$0xf]
        %v2920 = vld [vmem:[%s2 + $0x1a0] sm:$0xf]
        %v2921 = vld [vmem:[%s2 + $0x1a4] sm:$0xf]
        %v2922 = vld [vmem:[%s2 + $0x1a8] sm:$0xf]
        %v2923 = vld [vmem:[%s2 + $0x1ac] sm:$0xf]
        %v2924 = vld [vmem:[%s2 + $0x1b0] sm:$0xf]
        %v2925 = vld [vmem:[%s2 + $0x1b4] sm:$0xf]
        %v2926 = vld [vmem:[%s2 + $0x1b8] sm:$0xf]
        %v2927 = vld [vmem:[%s2 + $0x1bc] sm:$0xf]
        %v2928 = vld [vmem:[%s2 + $0x1c0] sm:$0xf]
        %v2929 = vld [vmem:[%s2 + $0x1c4] sm:$0xf]
        %v2930 = vld [vmem:[%s2 + $0x1c8] sm:$0xf]
        %v2931 = vld [vmem:[%s2 + $0x1cc] sm:$0xf]
        %v2932 = vld [vmem:[%s2 + $0x1d0] sm:$0xf]
        %v2933 = vld [vmem:[%s2 + $0x1d4] sm:$0xf]
        %v2934 = vld [vmem:[%s2 + $0x1d8] sm:$0xf]
        %v2935 = vld [vmem:[%s2 + $0x1dc] sm:$0xf]
        %v2936 = vld [vmem:[%s2 + $0x1e0] sm:$0xf]
        %v2937 = vld [vmem:[%s2 + $0x1e4] sm:$0xf]
        %v2938 = vld [vmem:[%s2 + $0x1e8] sm:$0xf]
        %v2939 = vld [vmem:[%s2 + $0x1ec] sm:$0xf]
        %v2940 = vld [vmem:[%s2 + $0x1f0] sm:$0xf]
        %v2941 = vld [vmem:[%s2 + $0x1f4] sm:$0xf]
        %v2942 = vld [vmem:[%s2 + $0x1f8] sm:$0xf]
        %v2943 = vld [vmem:[%s2 + $0x1fc] sm:$0xf]
        %v2944 = vld [vmem:[%s2 + $0x200] sm:$0xf]
        %v2945 = vld [vmem:[%s2 + $0x204] sm:$0xf]
        %v2946 = vld [vmem:[%s2 + $0x208] sm:$0xf]
        %v2947 = vld [vmem:[%s2 + $0x20c] sm:$0xf]
        %v2948 = vld [vmem:[%s2 + $0x210] sm:$0xf]
        %v2949 = vld [vmem:[%s2 + $0x214] sm:$0xf]
        %v2950 = vld [vmem:[%s2 + $0x218] sm:$0xf]
        %v2951 = vld [vmem:[%s2 + $0x21c] sm:$0xf]
        %v2952 = vld [vmem:[%s2 + $0x220] sm:$0xf]
        %v2953 = vld [vmem:[%s2 + $0x224] sm:$0xf]
        %v2954 = vld [vmem:[%s2 + $0x228] sm:$0xf]
        %v2955 = vld [vmem:[%s2 + $0x22c] sm:$0xf]
        %v2956 = vld [vmem:[%s2 + $0x230] sm:$0xf]
        %v2957 = vld [vmem:[%s2 + $0x234] sm:$0xf]
        %v2958 = vld [vmem:[%s2 + $0x238] sm:$0xf]
        %v2959 = vld [vmem:[%s2 + $0x23c] sm:$0xf]
        %v3104 = vunpack.c.l.b16 %v2816
        %v3105 = vunpack.c.l.b16 %v2817
        %v3106 = vunpack.c.l.b16 %v2818
        %v3107 = vunpack.c.l.b16 %v2819
        %v3108 = vunpack.c.l.b16 %v2820
        %v3109 = vunpack.c.l.b16 %v2821
        %v3110 = vunpack.c.l.b16 %v2822
        %v3111 = vunpack.c.l.b16 %v2823
        %v3112 = vunpack.c.l.b16 %v2824
        %v3113 = vunpack.c.l.b16 %v2825
        %v3114 = vunpack.c.l.b16 %v2826
        %v3115 = vunpack.c.l.b16 %v2827
        %v3116 = vunpack.c.l.b16 %v2828
        %v3117 = vunpack.c.l.b16 %v2829
        %v3118 = vunpack.c.l.b16 %v2830
        %v3119 = vunpack.c.l.b16 %v2831
        %v3120 = vunpack.c.l.b16 %v2832
        %v3121 = vunpack.c.l.b16 %v2833
        %v3122 = vunpack.c.l.b16 %v2834
        %v3123 = vunpack.c.l.b16 %v2835
        %v3124 = vunpack.c.l.b16 %v2836
        %v3125 = vunpack.c.l.b16 %v2837
        %v3126 = vunpack.c.l.b16 %v2838
        %v3127 = vunpack.c.l.b16 %v2839
        %v3128 = vunpack.c.l.b16 %v2840
        %v3129 = vunpack.c.l.b16 %v2841
        %v3130 = vunpack.c.l.b16 %v2842
        %v3131 = vunpack.c.l.b16 %v2843
        %v3132 = vunpack.c.l.b16 %v2844
        %v3133 = vunpack.c.l.b16 %v2845
        %v3134 = vunpack.c.l.b16 %v2846
        %v3135 = vunpack.c.l.b16 %v2847
        %v3136 = vunpack.c.l.b16 %v2848
        %v3137 = vunpack.c.l.b16 %v2849
        %v3138 = vunpack.c.l.b16 %v2850
        %v3139 = vunpack.c.l.b16 %v2851
        %v3140 = vunpack.c.l.b16 %v2852
        %v3141 = vunpack.c.l.b16 %v2853
        %v3142 = vunpack.c.l.b16 %v2854
        %v3143 = vunpack.c.l.b16 %v2855
        %v3144 = vunpack.c.l.b16 %v2856
        %v3145 = vunpack.c.l.b16 %v2857
        %v3146 = vunpack.c.l.b16 %v2858
        %v3147 = vunpack.c.l.b16 %v2859
        %v3148 = vunpack.c.l.b16 %v2860
        %v3149 = vunpack.c.l.b16 %v2861
        %v3150 = vunpack.c.l.b16 %v2862
        %v3151 = vunpack.c.l.b16 %v2863
        %v3152 = vunpack.c.l.b16 %v2864
        %v3153 = vunpack.c.l.b16 %v2865
        %v3154 = vunpack.c.l.b16 %v2866
        %v3155 = vunpack.c.l.b16 %v2867
        %v3156 = vunpack.c.l.b16 %v2868
        %v3157 = vunpack.c.l.b16 %v2869
        %v3158 = vunpack.c.l.b16 %v2870
        %v3159 = vunpack.c.l.b16 %v2871
        %v3160 = vunpack.c.l.b16 %v2872
        %v3161 = vunpack.c.l.b16 %v2873
        %v3162 = vunpack.c.l.b16 %v2874
        %v3163 = vunpack.c.l.b16 %v2875
        %v3164 = vunpack.c.l.b16 %v2876
        %v3165 = vunpack.c.l.b16 %v2877
        %v3166 = vunpack.c.l.b16 %v2878
        %v3167 = vunpack.c.l.b16 %v2879
        %v3168 = vunpack.c.l.b16 %v2880
        %v3169 = vunpack.c.l.b16 %v2881
        %v3170 = vunpack.c.l.b16 %v2882
        %v3171 = vunpack.c.l.b16 %v2883
        %v3172 = vunpack.c.l.b16 %v2884
        %v3173 = vunpack.c.l.b16 %v2885
        %v3174 = vunpack.c.l.b16 %v2886
        %v3175 = vunpack.c.l.b16 %v2887
        %v3176 = vunpack.c.l.b16 %v2888
        %v3177 = vunpack.c.l.b16 %v2889
        %v3178 = vunpack.c.l.b16 %v2890
        %v3179 = vunpack.c.l.b16 %v2891
        %v3180 = vunpack.c.l.b16 %v2892
        %v3181 = vunpack.c.l.b16 %v2893
        %v3182 = vunpack.c.l.b16 %v2894
        %v3183 = vunpack.c.l.b16 %v2895
        %v3184 = vunpack.c.l.b16 %v2896
        %v3185 = vunpack.c.l.b16 %v2897
        %v3186 = vunpack.c.l.b16 %v2898
        %v3187 = vunpack.c.l.b16 %v2899
        %v3188 = vunpack.c.l.b16 %v2900
        %v3189 = vunpack.c.l.b16 %v2901
        %v3190 = vunpack.c.l.b16 %v2902
        %v3191 = vunpack.c.l.b16 %v2903
        %v3192 = vunpack.c.l.b16 %v2904
        %v3193 = vunpack.c.l.b16 %v2905
        %v3194 = vunpack.c.l.b16 %v2906
        %v3195 = vunpack.c.l.b16 %v2907
        %v3196 = vunpack.c.l.b16 %v2908
        %v3197 = vunpack.c.l.b16 %v2909
        %v3198 = vunpack.c.l.b16 %v2910
        %v3199 = vunpack.c.l.b16 %v2911
        %v3200 = vunpack.c.l.b16 %v2912
        %v3201 = vunpack.c.l.b16 %v2913
        %v3202 = vunpack.c.l.b16 %v2914
        %v3203 = vunpack.c.l.b16 %v2915
        %v3204 = vunpack.c.l.b16 %v2916
        %v3205 = vunpack.c.l.b16 %v2917
        %v3206 = vunpack.c.l.b16 %v2918
        %v3207 = vunpack.c.l.b16 %v2919
        %v3208 = vunpack.c.l.b16 %v2920
        %v3209 = vunpack.c.l.b16 %v2921
        %v3210 = vunpack.c.l.b16 %v2922
        %v3211 = vunpack.c.l.b16 %v2923
        %v3212 = vunpack.c.l.b16 %v2924
        %v3213 = vunpack.c.l.b16 %v2925
        %v3214 = vunpack.c.l.b16 %v2926
        %v3215 = vunpack.c.l.b16 %v2927
        %v3216 = vunpack.c.l.b16 %v2928
        %v3217 = vunpack.c.l.b16 %v2929
        %v3218 = vunpack.c.l.b16 %v2930
        %v3219 = vunpack.c.l.b16 %v2931
        %v3220 = vunpack.c.l.b16 %v2932
        %v3221 = vunpack.c.l.b16 %v2933
        %v3222 = vunpack.c.l.b16 %v2934
        %v3223 = vunpack.c.l.b16 %v2935
        %v3224 = vunpack.c.l.b16 %v2936
        %v3225 = vunpack.c.l.b16 %v2937
        %v3226 = vunpack.c.l.b16 %v2938
        %v3227 = vunpack.c.l.b16 %v2939
        %v3228 = vunpack.c.l.b16 %v2940
        %v3229 = vunpack.c.l.b16 %v2941
        %v3230 = vunpack.c.l.b16 %v2942
        %v3231 = vunpack.c.l.b16 %v2943
        %v3232 = vunpack.c.l.b16 %v2944
        %v3233 = vunpack.c.l.b16 %v2945
        %v3234 = vunpack.c.l.b16 %v2946
        %v3235 = vunpack.c.l.b16 %v2947
        %v3236 = vunpack.c.l.b16 %v2948
        %v3237 = vunpack.c.l.b16 %v2949
        %v3238 = vunpack.c.l.b16 %v2950
        %v3239 = vunpack.c.l.b16 %v2951
        %v3240 = vunpack.c.l.b16 %v2952
        %v3241 = vunpack.c.l.b16 %v2953
        %v3242 = vunpack.c.l.b16 %v2954
        %v3243 = vunpack.c.l.b16 %v2955
        %v3244 = vunpack.c.l.b16 %v2956
        %v3245 = vunpack.c.l.b16 %v2957
        %v3246 = vunpack.c.l.b16 %v2958
        %v3247 = vunpack.c.l.b16 %v2959
        %v3248 = vpack.c.b16 %v3105, %v3104
        %v3249 = vpack.c.b16 %v3107, %v3106
        %v3250 = vpack.c.b16 %v3109, %v3108
        %v3251 = vpack.c.b16 %v3111, %v3110
        %v3252 = vpack.c.b16 %v3113, %v3112
        %v3253 = vpack.c.b16 %v3115, %v3114
        %v3254 = vpack.c.b16 %v3117, %v3116
        %v3255 = vpack.c.b16 %v3119, %v3118
        %v3256 = vpack.c.b16 %v3121, %v3120
        %v3257 = vpack.c.b16 %v3123, %v3122
        %v3258 = vpack.c.b16 %v3125, %v3124
        %v3259 = vpack.c.b16 %v3127, %v3126
        %v3260 = vpack.c.b16 %v3129, %v3128
        %v3261 = vpack.c.b16 %v3131, %v3130
        %v3262 = vpack.c.b16 %v3133, %v3132
        %v3263 = vpack.c.b16 %v3135, %v3134
        %v3264 = vpack.c.b16 %v3137, %v3136
        %v3265 = vpack.c.b16 %v3139, %v3138
        %v3266 = vpack.c.b16 %v3141, %v3140
        %v3267 = vpack.c.b16 %v3143, %v3142
        %v3268 = vpack.c.b16 %v3145, %v3144
        %v3269 = vpack.c.b16 %v3147, %v3146
        %v3270 = vpack.c.b16 %v3149, %v3148
        %v3271 = vpack.c.b16 %v3151, %v3150
        %v3272 = vpack.c.b16 %v3153, %v3152
        %v3273 = vpack.c.b16 %v3155, %v3154
        %v3274 = vpack.c.b16 %v3157, %v3156
        %v3275 = vpack.c.b16 %v3159, %v3158
        %v3276 = vpack.c.b16 %v3161, %v3160
        %v3277 = vpack.c.b16 %v3163, %v3162
        %v3278 = vpack.c.b16 %v3165, %v3164
        %v3279 = vpack.c.b16 %v3167, %v3166
        %v3280 = vpack.c.b16 %v3169, %v3168
        %v3281 = vpack.c.b16 %v3171, %v3170
        %v3282 = vpack.c.b16 %v3173, %v3172
        %v3283 = vpack.c.b16 %v3175, %v3174
        %v3284 = vpack.c.b16 %v3177, %v3176
        %v3285 = vpack.c.b16 %v3179, %v3178
        %v3286 = vpack.c.b16 %v3181, %v3180
        %v3287 = vpack.c.b16 %v3183, %v3182
        %v3288 = vpack.c.b16 %v3185, %v3184
        %v3289 = vpack.c.b16 %v3187, %v3186
        %v3290 = vpack.c.b16 %v3189, %v3188
        %v3291 = vpack.c.b16 %v3191, %v3190
        %v3292 = vpack.c.b16 %v3193, %v3192
        %v3293 = vpack.c.b16 %v3195, %v3194
        %v3294 = vpack.c.b16 %v3197, %v3196
        %v3295 = vpack.c.b16 %v3199, %v3198
        %v3296 = vpack.c.b16 %v3201, %v3200
        %v3297 = vpack.c.b16 %v3203, %v3202
        %v3298 = vpack.c.b16 %v3205, %v3204
        %v3299 = vpack.c.b16 %v3207, %v3206
        %v3300 = vpack.c.b16 %v3209, %v3208
        %v3301 = vpack.c.b16 %v3211, %v3210
        %v3302 = vpack.c.b16 %v3213, %v3212
        %v3303 = vpack.c.b16 %v3215, %v3214
        %v3304 = vpack.c.b16 %v3217, %v3216
        %v3305 = vpack.c.b16 %v3219, %v3218
        %v3306 = vpack.c.b16 %v3221, %v3220
        %v3307 = vpack.c.b16 %v3223, %v3222
        %v3308 = vpack.c.b16 %v3225, %v3224
        %v3309 = vpack.c.b16 %v3227, %v3226
        %v3310 = vpack.c.b16 %v3229, %v3228
        %v3311 = vpack.c.b16 %v3231, %v3230
        %v3312 = vpack.c.b16 %v3233, %v3232
        %v3313 = vpack.c.b16 %v3235, %v3234
        %v3314 = vpack.c.b16 %v3237, %v3236
        %v3315 = vpack.c.b16 %v3239, %v3238
        %v3316 = vpack.c.b16 %v3241, %v3240
        %v3317 = vpack.c.b16 %v3243, %v3242
        %v3318 = vpack.c.b16 %v3245, %v3244
        %v3319 = vpack.c.b16 %v3247, %v3246
        %3392 = vmatprep.subr.bf16.mxu0 0
        %3393 = vmatpush1.bf16.msra.mxu0 %v3255
        %3394 = vmatprep.subr.bf16.mxu0 0
        %3395 = vmatpush1.bf16.msra.mxu0 %v3254
        %3396 = vmatprep.subr.bf16.mxu0 0
        %3397 = vmatpush1.bf16.msra.mxu0 %v3253
        %3398 = vmatprep.subr.bf16.mxu0 0
        %3399 = vmatpush1.bf16.msra.mxu0 %v3252
        %3400 = vmatprep.subr.bf16.mxu0 0
        %3401 = vmatpush1.bf16.msra.mxu0 %v3251
        %3402 = vmatprep.subr.bf16.mxu0 0
        %3403 = vmatpush1.bf16.msra.mxu0 %v3250
        %3404 = vmatprep.subr.bf16.mxu0 0
        %3405 = vmatpush1.bf16.msra.mxu0 %v3249
        %3406 = vmatprep.subr.bf16.mxu0 0
        %3407 = vmatpush1.bf16.msra.mxu0 %v3248
        %3408 = vmatprep.subr.bf16.mxu0 0
        %3409 = vmatpush2.bf16.msra.mxu0 %v3263
        %3410 = vmatprep.subr.bf16.mxu0 0
        %3411 = vmatpush2.bf16.msra.mxu0 %v3262
        %3412 = vmatprep.subr.bf16.mxu0 0
        %3413 = vmatpush2.bf16.msra.mxu0 %v3261
        %3414 = vmatprep.subr.bf16.mxu0 0
        %3415 = vmatpush2.bf16.msra.mxu0 %v3260
        %3416 = vmatprep.subr.bf16.mxu0 0
        %3417 = vmatpush2.bf16.msra.mxu0 %v3259
        %3418 = vmatprep.subr.bf16.mxu0 0
        %3419 = vmatpush2.bf16.msra.mxu0 %v3258
        %3420 = vmatprep.subr.bf16.mxu0 0
        %3421 = vmatpush2.bf16.msra.mxu0 %v3257
        %3422 = vmatprep.subr.bf16.mxu0 0
        %3423 = vmatpush2.bf16.msra.mxu0 %v3256
        %3424 = vmatprep.mubr.bf16.mxu0 %v2304
        %3425 = vmatmul.mubr.bf16.gmra.mxu0 %v2240
        %v3426 = vpop.f32.mrf.mxu0
        %v3427 = vadd.f32 0.0, %v3426
        %v3428 = vpop.f32.mrf.mxu0
        %v3429 = vpop.f32.mrf.mxu0
        %v3430 = vadd.f32 0.0, %v3429
        %v3431 = vpop.f32.mrf.mxu0
        %3432 = vmatprep.mubr.bf16.mxu0 %v2305
        %3433 = vmatmul.mubr.bf16.gmra.mxu0 %v2241
        %v3434 = vpop.f32.mrf.mxu0
        %v3435 = vadd.f32 0.0, %v3434
        %v3436 = vpop.f32.mrf.mxu0
        %v3437 = vpop.f32.mrf.mxu0
        %v3438 = vadd.f32 0.0, %v3437
        %v3439 = vpop.f32.mrf.mxu0
        %3440 = vmatprep.mubr.bf16.mxu0 %v2306
        %3441 = vmatmul.mubr.bf16.gmra.mxu0 %v2242
        %v3442 = vpop.f32.mrf.mxu0
        %v3443 = vadd.f32 0.0, %v3442
        %v3444 = vpop.f32.mrf.mxu0
        %v3445 = vpop.f32.mrf.mxu0
        %v3446 = vadd.f32 0.0, %v3445
        %v3447 = vpop.f32.mrf.mxu0
        %3448 = vmatprep.mubr.bf16.mxu0 %v2307
        %3449 = vmatmul.mubr.bf16.gmra.mxu0 %v2243
        %v3450 = vpop.f32.mrf.mxu0
        %v3451 = vadd.f32 0.0, %v3450
        %v3452 = vpop.f32.mrf.mxu0
        %v3453 = vpop.f32.mrf.mxu0
        %v3454 = vadd.f32 0.0, %v3453
        %v3455 = vpop.f32.mrf.mxu0
        %3456 = vmatprep.mubr.bf16.mxu0 %v2308
        %3457 = vmatmul.mubr.bf16.gmra.mxu0 %v2244
        %v3458 = vpop.f32.mrf.mxu0
        %v3459 = vadd.f32 0.0, %v3458
        %v3460 = vpop.f32.mrf.mxu0
        %v3461 = vpop.f32.mrf.mxu0
        %v3462 = vadd.f32 0.0, %v3461
        %v3463 = vpop.f32.mrf.mxu0
        %3464 = vmatprep.mubr.bf16.mxu0 %v2309
        %3465 = vmatmul.mubr.bf16.gmra.mxu0 %v2245
        %v3466 = vpop.f32.mrf.mxu0
        %v3467 = vadd.f32 0.0, %v3466
        %v3468 = vpop.f32.mrf.mxu0
        %v3469 = vpop.f32.mrf.mxu0
        %v3470 = vadd.f32 0.0, %v3469
        %v3471 = vpop.f32.mrf.mxu0
        %3472 = vmatprep.mubr.bf16.mxu0 %v2310
        %3473 = vmatmul.mubr.bf16.gmra.mxu0 %v2246
        %v3474 = vpop.f32.mrf.mxu0
        %v3475 = vadd.f32 0.0, %v3474
        %v3476 = vpop.f32.mrf.mxu0
        %v3477 = vpop.f32.mrf.mxu0
        %v3478 = vadd.f32 0.0, %v3477
        %v3479 = vpop.f32.mrf.mxu0
        %3480 = vmatprep.mubr.bf16.mxu0 %v2311
        %3481 = vmatmul.mubr.bf16.gmra.mxu0 %v2247
        %v3482 = vpop.f32.mrf.mxu0
        %v3483 = vadd.f32 0.0, %v3482
        %v3484 = vpop.f32.mrf.mxu0
        %v3485 = vpop.f32.mrf.mxu0
        %v3486 = vadd.f32 0.0, %v3485
        %v3487 = vpop.f32.mrf.mxu0
        %3488 = vmatprep.mubr.bf16.mxu0 %v2312
        %3489 = vmatmul.mubr.bf16.gmra.mxu0 %v2248
        %v3490 = vpop.f32.mrf.mxu0
        %v3491 = vadd.f32 0.0, %v3490
        %v3492 = vpop.f32.mrf.mxu0
        %v3493 = vpop.f32.mrf.mxu0
        %v3494 = vadd.f32 0.0, %v3493
        %v3495 = vpop.f32.mrf.mxu0
        %3496 = vmatprep.mubr.bf16.mxu0 %v2313
        %3497 = vmatmul.mubr.bf16.gmra.mxu0 %v2249
        %v3498 = vpop.f32.mrf.mxu0
        %v3499 = vadd.f32 0.0, %v3498
        %v3500 = vpop.f32.mrf.mxu0
        %v3501 = vpop.f32.mrf.mxu0
        %v3502 = vadd.f32 0.0, %v3501
        %v3503 = vpop.f32.mrf.mxu0
        %3504 = vmatprep.mubr.bf16.mxu0 %v2314
        %3505 = vmatmul.mubr.bf16.gmra.mxu0 %v2250
        %v3506 = vpop.f32.mrf.mxu0
        %v3507 = vadd.f32 0.0, %v3506
        %v3508 = vpop.f32.mrf.mxu0
        %v3509 = vpop.f32.mrf.mxu0
        %v3510 = vadd.f32 0.0, %v3509
        %v3511 = vpop.f32.mrf.mxu0
        %3512 = vmatprep.mubr.bf16.mxu0 %v2315
        %3513 = vmatmul.mubr.bf16.gmra.mxu0 %v2251
        %v3514 = vpop.f32.mrf.mxu0
        %v3515 = vadd.f32 0.0, %v3514
        %v3516 = vpop.f32.mrf.mxu0
        %v3517 = vpop.f32.mrf.mxu0
        %v3518 = vadd.f32 0.0, %v3517
        %v3519 = vpop.f32.mrf.mxu0
        %3520 = vmatprep.mubr.bf16.mxu0 %v2316
        %3521 = vmatmul.mubr.bf16.gmra.mxu0 %v2252
        %v3522 = vpop.f32.mrf.mxu0
        %v3523 = vadd.f32 0.0, %v3522
        %v3524 = vpop.f32.mrf.mxu0
        %v3525 = vpop.f32.mrf.mxu0
        %v3526 = vadd.f32 0.0, %v3525
        %v3527 = vpop.f32.mrf.mxu0
        %3528 = vmatprep.mubr.bf16.mxu0 %v2317
        %3529 = vmatmul.mubr.bf16.gmra.mxu0 %v2253
        %v3530 = vpop.f32.mrf.mxu0
        %v3531 = vadd.f32 0.0, %v3530
        %v3532 = vpop.f32.mrf.mxu0
        %v3533 = vpop.f32.mrf.mxu0
        %v3534 = vadd.f32 0.0, %v3533
        %v3535 = vpop.f32.mrf.mxu0
        %3536 = vmatprep.mubr.bf16.mxu0 %v2318
        %3537 = vmatmul.mubr.bf16.gmra.mxu0 %v2254
        %v3538 = vpop.f32.mrf.mxu0
        %v3539 = vadd.f32 0.0, %v3538
        %v3540 = vpop.f32.mrf.mxu0
        %v3541 = vpop.f32.mrf.mxu0
        %v3542 = vadd.f32 0.0, %v3541
        %v3543 = vpop.f32.mrf.mxu0
        %3544 = vmatprep.mubr.bf16.mxu0 %v2319
        %3545 = vmatmul.mubr.bf16.gmra.mxu0 %v2255
        %v3546 = vpop.f32.mrf.mxu0
        %v3547 = vadd.f32 0.0, %v3546
        %v3548 = vpop.f32.mrf.mxu0
        %v3549 = vpop.f32.mrf.mxu0
        %v3550 = vadd.f32 0.0, %v3549
        %v3551 = vpop.f32.mrf.mxu0
        %3552 = vdwg.mxu0
        %3553 = vmatprep.subr.bf16.mxu0 0
        %3554 = vmatpush1.bf16.msra.mxu0 %v3271
        %3555 = vmatprep.subr.bf16.mxu0 0
        %3556 = vmatpush1.bf16.msra.mxu0 %v3270
        %3557 = vmatprep.subr.bf16.mxu0 0
        %3558 = vmatpush1.bf16.msra.mxu0 %v3269
        %3559 = vmatprep.subr.bf16.mxu0 0
        %3560 = vmatpush1.bf16.msra.mxu0 %v3268
        %3561 = vmatprep.subr.bf16.mxu0 0
        %3562 = vmatpush1.bf16.msra.mxu0 %v3267
        %3563 = vmatprep.subr.bf16.mxu0 0
        %3564 = vmatpush1.bf16.msra.mxu0 %v3266
        %3565 = vmatprep.subr.bf16.mxu0 0
        %3566 = vmatpush1.bf16.msra.mxu0 %v3265
        %3567 = vmatprep.subr.bf16.mxu0 0
        %3568 = vmatpush1.bf16.msra.mxu0 %v3264
        %3569 = vmatprep.subr.bf16.mxu0 0
        %3570 = vmatpush2.bf16.msra.mxu0 %v3279
        %3571 = vmatprep.subr.bf16.mxu0 0
        %3572 = vmatpush2.bf16.msra.mxu0 %v3278
        %3573 = vmatprep.subr.bf16.mxu0 0
        %3574 = vmatpush2.bf16.msra.mxu0 %v3277
        %3575 = vmatprep.subr.bf16.mxu0 0
        %3576 = vmatpush2.bf16.msra.mxu0 %v3276
        %3577 = vmatprep.subr.bf16.mxu0 0
        %3578 = vmatpush2.bf16.msra.mxu0 %v3275
        %3579 = vmatprep.subr.bf16.mxu0 0
        %3580 = vmatpush2.bf16.msra.mxu0 %v3274
        %3581 = vmatprep.subr.bf16.mxu0 0
        %3582 = vmatpush2.bf16.msra.mxu0 %v3273
        %3583 = vmatprep.subr.bf16.mxu0 0
        %3584 = vmatpush2.bf16.msra.mxu0 %v3272
        %3585 = vmatprep.mubr.bf16.mxu0 %v2448
        %3586 = vmatmul.mubr.bf16.gmra.mxu0 %v2368
        %v3587 = vpop.f32.mrf.mxu0
        %v3588 = vadd.f32 %v3427, %v3587
        %v3589 = vpop.f32.mrf.mxu0
        %v3590 = vpop.f32.mrf.mxu0
        %v3591 = vadd.f32 %v3430, %v3590
        %v3592 = vpop.f32.mrf.mxu0
        %3593 = vmatprep.mubr.bf16.mxu0 %v2449
        %3594 = vmatmul.mubr.bf16.gmra.mxu0 %v2369
        %v3595 = vpop.f32.mrf.mxu0
        %v3596 = vadd.f32 %v3435, %v3595
        %v3597 = vpop.f32.mrf.mxu0
        %v3598 = vpop.f32.mrf.mxu0
        %v3599 = vadd.f32 %v3438, %v3598
        %v3600 = vpop.f32.mrf.mxu0
        %3601 = vmatprep.mubr.bf16.mxu0 %v2450
        %3602 = vmatmul.mubr.bf16.gmra.mxu0 %v2370
        %v3603 = vpop.f32.mrf.mxu0
        %v3604 = vadd.f32 %v3443, %v3603
        %v3605 = vpop.f32.mrf.mxu0
        %v3606 = vpop.f32.mrf.mxu0
        %v3607 = vadd.f32 %v3446, %v3606
        %v3608 = vpop.f32.mrf.mxu0
        %3609 = vmatprep.mubr.bf16.mxu0 %v2451
        %3610 = vmatmul.mubr.bf16.gmra.mxu0 %v2371
        %v3611 = vpop.f32.mrf.mxu0
        %v3612 = vadd.f32 %v3451, %v3611
        %v3613 = vpop.f32.mrf.mxu0
        %v3614 = vpop.f32.mrf.mxu0
        %v3615 = vadd.f32 %v3454, %v3614
        %v3616 = vpop.f32.mrf.mxu0
        %3617 = vmatprep.mubr.bf16.mxu0 %v2452
        %3618 = vmatmul.mubr.bf16.gmra.mxu0 %v2372
        %v3619 = vpop.f32.mrf.mxu0
        %v3620 = vadd.f32 %v3459, %v3619
        %v3621 = vpop.f32.mrf.mxu0
        %v3622 = vpop.f32.mrf.mxu0
        %v3623 = vadd.f32 %v3462, %v3622
        %v3624 = vpop.f32.mrf.mxu0
        %3625 = vmatprep.mubr.bf16.mxu0 %v2453
        %3626 = vmatmul.mubr.bf16.gmra.mxu0 %v2373
        %v3627 = vpop.f32.mrf.mxu0
        %v3628 = vadd.f32 %v3467, %v3627
        %v3629 = vpop.f32.mrf.mxu0
        %v3630 = vpop.f32.mrf.mxu0
        %v3631 = vadd.f32 %v3470, %v3630
        %v3632 = vpop.f32.mrf.mxu0
        %3633 = vmatprep.mubr.bf16.mxu0 %v2454
        %3634 = vmatmul.mubr.bf16.gmra.mxu0 %v2374
        %v3635 = vpop.f32.mrf.mxu0
        %v3636 = vadd.f32 %v3475, %v3635
        %v3637 = vpop.f32.mrf.mxu0
        %v3638 = vpop.f32.mrf.mxu0
        %v3639 = vadd.f32 %v3478, %v3638
        %v3640 = vpop.f32.mrf.mxu0
        %3641 = vmatprep.mubr.bf16.mxu0 %v2455
        %3642 = vmatmul.mubr.bf16.gmra.mxu0 %v2375
        %v3643 = vpop.f32.mrf.mxu0
        %v3644 = vadd.f32 %v3483, %v3643
        %v3645 = vpop.f32.mrf.mxu0
        %v3646 = vpop.f32.mrf.mxu0
        %v3647 = vadd.f32 %v3486, %v3646
        %v3648 = vpop.f32.mrf.mxu0
        %3649 = vmatprep.mubr.bf16.mxu0 %v2456
        %3650 = vmatmul.mubr.bf16.gmra.mxu0 %v2376
        %v3651 = vpop.f32.mrf.mxu0
        %v3652 = vadd.f32 %v3491, %v3651
        %v3653 = vpop.f32.mrf.mxu0
        %v3654 = vpop.f32.mrf.mxu0
        %v3655 = vadd.f32 %v3494, %v3654
        %v3656 = vpop.f32.mrf.mxu0
        %3657 = vmatprep.mubr.bf16.mxu0 %v2457
        %3658 = vmatmul.mubr.bf16.gmra.mxu0 %v2377
        %v3659 = vpop.f32.mrf.mxu0
        %v3660 = vadd.f32 %v3499, %v3659
        %v3661 = vpop.f32.mrf.mxu0
        %v3662 = vpop.f32.mrf.mxu0
        %v3663 = vadd.f32 %v3502, %v3662
        %v3664 = vpop.f32.mrf.mxu0
        %3665 = vmatprep.mubr.bf16.mxu0 %v2458
        %3666 = vmatmul.mubr.bf16.gmra.mxu0 %v2378
        %v3667 = vpop.f32.mrf.mxu0
        %v3668 = vadd.f32 %v3507, %v3667
        %v3669 = vpop.f32.mrf.mxu0
        %v3670 = vpop.f32.mrf.mxu0
        %v3671 = vadd.f32 %v3510, %v3670
        %v3672 = vpop.f32.mrf.mxu0
        %3673 = vmatprep.mubr.bf16.mxu0 %v2459
        %3674 = vmatmul.mubr.bf16.gmra.mxu0 %v2379
        %v3675 = vpop.f32.mrf.mxu0
        %v3676 = vadd.f32 %v3515, %v3675
        %v3677 = vpop.f32.mrf.mxu0
        %v3678 = vpop.f32.mrf.mxu0
        %v3679 = vadd.f32 %v3518, %v3678
        %v3680 = vpop.f32.mrf.mxu0
        %3681 = vmatprep.mubr.bf16.mxu0 %v2460
        %3682 = vmatmul.mubr.bf16.gmra.mxu0 %v2380
        %v3683 = vpop.f32.mrf.mxu0
        %v3684 = vadd.f32 %v3523, %v3683
        %v3685 = vpop.f32.mrf.mxu0
        %v3686 = vpop.f32.mrf.mxu0
        %v3687 = vadd.f32 %v3526, %v3686
        %v3688 = vpop.f32.mrf.mxu0
        %3689 = vmatprep.mubr.bf16.mxu0 %v2461
        %3690 = vmatmul.mubr.bf16.gmra.mxu0 %v2381
        %v3691 = vpop.f32.mrf.mxu0
        %v3692 = vadd.f32 %v3531, %v3691
        %v3693 = vpop.f32.mrf.mxu0
        %v3694 = vpop.f32.mrf.mxu0
        %v3695 = vadd.f32 %v3534, %v3694
        %v3696 = vpop.f32.mrf.mxu0
        %3697 = vmatprep.mubr.bf16.mxu0 %v2462
        %3698 = vmatmul.mubr.bf16.gmra.mxu0 %v2382
        %v3699 = vpop.f32.mrf.mxu0
        %v3700 = vadd.f32 %v3539, %v3699
        %v3701 = vpop.f32.mrf.mxu0
        %v3702 = vpop.f32.mrf.mxu0
        %v3703 = vadd.f32 %v3542, %v3702
        %v3704 = vpop.f32.mrf.mxu0
        %3705 = vmatprep.mubr.bf16.mxu0 %v2463
        %3706 = vmatmul.mubr.bf16.gmra.mxu0 %v2383
        %v3707 = vpop.f32.mrf.mxu0
        %v3708 = vadd.f32 %v3547, %v3707
        %v3709 = vpop.f32.mrf.mxu0
        %v3710 = vpop.f32.mrf.mxu0
        %v3711 = vadd.f32 %v3550, %v3710
        %v3712 = vpop.f32.mrf.mxu0
        %3713 = vdwg.mxu0
        %3714 = vmatprep.subr.bf16.mxu0 0
        %3715 = vmatpush1.bf16.msra.mxu0 %v3287
        %3716 = vmatprep.subr.bf16.mxu0 0
        %3717 = vmatpush1.bf16.msra.mxu0 %v3286
        %3718 = vmatprep.subr.bf16.mxu0 0
        %3719 = vmatpush1.bf16.msra.mxu0 %v3285
        %3720 = vmatprep.subr.bf16.mxu0 0
        %3721 = vmatpush1.bf16.msra.mxu0 %v3284
        %3722 = vmatprep.subr.bf16.mxu0 0
        %3723 = vmatpush1.bf16.msra.mxu0 %v3283
        %3724 = vmatprep.subr.bf16.mxu0 0
        %3725 = vmatpush1.bf16.msra.mxu0 %v3282
        %3726 = vmatprep.subr.bf16.mxu0 0
        %3727 = vmatpush1.bf16.msra.mxu0 %v3281
        %3728 = vmatprep.subr.bf16.mxu0 0
        %3729 = vmatpush1.bf16.msra.mxu0 %v3280
        %3730 = vmatprep.subr.bf16.mxu0 0
        %3731 = vmatpush2.bf16.msra.mxu0 %v3295
        %3732 = vmatprep.subr.bf16.mxu0 0
        %3733 = vmatpush2.bf16.msra.mxu0 %v3294
        %3734 = vmatprep.subr.bf16.mxu0 0
        %3735 = vmatpush2.bf16.msra.mxu0 %v3293
        %3736 = vmatprep.subr.bf16.mxu0 0
        %3737 = vmatpush2.bf16.msra.mxu0 %v3292
        %3738 = vmatprep.subr.bf16.mxu0 0
        %3739 = vmatpush2.bf16.msra.mxu0 %v3291
        %3740 = vmatprep.subr.bf16.mxu0 0
        %3741 = vmatpush2.bf16.msra.mxu0 %v3290
        %3742 = vmatprep.subr.bf16.mxu0 0
        %3743 = vmatpush2.bf16.msra.mxu0 %v3289
        %3744 = vmatprep.subr.bf16.mxu0 0
        %3745 = vmatpush2.bf16.msra.mxu0 %v3288
        %3746 = vmatprep.mubr.bf16.mxu0 %v2576
        %3747 = vmatmul.mubr.bf16.gmra.mxu0 %v2512
        %v3748 = vpop.f32.mrf.mxu0
        %v3749 = vadd.f32 %v3588, %v3748
        %v3750 = vpop.f32.mrf.mxu0
        %v3751 = vpop.f32.mrf.mxu0
        %v3752 = vadd.f32 %v3591, %v3751
        %v3753 = vpop.f32.mrf.mxu0
        %3754 = vmatprep.mubr.bf16.mxu0 %v2577
        %3755 = vmatmul.mubr.bf16.gmra.mxu0 %v2513
        %v3756 = vpop.f32.mrf.mxu0
        %v3757 = vadd.f32 %v3596, %v3756
        %v3758 = vpop.f32.mrf.mxu0
        %v3759 = vpop.f32.mrf.mxu0
        %v3760 = vadd.f32 %v3599, %v3759
        %v3761 = vpop.f32.mrf.mxu0
        %3762 = vmatprep.mubr.bf16.mxu0 %v2578
        %3763 = vmatmul.mubr.bf16.gmra.mxu0 %v2514
        %v3764 = vpop.f32.mrf.mxu0
        %v3765 = vadd.f32 %v3604, %v3764
        %v3766 = vpop.f32.mrf.mxu0
        %v3767 = vpop.f32.mrf.mxu0
        %v3768 = vadd.f32 %v3607, %v3767
        %v3769 = vpop.f32.mrf.mxu0
        %3770 = vmatprep.mubr.bf16.mxu0 %v2579
        %3771 = vmatmul.mubr.bf16.gmra.mxu0 %v2515
        %v3772 = vpop.f32.mrf.mxu0
        %v3773 = vadd.f32 %v3612, %v3772
        %v3774 = vpop.f32.mrf.mxu0
        %v3775 = vpop.f32.mrf.mxu0
        %v3776 = vadd.f32 %v3615, %v3775
        %v3777 = vpop.f32.mrf.mxu0
        %3778 = vmatprep.mubr.bf16.mxu0 %v2580
        %3779 = vmatmul.mubr.bf16.gmra.mxu0 %v2516
        %v3780 = vpop.f32.mrf.mxu0
        %v3781 = vadd.f32 %v3620, %v3780
        %v3782 = vpop.f32.mrf.mxu0
        %v3783 = vpop.f32.mrf.mxu0
        %v3784 = vadd.f32 %v3623, %v3783
        %v3785 = vpop.f32.mrf.mxu0
        %3786 = vmatprep.mubr.bf16.mxu0 %v2581
        %3787 = vmatmul.mubr.bf16.gmra.mxu0 %v2517
        %v3788 = vpop.f32.mrf.mxu0
        %v3789 = vadd.f32 %v3628, %v3788
        %v3790 = vpop.f32.mrf.mxu0
        %v3791 = vpop.f32.mrf.mxu0
        %v3792 = vadd.f32 %v3631, %v3791
        %v3793 = vpop.f32.mrf.mxu0
        %3794 = vmatprep.mubr.bf16.mxu0 %v2582
        %3795 = vmatmul.mubr.bf16.gmra.mxu0 %v2518
        %v3796 = vpop.f32.mrf.mxu0
        %v3797 = vadd.f32 %v3636, %v3796
        %v3798 = vpop.f32.mrf.mxu0
        %v3799 = vpop.f32.mrf.mxu0
        %v3800 = vadd.f32 %v3639, %v3799
        %v3801 = vpop.f32.mrf.mxu0
        %3802 = vmatprep.mubr.bf16.mxu0 %v2583
        %3803 = vmatmul.mubr.bf16.gmra.mxu0 %v2519
        %v3804 = vpop.f32.mrf.mxu0
        %v3805 = vadd.f32 %v3644, %v3804
        %v3806 = vpop.f32.mrf.mxu0
        %v3807 = vpop.f32.mrf.mxu0
        %v3808 = vadd.f32 %v3647, %v3807
        %v3809 = vpop.f32.mrf.mxu0
        %3810 = vmatprep.mubr.bf16.mxu0 %v2584
        %3811 = vmatmul.mubr.bf16.gmra.mxu0 %v2520
        %v3812 = vpop.f32.mrf.mxu0
        %v3813 = vadd.f32 %v3652, %v3812
        %v3814 = vpop.f32.mrf.mxu0
        %v3815 = vpop.f32.mrf.mxu0
        %v3816 = vadd.f32 %v3655, %v3815
        %v3817 = vpop.f32.mrf.mxu0
        %3818 = vmatprep.mubr.bf16.mxu0 %v2585
        %3819 = vmatmul.mubr.bf16.gmra.mxu0 %v2521
        %v3820 = vpop.f32.mrf.mxu0
        %v3821 = vadd.f32 %v3660, %v3820
        %v3822 = vpop.f32.mrf.mxu0
        %v3823 = vpop.f32.mrf.mxu0
        %v3824 = vadd.f32 %v3663, %v3823
        %v3825 = vpop.f32.mrf.mxu0
        %3826 = vmatprep.mubr.bf16.mxu0 %v2586
        %3827 = vmatmul.mubr.bf16.gmra.mxu0 %v2522
        %v3828 = vpop.f32.mrf.mxu0
        %v3829 = vadd.f32 %v3668, %v3828
        %v3830 = vpop.f32.mrf.mxu0
        %v3831 = vpop.f32.mrf.mxu0
        %v3832 = vadd.f32 %v3671, %v3831
        %v3833 = vpop.f32.mrf.mxu0
        %3834 = vmatprep.mubr.bf16.mxu0 %v2587
        %3835 = vmatmul.mubr.bf16.gmra.mxu0 %v2523
        %v3836 = vpop.f32.mrf.mxu0
        %v3837 = vadd.f32 %v3676, %v3836
        %v3838 = vpop.f32.mrf.mxu0
        %v3839 = vpop.f32.mrf.mxu0
        %v3840 = vadd.f32 %v3679, %v3839
        %v3841 = vpop.f32.mrf.mxu0
        %3842 = vmatprep.mubr.bf16.mxu0 %v2588
        %3843 = vmatmul.mubr.bf16.gmra.mxu0 %v2524
        %v3844 = vpop.f32.mrf.mxu0
        %v3845 = vadd.f32 %v3684, %v3844
        %v3846 = vpop.f32.mrf.mxu0
        %v3847 = vpop.f32.mrf.mxu0
        %v3848 = vadd.f32 %v3687, %v3847
        %v3849 = vpop.f32.mrf.mxu0
        %3850 = vmatprep.mubr.bf16.mxu0 %v2589
        %3851 = vmatmul.mubr.bf16.gmra.mxu0 %v2525
        %v3852 = vpop.f32.mrf.mxu0
        %v3853 = vadd.f32 %v3692, %v3852
        %v3854 = vpop.f32.mrf.mxu0
        %v3855 = vpop.f32.mrf.mxu0
        %v3856 = vadd.f32 %v3695, %v3855
        %v3857 = vpop.f32.mrf.mxu0
        %3858 = vmatprep.mubr.bf16.mxu0 %v2590
        %3859 = vmatmul.mubr.bf16.gmra.mxu0 %v2526
        %v3860 = vpop.f32.mrf.mxu0
        %v3861 = vadd.f32 %v3700, %v3860
        %v3862 = vpop.f32.mrf.mxu0
        %v3863 = vpop.f32.mrf.mxu0
        %v3864 = vadd.f32 %v3703, %v3863
        %v3865 = vpop.f32.mrf.mxu0
        %3866 = vmatprep.mubr.bf16.mxu0 %v2591
        %3867 = vmatmul.mubr.bf16.gmra.mxu0 %v2527
        %v3868 = vpop.f32.mrf.mxu0
        %v3869 = vadd.f32 %v3708, %v3868
        %v3870 = vpop.f32.mrf.mxu0
        %v3871 = vpop.f32.mrf.mxu0
        %v3872 = vadd.f32 %v3711, %v3871
        %v3873 = vpop.f32.mrf.mxu0
        %3874 = vdwg.mxu0
        %3875 = vmatprep.subr.bf16.mxu0 0
        %3876 = vmatpush1.bf16.msra.mxu0 %v3303
        %3877 = vmatprep.subr.bf16.mxu0 0
        %3878 = vmatpush1.bf16.msra.mxu0 %v3302
        %3879 = vmatprep.subr.bf16.mxu0 0
        %3880 = vmatpush1.bf16.msra.mxu0 %v3301
        %3881 = vmatprep.subr.bf16.mxu0 0
        %3882 = vmatpush1.bf16.msra.mxu0 %v3300
        %3883 = vmatprep.subr.bf16.mxu0 0
        %3884 = vmatpush1.bf16.msra.mxu0 %v3299
        %3885 = vmatprep.subr.bf16.mxu0 0
        %3886 = vmatpush1.bf16.msra.mxu0 %v3298
        %3887 = vmatprep.subr.bf16.mxu0 0
        %3888 = vmatpush1.bf16.msra.mxu0 %v3297
        %3889 = vmatprep.subr.bf16.mxu0 0
        %3890 = vmatpush1.bf16.msra.mxu0 %v3296
        %3891 = vmatprep.subr.bf16.mxu0 0
        %3892 = vmatpush2.bf16.msra.mxu0 %v3311
        %3893 = vmatprep.subr.bf16.mxu0 0
        %3894 = vmatpush2.bf16.msra.mxu0 %v3310
        %3895 = vmatprep.subr.bf16.mxu0 0
        %3896 = vmatpush2.bf16.msra.mxu0 %v3309
        %3897 = vmatprep.subr.bf16.mxu0 0
        %3898 = vmatpush2.bf16.msra.mxu0 %v3308
        %3899 = vmatprep.subr.bf16.mxu0 0
        %3900 = vmatpush2.bf16.msra.mxu0 %v3307
        %3901 = vmatprep.subr.bf16.mxu0 0
        %3902 = vmatpush2.bf16.msra.mxu0 %v3306
        %3903 = vmatprep.subr.bf16.mxu0 0
        %3904 = vmatpush2.bf16.msra.mxu0 %v3305
        %3905 = vmatprep.subr.bf16.mxu0 0
        %3906 = vmatpush2.bf16.msra.mxu0 %v3304
        %3907 = vmatprep.mubr.bf16.mxu0 %v2720
        %3908 = vmatmul.mubr.bf16.gmra.mxu0 %v2656
        %v3909 = vpop.f32.mrf.mxu0
        %v3910 = vadd.f32 %v3749, %v3909
        %v3911 = vpop.f32.mrf.mxu0
        %v3912 = vpop.f32.mrf.mxu0
        %v3913 = vadd.f32 %v3752, %v3912
        %v3914 = vpop.f32.mrf.mxu0
        %3915 = vmatprep.mubr.bf16.mxu0 %v2721
        %3916 = vmatmul.mubr.bf16.gmra.mxu0 %v2657
        %v3917 = vpop.f32.mrf.mxu0
        %v3918 = vadd.f32 %v3757, %v3917
        %v3919 = vpop.f32.mrf.mxu0
        %v3920 = vpop.f32.mrf.mxu0
        %v3921 = vadd.f32 %v3760, %v3920
        %v3922 = vpop.f32.mrf.mxu0
        %3923 = vmatprep.mubr.bf16.mxu0 %v2722
        %3924 = vmatmul.mubr.bf16.gmra.mxu0 %v2658
        %v3925 = vpop.f32.mrf.mxu0
        %v3926 = vadd.f32 %v3765, %v3925
        %v3927 = vpop.f32.mrf.mxu0
        %v3928 = vpop.f32.mrf.mxu0
        %v3929 = vadd.f32 %v3768, %v3928
        %v3930 = vpop.f32.mrf.mxu0
        %3931 = vmatprep.mubr.bf16.mxu0 %v2723
        %3932 = vmatmul.mubr.bf16.gmra.mxu0 %v2659
        %v3933 = vpop.f32.mrf.mxu0
        %v3934 = vadd.f32 %v3773, %v3933
        %v3935 = vpop.f32.mrf.mxu0
        %v3936 = vpop.f32.mrf.mxu0
        %v3937 = vadd.f32 %v3776, %v3936
        %v3938 = vpop.f32.mrf.mxu0
        %3939 = vmatprep.mubr.bf16.mxu0 %v2724
        %3940 = vmatmul.mubr.bf16.gmra.mxu0 %v2660
        %v3941 = vpop.f32.mrf.mxu0
        %v3942 = vadd.f32 %v3781, %v3941
        %v3943 = vpop.f32.mrf.mxu0
        %v3944 = vpop.f32.mrf.mxu0
        %v3945 = vadd.f32 %v3784, %v3944
        %v3946 = vpop.f32.mrf.mxu0
        %3947 = vmatprep.mubr.bf16.mxu0 %v2725
        %3948 = vmatmul.mubr.bf16.gmra.mxu0 %v2661
        %v3949 = vpop.f32.mrf.mxu0
        %v3950 = vadd.f32 %v3789, %v3949
        %v3951 = vpop.f32.mrf.mxu0
        %v3952 = vpop.f32.mrf.mxu0
        %v3953 = vadd.f32 %v3792, %v3952
        %v3954 = vpop.f32.mrf.mxu0
        %3955 = vmatprep.mubr.bf16.mxu0 %v2726
        %3956 = vmatmul.mubr.bf16.gmra.mxu0 %v2662
        %v3957 = vpop.f32.mrf.mxu0
        %v3958 = vadd.f32 %v3797, %v3957
        %v3959 = vpop.f32.mrf.mxu0
        %v3960 = vpop.f32.mrf.mxu0
        %v3961 = vadd.f32 %v3800, %v3960
        %v3962 = vpop.f32.mrf.mxu0
        %3963 = vmatprep.mubr.bf16.mxu0 %v2727
        %3964 = vmatmul.mubr.bf16.gmra.mxu0 %v2663
        %v3965 = vpop.f32.mrf.mxu0
        %v3966 = vadd.f32 %v3805, %v3965
        %v3967 = vpop.f32.mrf.mxu0
        %v3968 = vpop.f32.mrf.mxu0
        %v3969 = vadd.f32 %v3808, %v3968
        %v3970 = vpop.f32.mrf.mxu0
        %3971 = vmatprep.mubr.bf16.mxu0 %v2728
        %3972 = vmatmul.mubr.bf16.gmra.mxu0 %v2664
        %v3973 = vpop.f32.mrf.mxu0
        %v3974 = vadd.f32 %v3813, %v3973
        %v3975 = vpop.f32.mrf.mxu0
        %v3976 = vpop.f32.mrf.mxu0
        %v3977 = vadd.f32 %v3816, %v3976
        %v3978 = vpop.f32.mrf.mxu0
        %3979 = vmatprep.mubr.bf16.mxu0 %v2729
        %3980 = vmatmul.mubr.bf16.gmra.mxu0 %v2665
        %v3981 = vpop.f32.mrf.mxu0
        %v3982 = vadd.f32 %v3821, %v3981
        %v3983 = vpop.f32.mrf.mxu0
        %v3984 = vpop.f32.mrf.mxu0
        %v3985 = vadd.f32 %v3824, %v3984
        %v3986 = vpop.f32.mrf.mxu0
        %3987 = vmatprep.mubr.bf16.mxu0 %v2730
        %3988 = vmatmul.mubr.bf16.gmra.mxu0 %v2666
        %v3989 = vpop.f32.mrf.mxu0
        %v3990 = vadd.f32 %v3829, %v3989
        %v3991 = vpop.f32.mrf.mxu0
        %v3992 = vpop.f32.mrf.mxu0
        %v3993 = vadd.f32 %v3832, %v3992
        %v3994 = vpop.f32.mrf.mxu0
        %3995 = vmatprep.mubr.bf16.mxu0 %v2731
        %3996 = vmatmul.mubr.bf16.gmra.mxu0 %v2667
        %v3997 = vpop.f32.mrf.mxu0
        %v3998 = vadd.f32 %v3837, %v3997
        %v3999 = vpop.f32.mrf.mxu0
        %v4000 = vpop.f32.mrf.mxu0
        %v4001 = vadd.f32 %v3840, %v4000
        %v4002 = vpop.f32.mrf.mxu0
        %4003 = vmatprep.mubr.bf16.mxu0 %v2732
        %4004 = vmatmul.mubr.bf16.gmra.mxu0 %v2668
        %v4005 = vpop.f32.mrf.mxu0
        %v4006 = vadd.f32 %v3845, %v4005
        %v4007 = vpop.f32.mrf.mxu0
        %v4008 = vpop.f32.mrf.mxu0
        %v4009 = vadd.f32 %v3848, %v4008
        %v4010 = vpop.f32.mrf.mxu0
        %4011 = vmatprep.mubr.bf16.mxu0 %v2733
        %4012 = vmatmul.mubr.bf16.gmra.mxu0 %v2669
        %v4013 = vpop.f32.mrf.mxu0
        %v4014 = vadd.f32 %v3853, %v4013
        %v4015 = vpop.f32.mrf.mxu0
        %v4016 = vpop.f32.mrf.mxu0
        %v4017 = vadd.f32 %v3856, %v4016
        %v4018 = vpop.f32.mrf.mxu0
        %4019 = vmatprep.mubr.bf16.mxu0 %v2734
        %4020 = vmatmul.mubr.bf16.gmra.mxu0 %v2670
        %v4021 = vpop.f32.mrf.mxu0
        %v4022 = vadd.f32 %v3861, %v4021
        %v4023 = vpop.f32.mrf.mxu0
        %v4024 = vpop.f32.mrf.mxu0
        %v4025 = vadd.f32 %v3864, %v4024
        %v4026 = vpop.f32.mrf.mxu0
        %4027 = vmatprep.mubr.bf16.mxu0 %v2735
        %4028 = vmatmul.mubr.bf16.gmra.mxu0 %v2671
        %v4029 = vpop.f32.mrf.mxu0
        %v4030 = vadd.f32 %v3869, %v4029
        %v4031 = vpop.f32.mrf.mxu0
        %v4032 = vpop.f32.mrf.mxu0
        %v4033 = vadd.f32 %v3872, %v4032
        %v4034 = vpop.f32.mrf.mxu0
        %4035 = vdwg.mxu0
        %4036 = vmatprep.subr.bf16.mxu0 0
        %4037 = vmatpush1.bf16.msra.mxu0 %v3319
        %4038 = vmatprep.subr.bf16.mxu0 0
        %4039 = vmatpush1.bf16.msra.mxu0 %v3318
        %4040 = vmatprep.subr.bf16.mxu0 0
        %4041 = vmatpush1.bf16.msra.mxu0 %v3317
        %4042 = vmatprep.subr.bf16.mxu0 0
        %4043 = vmatpush1.bf16.msra.mxu0 %v3316
        %4044 = vmatprep.subr.bf16.mxu0 0
        %4045 = vmatpush1.bf16.msra.mxu0 %v3315
        %4046 = vmatprep.subr.bf16.mxu0 0
        %4047 = vmatpush1.bf16.msra.mxu0 %v3314
        %4048 = vmatprep.subr.bf16.mxu0 0
        %4049 = vmatpush1.bf16.msra.mxu0 %v3313
        %4050 = vmatprep.subr.bf16.mxu0 0
        %4051 = vmatpush1.bf16.msra.mxu0 %v3312
        %4052 = vmatprep.subr.bf16.mxu0 0
        %4053 = vmatpush2.bf16.msra.mxu0 0
        %4054 = vmatprep.subr.bf16.mxu0 0
        %4055 = vmatpush2.bf16.msra.mxu0 0
        %4056 = vmatprep.subr.bf16.mxu0 0
        %4057 = vmatpush2.bf16.msra.mxu0 0
        %4058 = vmatprep.subr.bf16.mxu0 0
        %4059 = vmatpush2.bf16.msra.mxu0 0
        %4060 = vmatprep.subr.bf16.mxu0 0
        %4061 = vmatpush2.bf16.msra.mxu0 0
        %4062 = vmatprep.subr.bf16.mxu0 0
        %4063 = vmatpush2.bf16.msra.mxu0 0
        %4064 = vmatprep.subr.bf16.mxu0 0
        %4065 = vmatpush2.bf16.msra.mxu0 0
        %4066 = vmatprep.subr.bf16.mxu0 0
        %4067 = vmatpush2.bf16.msra.mxu0 0
        %4068 = vmatprep.mubr.bf16.mxu0 0
        %4069 = vmatmul.mubr.bf16.gmra.mxu0 %v2784
        %v4070 = vpop.f32.mrf.mxu0
        %v4071 = vadd.f32 %v3910, %v4070
        %v4072 = vpop.f32.mrf.mxu0
        %v4073 = vpop.f32.mrf.mxu0
        %v4074 = vadd.f32 %v3913, %v4073
        %v4075 = vpop.f32.mrf.mxu0
        %4076 = vmatprep.mubr.bf16.mxu0 0
        %4077 = vmatmul.mubr.bf16.gmra.mxu0 %v2785
        %v4078 = vpop.f32.mrf.mxu0
        %v4079 = vadd.f32 %v3918, %v4078
        %v4080 = vpop.f32.mrf.mxu0
        %v4081 = vpop.f32.mrf.mxu0
        %v4082 = vadd.f32 %v3921, %v4081
        %v4083 = vpop.f32.mrf.mxu0
        %4084 = vmatprep.mubr.bf16.mxu0 0
        %4085 = vmatmul.mubr.bf16.gmra.mxu0 %v2786
        %v4086 = vpop.f32.mrf.mxu0
        %v4087 = vadd.f32 %v3926, %v4086
        %v4088 = vpop.f32.mrf.mxu0
        %v4089 = vpop.f32.mrf.mxu0
        %v4090 = vadd.f32 %v3929, %v4089
        %v4091 = vpop.f32.mrf.mxu0
        %4092 = vmatprep.mubr.bf16.mxu0 0
        %4093 = vmatmul.mubr.bf16.gmra.mxu0 %v2787
        %v4094 = vpop.f32.mrf.mxu0
        %v4095 = vadd.f32 %v3934, %v4094
        %v4096 = vpop.f32.mrf.mxu0
        %v4097 = vpop.f32.mrf.mxu0
        %v4098 = vadd.f32 %v3937, %v4097
        %v4099 = vpop.f32.mrf.mxu0
        %4100 = vmatprep.mubr.bf16.mxu0 0
        %4101 = vmatmul.mubr.bf16.gmra.mxu0 %v2788
        %v4102 = vpop.f32.mrf.mxu0
        %v4103 = vadd.f32 %v3942, %v4102
        %v4104 = vpop.f32.mrf.mxu0
        %v4105 = vpop.f32.mrf.mxu0
        %v4106 = vadd.f32 %v3945, %v4105
        %v4107 = vpop.f32.mrf.mxu0
        %4108 = vmatprep.mubr.bf16.mxu0 0
        %4109 = vmatmul.mubr.bf16.gmra.mxu0 %v2789
        %v4110 = vpop.f32.mrf.mxu0
        %v4111 = vadd.f32 %v3950, %v4110
        %v4112 = vpop.f32.mrf.mxu0
        %v4113 = vpop.f32.mrf.mxu0
        %v4114 = vadd.f32 %v3953, %v4113
        %v4115 = vpop.f32.mrf.mxu0
        %4116 = vmatprep.mubr.bf16.mxu0 0
        %4117 = vmatmul.mubr.bf16.gmra.mxu0 %v2790
        %v4118 = vpop.f32.mrf.mxu0
        %v4119 = vadd.f32 %v3958, %v4118
        %v4120 = vpop.f32.mrf.mxu0
        %v4121 = vpop.f32.mrf.mxu0
        %v4122 = vadd.f32 %v3961, %v4121
        %v4123 = vpop.f32.mrf.mxu0
        %4124 = vmatprep.mubr.bf16.mxu0 0
        %4125 = vmatmul.mubr.bf16.gmra.mxu0 %v2791
        %v4126 = vpop.f32.mrf.mxu0
        %v4127 = vadd.f32 %v3966, %v4126
        %v4128 = vpop.f32.mrf.mxu0
        %v4129 = vpop.f32.mrf.mxu0
        %v4130 = vadd.f32 %v3969, %v4129
        %v4131 = vpop.f32.mrf.mxu0
        %4132 = vmatprep.mubr.bf16.mxu0 0
        %4133 = vmatmul.mubr.bf16.gmra.mxu0 %v2792
        %v4134 = vpop.f32.mrf.mxu0
        %v4135 = vadd.f32 %v3974, %v4134
        %v4136 = vpop.f32.mrf.mxu0
        %v4137 = vpop.f32.mrf.mxu0
        %v4138 = vadd.f32 %v3977, %v4137
        %v4139 = vpop.f32.mrf.mxu0
        %4140 = vmatprep.mubr.bf16.mxu0 0
        %4141 = vmatmul.mubr.bf16.gmra.mxu0 %v2793
        %v4142 = vpop.f32.mrf.mxu0
        %v4143 = vadd.f32 %v3982, %v4142
        %v4144 = vpop.f32.mrf.mxu0
        %v4145 = vpop.f32.mrf.mxu0
        %v4146 = vadd.f32 %v3985, %v4145
        %v4147 = vpop.f32.mrf.mxu0
        %4148 = vmatprep.mubr.bf16.mxu0 0
        %4149 = vmatmul.mubr.bf16.gmra.mxu0 %v2794
        %v4150 = vpop.f32.mrf.mxu0
        %v4151 = vadd.f32 %v3990, %v4150
        %v4152 = vpop.f32.mrf.mxu0
        %v4153 = vpop.f32.mrf.mxu0
        %v4154 = vadd.f32 %v3993, %v4153
        %v4155 = vpop.f32.mrf.mxu0
        %4156 = vmatprep.mubr.bf16.mxu0 0
        %4157 = vmatmul.mubr.bf16.gmra.mxu0 %v2795
        %v4158 = vpop.f32.mrf.mxu0
        %v4159 = vadd.f32 %v3998, %v4158
        %v4160 = vpop.f32.mrf.mxu0
        %v4161 = vpop.f32.mrf.mxu0
        %v4162 = vadd.f32 %v4001, %v4161
        %v4163 = vpop.f32.mrf.mxu0
        %4164 = vmatprep.mubr.bf16.mxu0 0
        %4165 = vmatmul.mubr.bf16.gmra.mxu0 %v2796
        %v4166 = vpop.f32.mrf.mxu0
        %v4167 = vadd.f32 %v4006, %v4166
        %v4168 = vpop.f32.mrf.mxu0
        %v4169 = vpop.f32.mrf.mxu0
        %v4170 = vadd.f32 %v4009, %v4169
        %v4171 = vpop.f32.mrf.mxu0
        %4172 = vmatprep.mubr.bf16.mxu0 0
        %4173 = vmatmul.mubr.bf16.gmra.mxu0 %v2797
        %v4174 = vpop.f32.mrf.mxu0
        %v4175 = vadd.f32 %v4014, %v4174
        %v4176 = vpop.f32.mrf.mxu0
        %v4177 = vpop.f32.mrf.mxu0
        %v4178 = vadd.f32 %v4017, %v4177
        %v4179 = vpop.f32.mrf.mxu0
        %4180 = vmatprep.mubr.bf16.mxu0 0
        %4181 = vmatmul.mubr.bf16.gmra.mxu0 %v2798
        %v4182 = vpop.f32.mrf.mxu0
        %v4183 = vadd.f32 %v4022, %v4182
        %v4184 = vpop.f32.mrf.mxu0
        %v4185 = vpop.f32.mrf.mxu0
        %v4186 = vadd.f32 %v4025, %v4185
        %v4187 = vpop.f32.mrf.mxu0
        %4188 = vmatprep.mubr.bf16.mxu0 0
        %4189 = vmatmul.mubr.bf16.gmra.mxu0 %v2799
        %v4190 = vpop.f32.mrf.mxu0
        %v4191 = vadd.f32 %v4030, %v4190
        %v4192 = vpop.f32.mrf.mxu0
        %v4193 = vpop.f32.mrf.mxu0
        %v4194 = vadd.f32 %v4033, %v4193
        %v4195 = vpop.f32.mrf.mxu0
        %4196 = vdwg.mxu0
        %v4197 = vld [vmem:[%s3] sm:$0x1]
        %v4199 = vlaneseq
        %v4200 = vshrl.u32 %v4199, 7
        %v4201 = vsub.s32 0, %v4200
        %v4202 = vrot.slane %v4197, %v4201
        %v4204 = vmul.f32 %v4071, %v4202
        %v4205 = vmul.f32 %v4074, %v4202
        %v4206 = vmul.f32 %v4079, %v4202
        %v4207 = vmul.f32 %v4082, %v4202
        %v4208 = vmul.f32 %v4087, %v4202
        %v4209 = vmul.f32 %v4090, %v4202
        %v4210 = vmul.f32 %v4095, %v4202
        %v4211 = vmul.f32 %v4098, %v4202
        %v4212 = vmul.f32 %v4103, %v4202
        %v4213 = vmul.f32 %v4106, %v4202
        %v4214 = vmul.f32 %v4111, %v4202
        %v4215 = vmul.f32 %v4114, %v4202
        %v4216 = vmul.f32 %v4119, %v4202
        %v4217 = vmul.f32 %v4122, %v4202
        %v4218 = vmul.f32 %v4127, %v4202
        %v4219 = vmul.f32 %v4130, %v4202
        %v4220 = vmul.f32 %v4135, %v4202
        %v4221 = vmul.f32 %v4138, %v4202
        %v4222 = vmul.f32 %v4143, %v4202
        %v4223 = vmul.f32 %v4146, %v4202
        %v4224 = vmul.f32 %v4151, %v4202
        %v4225 = vmul.f32 %v4154, %v4202
        %v4226 = vmul.f32 %v4159, %v4202
        %v4227 = vmul.f32 %v4162, %v4202
        %v4228 = vmul.f32 %v4167, %v4202
        %v4229 = vmul.f32 %v4170, %v4202
        %v4230 = vmul.f32 %v4175, %v4202
        %v4231 = vmul.f32 %v4178, %v4202
        %v4232 = vmul.f32 %v4183, %v4202
        %v4233 = vmul.f32 %v4186, %v4202
        %v4234 = vmul.f32 %v4191, %v4202
        %v4235 = vmul.f32 %v4194, %v4202
        %v4236 = vld [vmem:[%s4] sm:$0x1]
        %v4238 = vlaneseq
        %v4239 = vshrl.u32 %v4238, 7
        %v4240 = vsub.s32 0, %v4239
        %v4241 = vrot.slane %v4236, %v4240
        %v4243 = vadd.f32 %v4204, %v4241
        %v4244 = vadd.f32 %v4205, %v4241
        %v4245 = vadd.f32 %v4206, %v4241
        %v4246 = vadd.f32 %v4207, %v4241
        %v4247 = vadd.f32 %v4208, %v4241
        %v4248 = vadd.f32 %v4209, %v4241
        %v4249 = vadd.f32 %v4210, %v4241
        %v4250 = vadd.f32 %v4211, %v4241
        %v4251 = vadd.f32 %v4212, %v4241
        %v4252 = vadd.f32 %v4213, %v4241
        %v4253 = vadd.f32 %v4214, %v4241
        %v4254 = vadd.f32 %v4215, %v4241
        %v4255 = vadd.f32 %v4216, %v4241
        %v4256 = vadd.f32 %v4217, %v4241
        %v4257 = vadd.f32 %v4218, %v4241
        %v4258 = vadd.f32 %v4219, %v4241
        %v4259 = vadd.f32 %v4220, %v4241
        %v4260 = vadd.f32 %v4221, %v4241
        %v4261 = vadd.f32 %v4222, %v4241
        %v4262 = vadd.f32 %v4223, %v4241
        %v4263 = vadd.f32 %v4224, %v4241
        %v4264 = vadd.f32 %v4225, %v4241
        %v4265 = vadd.f32 %v4226, %v4241
        %v4266 = vadd.f32 %v4227, %v4241
        %v4267 = vadd.f32 %v4228, %v4241
        %v4268 = vadd.f32 %v4229, %v4241
        %v4269 = vadd.f32 %v4230, %v4241
        %v4270 = vadd.f32 %v4231, %v4241
        %v4271 = vadd.f32 %v4232, %v4241
        %v4272 = vadd.f32 %v4233, %v4241
        %v4273 = vadd.f32 %v4234, %v4241
        %v4274 = vadd.f32 %v4235, %v4241
        %v4275 = vmax.f32 %v4243, 0.0
        %v4276 = vmax.f32 %v4244, 0.0
        %v4277 = vmax.f32 %v4245, 0.0
        %v4278 = vmax.f32 %v4246, 0.0
        %v4279 = vmax.f32 %v4247, 0.0
        %v4280 = vmax.f32 %v4248, 0.0
        %v4281 = vmax.f32 %v4249, 0.0
        %v4282 = vmax.f32 %v4250, 0.0
        %v4283 = vmax.f32 %v4251, 0.0
        %v4284 = vmax.f32 %v4252, 0.0
        %v4285 = vmax.f32 %v4253, 0.0
        %v4286 = vmax.f32 %v4254, 0.0
        %v4287 = vmax.f32 %v4255, 0.0
        %v4288 = vmax.f32 %v4256, 0.0
        %v4289 = vmax.f32 %v4257, 0.0
        %v4290 = vmax.f32 %v4258, 0.0
        %v4291 = vmax.f32 %v4259, 0.0
        %v4292 = vmax.f32 %v4260, 0.0
        %v4293 = vmax.f32 %v4261, 0.0
        %v4294 = vmax.f32 %v4262, 0.0
        %v4295 = vmax.f32 %v4263, 0.0
        %v4296 = vmax.f32 %v4264, 0.0
        %v4297 = vmax.f32 %v4265, 0.0
        %v4298 = vmax.f32 %v4266, 0.0
        %v4299 = vmax.f32 %v4267, 0.0
        %v4300 = vmax.f32 %v4268, 0.0
        %v4301 = vmax.f32 %v4269, 0.0
        %v4302 = vmax.f32 %v4270, 0.0
        %v4303 = vmax.f32 %v4271, 0.0
        %v4304 = vmax.f32 %v4272, 0.0
        %v4305 = vmax.f32 %v4273, 0.0
        %v4306 = vmax.f32 %v4274, 0.0
        %4307 = vst [vmem:[#allocation2] sm:$0xff] 0.0
        %4308 = vst [vmem:[#allocation2 + $0x8] sm:$0xff] 0.0
        %4309 = vst [vmem:[#allocation2 + $0x10] sm:$0x3] 0.0
        %s4310 = scalar_lea.vmem [#allocation2], 408
        %4311 = vst [vmem:[%s4310] sm:$0xff] 0.0
        %4312 = vst [vmem:[%s4310 + $0x8] sm:$0xff] 0.0
        %4313 = vst [vmem:[%s4310 + $0x10] sm:$0x3] 0.0
        %4314 = vst [vmem:[#allocation2] sm:$0x1] 0.0
        %4315 = vst [vmem:[#allocation2 + $0x18] sm:$0x1] 0.0
        %4316 = vst [vmem:[#allocation2 + $0x30] sm:$0x1] 0.0
        %4317 = vst [vmem:[#allocation2 + $0x48] sm:$0x1] 0.0
        %4318 = vst [vmem:[#allocation2 + $0x60] sm:$0x1] 0.0
        %4319 = vst [vmem:[#allocation2 + $0x78] sm:$0x1] 0.0
        %4320 = vst [vmem:[#allocation2 + $0x90] sm:$0x1] 0.0
        %4321 = vst [vmem:[#allocation2 + $0xa8] sm:$0x1] 0.0
        %4322 = vst [vmem:[#allocation2 + $0xc0] sm:$0x1] 0.0
        %4323 = vst [vmem:[#allocation2 + $0xd8] sm:$0x1] 0.0
        %4324 = vst [vmem:[#allocation2 + $0xf0] sm:$0x1] 0.0
        %4325 = vst [vmem:[#allocation2 + $0x108] sm:$0x1] 0.0
        %4326 = vst [vmem:[#allocation2 + $0x120] sm:$0x1] 0.0
        %4327 = vst [vmem:[#allocation2 + $0x138] sm:$0x1] 0.0
        %4328 = vst [vmem:[#allocation2 + $0x150] sm:$0x1] 0.0
        %4329 = vst [vmem:[#allocation2 + $0x168] sm:$0x1] 0.0
        %4330 = vst [vmem:[#allocation2 + $0x180] sm:$0x1] 0.0
        %4331 = vst [vmem:[#allocation2 + $0x198] sm:$0x1] 0.0
        %4332 = vst [vmem:[#allocation2 + $0x11] sm:$0x1] 0.0
        %4333 = vst [vmem:[#allocation2 + $0x29] sm:$0x1] 0.0
        %4334 = vst [vmem:[#allocation2 + $0x41] sm:$0x1] 0.0
        %4335 = vst [vmem:[#allocation2 + $0x59] sm:$0x1] 0.0
        %4336 = vst [vmem:[#allocation2 + $0x71] sm:$0x1] 0.0
        %4337 = vst [vmem:[#allocation2 + $0x89] sm:$0x1] 0.0
        %4338 = vst [vmem:[#allocation2 + $0xa1] sm:$0x1] 0.0
        %4339 = vst [vmem:[#allocation2 + $0xb9] sm:$0x1] 0.0
        %4340 = vst [vmem:[#allocation2 + $0xd1] sm:$0x1] 0.0
        %4341 = vst [vmem:[#allocation2 + $0xe9] sm:$0x1] 0.0
        %4342 = vst [vmem:[#allocation2 + $0x101] sm:$0x1] 0.0
        %4343 = vst [vmem:[#allocation2 + $0x119] sm:$0x1] 0.0
        %4344 = vst [vmem:[#allocation2 + $0x131] sm:$0x1] 0.0
        %4345 = vst [vmem:[#allocation2 + $0x149] sm:$0x1] 0.0
        %4346 = vst [vmem:[#allocation2 + $0x161] sm:$0x1] 0.0
        %4347 = vst [vmem:[#allocation2 + $0x179] sm:$0x1] 0.0
        %4348 = vst [vmem:[#allocation2 + $0x191] sm:$0x1] 0.0
        %4349 = vst [vmem:[#allocation2 + $0x1a9] sm:$0x1] 0.0
        %s4350 = scalar_lea.vmem [#allocation2], 24
        %4351 = vst [vmem:[%s4350 + $0x1] sm:$0xff] %v4275
        %4352 = vst [vmem:[%s4350 + $0x9] sm:$0xff] %v4276
        %4353 = vst [vmem:[%s4350 + $0x19] sm:$0xff] %v4277
        %4354 = vst [vmem:[%s4350 + $0x21] sm:$0xff] %v4278
        %4355 = vst [vmem:[%s4350 + $0x31] sm:$0xff] %v4279
        %4356 = vst [vmem:[%s4350 + $0x39] sm:$0xff] %v4280
        %4357 = vst [vmem:[%s4350 + $0x49] sm:$0xff] %v4281
        %4358 = vst [vmem:[%s4350 + $0x51] sm:$0xff] %v4282
        %4359 = vst [vmem:[%s4350 + $0x61] sm:$0xff] %v4283
        %4360 = vst [vmem:[%s4350 + $0x69] sm:$0xff] %v4284
        %4361 = vst [vmem:[%s4350 + $0x79] sm:$0xff] %v4285
        %4362 = vst [vmem:[%s4350 + $0x81] sm:$0xff] %v4286
        %4363 = vst [vmem:[%s4350 + $0x91] sm:$0xff] %v4287
        %4364 = vst [vmem:[%s4350 + $0x99] sm:$0xff] %v4288
        %4365 = vst [vmem:[%s4350 + $0xa9] sm:$0xff] %v4289
        %4366 = vst [vmem:[%s4350 + $0xb1] sm:$0xff] %v4290
        %4367 = vst [vmem:[%s4350 + $0xc1] sm:$0xff] %v4291
        %4368 = vst [vmem:[%s4350 + $0xc9] sm:$0xff] %v4292
        %4369 = vst [vmem:[%s4350 + $0xd9] sm:$0xff] %v4293
        %4370 = vst [vmem:[%s4350 + $0xe1] sm:$0xff] %v4294
        %4371 = vst [vmem:[%s4350 + $0xf1] sm:$0xff] %v4295
        %4372 = vst [vmem:[%s4350 + $0xf9] sm:$0xff] %v4296
        %4373 = vst [vmem:[%s4350 + $0x109] sm:$0xff] %v4297
        %4374 = vst [vmem:[%s4350 + $0x111] sm:$0xff] %v4298
        %4375 = vst [vmem:[%s4350 + $0x121] sm:$0xff] %v4299
        %4376 = vst [vmem:[%s4350 + $0x129] sm:$0xff] %v4300
        %4377 = vst [vmem:[%s4350 + $0x139] sm:$0xff] %v4301
        %4378 = vst [vmem:[%s4350 + $0x141] sm:$0xff] %v4302
        %4379 = vst [vmem:[%s4350 + $0x151] sm:$0xff] %v4303
        %4380 = vst [vmem:[%s4350 + $0x159] sm:$0xff] %v4304
        %4381 = vst [vmem:[%s4350 + $0x169] sm:$0xff] %v4305
        %4382 = vst [vmem:[%s4350 + $0x171] sm:$0xff] %v4306
        %v4383 = vld [vmem:[#allocation2] sm:$0xff]
        %v4384 = vld [vmem:[#allocation2 + $0x8] sm:$0xff]
        %v4385 = vld [vmem:[#allocation2 + $0x18] sm:$0xff]
        %v4386 = vld [vmem:[#allocation2 + $0x20] sm:$0xff]
        %v4387 = vld [vmem:[#allocation2 + $0x30] sm:$0xff]
        %v4388 = vld [vmem:[#allocation2 + $0x38] sm:$0xff]
        %v4389 = vld [vmem:[#allocation2 + $0x48] sm:$0xff]
        %v4390 = vld [vmem:[#allocation2 + $0x50] sm:$0xff]
        %v4391 = vld [vmem:[#allocation2 + $0x60] sm:$0xff]
        %v4392 = vld [vmem:[#allocation2 + $0x68] sm:$0xff]
        %v4393 = vld [vmem:[#allocation2 + $0x78] sm:$0xff]
        %v4394 = vld [vmem:[#allocation2 + $0x80] sm:$0xff]
        %v4395 = vld [vmem:[#allocation2 + $0x90] sm:$0xff]
        %v4396 = vld [vmem:[#allocation2 + $0x98] sm:$0xff]
        %v4397 = vld [vmem:[#allocation2 + $0xa8] sm:$0xff]
        %v4398 = vld [vmem:[#allocation2 + $0xb0] sm:$0xff]
        %v4399 = vld [vmem:[#allocation2 + $0xc0] sm:$0xff]
        %v4400 = vld [vmem:[#allocation2 + $0xc8] sm:$0xff]
        %v4401 = vld [vmem:[#allocation2 + $0xd8] sm:$0xff]
        %v4402 = vld [vmem:[#allocation2 + $0xe0] sm:$0xff]
        %v4403 = vld [vmem:[#allocation2 + $0xf0] sm:$0xff]
        %v4404 = vld [vmem:[#allocation2 + $0xf8] sm:$0xff]
        %v4405 = vld [vmem:[#allocation2 + $0x108] sm:$0xff]
        %v4406 = vld [vmem:[#allocation2 + $0x110] sm:$0xff]
        %v4407 = vld [vmem:[#allocation2 + $0x120] sm:$0xff]
        %v4408 = vld [vmem:[#allocation2 + $0x128] sm:$0xff]
        %v4409 = vld [vmem:[#allocation2 + $0x138] sm:$0xff]
        %v4410 = vld [vmem:[#allocation2 + $0x140] sm:$0xff]
        %v4411 = vld [vmem:[#allocation2 + $0x150] sm:$0xff]
        %v4412 = vld [vmem:[#allocation2 + $0x158] sm:$0xff]
        %v4413 = vld [vmem:[#allocation2 + $0x168] sm:$0xff]
        %v4414 = vld [vmem:[#allocation2 + $0x170] sm:$0xff]
        %v4415 = vld [vmem:[#allocation2 + $0x1] sm:$0xff]
        %v4416 = vld [vmem:[#allocation2 + $0x9] sm:$0xff]
        %v4417 = vld [vmem:[#allocation2 + $0x19] sm:$0xff]
        %v4418 = vld [vmem:[#allocation2 + $0x21] sm:$0xff]
        %v4419 = vld [vmem:[#allocation2 + $0x31] sm:$0xff]
        %v4420 = vld [vmem:[#allocation2 + $0x39] sm:$0xff]
        %v4421 = vld [vmem:[#allocation2 + $0x49] sm:$0xff]
        %v4422 = vld [vmem:[#allocation2 + $0x51] sm:$0xff]
        %v4423 = vld [vmem:[#allocation2 + $0x61] sm:$0xff]
        %v4424 = vld [vmem:[#allocation2 + $0x69] sm:$0xff]
        %v4425 = vld [vmem:[#allocation2 + $0x79] sm:$0xff]
        %v4426 = vld [vmem:[#allocation2 + $0x81] sm:$0xff]
        %v4427 = vld [vmem:[#allocation2 + $0x91] sm:$0xff]
        %v4428 = vld [vmem:[#allocation2 + $0x99] sm:$0xff]
        %v4429 = vld [vmem:[#allocation2 + $0xa9] sm:$0xff]
        %v4430 = vld [vmem:[#allocation2 + $0xb1] sm:$0xff]
        %v4431 = vld [vmem:[#allocation2 + $0xc1] sm:$0xff]
        %v4432 = vld [vmem:[#allocation2 + $0xc9] sm:$0xff]
        %v4433 = vld [vmem:[#allocation2 + $0xd9] sm:$0xff]
        %v4434 = vld [vmem:[#allocation2 + $0xe1] sm:$0xff]
        %v4435 = vld [vmem:[#allocation2 + $0xf1] sm:$0xff]
        %v4436 = vld [vmem:[#allocation2 + $0xf9] sm:$0xff]
        %v4437 = vld [vmem:[#allocation2 + $0x109] sm:$0xff]
        %v4438 = vld [vmem:[#allocation2 + $0x111] sm:$0xff]
        %v4439 = vld [vmem:[#allocation2 + $0x121] sm:$0xff]
        %v4440 = vld [vmem:[#allocation2 + $0x129] sm:$0xff]
        %v4441 = vld [vmem:[#allocation2 + $0x139] sm:$0xff]
        %v4442 = vld [vmem:[#allocation2 + $0x141] sm:$0xff]
        %v4443 = vld [vmem:[#allocation2 + $0x151] sm:$0xff]
        %v4444 = vld [vmem:[#allocation2 + $0x159] sm:$0xff]
        %v4445 = vld [vmem:[#allocation2 + $0x169] sm:$0xff]
        %v4446 = vld [vmem:[#allocation2 + $0x171] sm:$0xff]
        %v4447 = vld [vmem:[#allocation2 + $0x2] sm:$0xff]
        %v4448 = vld [vmem:[#allocation2 + $0xa] sm:$0xff]
        %v4449 = vld [vmem:[#allocation2 + $0x1a] sm:$0xff]
        %v4450 = vld [vmem:[#allocation2 + $0x22] sm:$0xff]
        %v4451 = vld [vmem:[#allocation2 + $0x32] sm:$0xff]
        %v4452 = vld [vmem:[#allocation2 + $0x3a] sm:$0xff]
        %v4453 = vld [vmem:[#allocation2 + $0x4a] sm:$0xff]
        %v4454 = vld [vmem:[#allocation2 + $0x52] sm:$0xff]
        %v4455 = vld [vmem:[#allocation2 + $0x62] sm:$0xff]
        %v4456 = vld [vmem:[#allocation2 + $0x6a] sm:$0xff]
        %v4457 = vld [vmem:[#allocation2 + $0x7a] sm:$0xff]
        %v4458 = vld [vmem:[#allocation2 + $0x82] sm:$0xff]
        %v4459 = vld [vmem:[#allocation2 + $0x92] sm:$0xff]
        %v4460 = vld [vmem:[#allocation2 + $0x9a] sm:$0xff]
        %v4461 = vld [vmem:[#allocation2 + $0xaa] sm:$0xff]
        %v4462 = vld [vmem:[#allocation2 + $0xb2] sm:$0xff]
        %v4463 = vld [vmem:[#allocation2 + $0xc2] sm:$0xff]
        %v4464 = vld [vmem:[#allocation2 + $0xca] sm:$0xff]
        %v4465 = vld [vmem:[#allocation2 + $0xda] sm:$0xff]
        %v4466 = vld [vmem:[#allocation2 + $0xe2] sm:$0xff]
        %v4467 = vld [vmem:[#allocation2 + $0xf2] sm:$0xff]
        %v4468 = vld [vmem:[#allocation2 + $0xfa] sm:$0xff]
        %v4469 = vld [vmem:[#allocation2 + $0x10a] sm:$0xff]
        %v4470 = vld [vmem:[#allocation2 + $0x112] sm:$0xff]
        %v4471 = vld [vmem:[#allocation2 + $0x122] sm:$0xff]
        %v4472 = vld [vmem:[#allocation2 + $0x12a] sm:$0xff]
        %v4473 = vld [vmem:[#allocation2 + $0x13a] sm:$0xff]
        %v4474 = vld [vmem:[#allocation2 + $0x142] sm:$0xff]
        %v4475 = vld [vmem:[#allocation2 + $0x152] sm:$0xff]
        %v4476 = vld [vmem:[#allocation2 + $0x15a] sm:$0xff]
        %v4477 = vld [vmem:[#allocation2 + $0x16a] sm:$0xff]
        %v4478 = vld [vmem:[#allocation2 + $0x172] sm:$0xff]
        %v4479 = vld [vmem:[%s4350] sm:$0xff]
        %v4480 = vld [vmem:[%s4350 + $0x8] sm:$0xff]
        %v4481 = vld [vmem:[%s4350 + $0x18] sm:$0xff]
        %v4482 = vld [vmem:[%s4350 + $0x20] sm:$0xff]
        %v4483 = vld [vmem:[%s4350 + $0x30] sm:$0xff]
        %v4484 = vld [vmem:[%s4350 + $0x38] sm:$0xff]
        %v4485 = vld [vmem:[%s4350 + $0x48] sm:$0xff]
        %v4486 = vld [vmem:[%s4350 + $0x50] sm:$0xff]
        %v4487 = vld [vmem:[%s4350 + $0x60] sm:$0xff]
        %v4488 = vld [vmem:[%s4350 + $0x68] sm:$0xff]
        %v4489 = vld [vmem:[%s4350 + $0x78] sm:$0xff]
        %v4490 = vld [vmem:[%s4350 + $0x80] sm:$0xff]
        %v4491 = vld [vmem:[%s4350 + $0x90] sm:$0xff]
        %v4492 = vld [vmem:[%s4350 + $0x98] sm:$0xff]
        %v4493 = vld [vmem:[%s4350 + $0xa8] sm:$0xff]
        %v4494 = vld [vmem:[%s4350 + $0xb0] sm:$0xff]
        %v4495 = vld [vmem:[%s4350 + $0xc0] sm:$0xff]
        %v4496 = vld [vmem:[%s4350 + $0xc8] sm:$0xff]
        %v4497 = vld [vmem:[%s4350 + $0xd8] sm:$0xff]
        %v4498 = vld [vmem:[%s4350 + $0xe0] sm:$0xff]
        %v4499 = vld [vmem:[%s4350 + $0xf0] sm:$0xff]
        %v4500 = vld [vmem:[%s4350 + $0xf8] sm:$0xff]
        %v4501 = vld [vmem:[%s4350 + $0x108] sm:$0xff]
        %v4502 = vld [vmem:[%s4350 + $0x110] sm:$0xff]
        %v4503 = vld [vmem:[%s4350 + $0x120] sm:$0xff]
        %v4504 = vld [vmem:[%s4350 + $0x128] sm:$0xff]
        %v4505 = vld [vmem:[%s4350 + $0x138] sm:$0xff]
        %v4506 = vld [vmem:[%s4350 + $0x140] sm:$0xff]
        %v4507 = vld [vmem:[%s4350 + $0x150] sm:$0xff]
        %v4508 = vld [vmem:[%s4350 + $0x158] sm:$0xff]
        %v4509 = vld [vmem:[%s4350 + $0x168] sm:$0xff]
        %v4510 = vld [vmem:[%s4350 + $0x170] sm:$0xff]
        %v4511 = vld [vmem:[%s4350 + $0x1] sm:$0xff]
        %v4512 = vld [vmem:[%s4350 + $0x9] sm:$0xff]
        %v4513 = vld [vmem:[%s4350 + $0x19] sm:$0xff]
        %v4514 = vld [vmem:[%s4350 + $0x21] sm:$0xff]
        %v4515 = vld [vmem:[%s4350 + $0x31] sm:$0xff]
        %v4516 = vld [vmem:[%s4350 + $0x39] sm:$0xff]
        %v4517 = vld [vmem:[%s4350 + $0x49] sm:$0xff]
        %v4518 = vld [vmem:[%s4350 + $0x51] sm:$0xff]
        %v4519 = vld [vmem:[%s4350 + $0x61] sm:$0xff]
        %v4520 = vld [vmem:[%s4350 + $0x69] sm:$0xff]
        %v4521 = vld [vmem:[%s4350 + $0x79] sm:$0xff]
        %v4522 = vld [vmem:[%s4350 + $0x81] sm:$0xff]
        %v4523 = vld [vmem:[%s4350 + $0x91] sm:$0xff]
        %v4524 = vld [vmem:[%s4350 + $0x99] sm:$0xff]
        %v4525 = vld [vmem:[%s4350 + $0xa9] sm:$0xff]
        %v4526 = vld [vmem:[%s4350 + $0xb1] sm:$0xff]
        %v4527 = vld [vmem:[%s4350 + $0xc1] sm:$0xff]
        %v4528 = vld [vmem:[%s4350 + $0xc9] sm:$0xff]
        %v4529 = vld [vmem:[%s4350 + $0xd9] sm:$0xff]
        %v4530 = vld [vmem:[%s4350 + $0xe1] sm:$0xff]
        %v4531 = vld [vmem:[%s4350 + $0xf1] sm:$0xff]
        %v4532 = vld [vmem:[%s4350 + $0xf9] sm:$0xff]
        %v4533 = vld [vmem:[%s4350 + $0x109] sm:$0xff]
        %v4534 = vld [vmem:[%s4350 + $0x111] sm:$0xff]
        %v4535 = vld [vmem:[%s4350 + $0x121] sm:$0xff]
        %v4536 = vld [vmem:[%s4350 + $0x129] sm:$0xff]
        %v4537 = vld [vmem:[%s4350 + $0x139] sm:$0xff]
        %v4538 = vld [vmem:[%s4350 + $0x141] sm:$0xff]
        %v4539 = vld [vmem:[%s4350 + $0x151] sm:$0xff]
        %v4540 = vld [vmem:[%s4350 + $0x159] sm:$0xff]
        %v4541 = vld [vmem:[%s4350 + $0x169] sm:$0xff]
        %v4542 = vld [vmem:[%s4350 + $0x171] sm:$0xff]
        %v4543 = vld [vmem:[%s4350 + $0x2] sm:$0xff]
        %v4544 = vld [vmem:[%s4350 + $0xa] sm:$0xff]
        %v4545 = vld [vmem:[%s4350 + $0x1a] sm:$0xff]
        %v4546 = vld [vmem:[%s4350 + $0x22] sm:$0xff]
        %v4547 = vld [vmem:[%s4350 + $0x32] sm:$0xff]
        %v4548 = vld [vmem:[%s4350 + $0x3a] sm:$0xff]
        %v4549 = vld [vmem:[%s4350 + $0x4a] sm:$0xff]
        %v4550 = vld [vmem:[%s4350 + $0x52] sm:$0xff]
        %v4551 = vld [vmem:[%s4350 + $0x62] sm:$0xff]
        %v4552 = vld [vmem:[%s4350 + $0x6a] sm:$0xff]
        %v4553 = vld [vmem:[%s4350 + $0x7a] sm:$0xff]
        %v4554 = vld [vmem:[%s4350 + $0x82] sm:$0xff]
        %v4555 = vld [vmem:[%s4350 + $0x92] sm:$0xff]
        %v4556 = vld [vmem:[%s4350 + $0x9a] sm:$0xff]
        %v4557 = vld [vmem:[%s4350 + $0xaa] sm:$0xff]
        %v4558 = vld [vmem:[%s4350 + $0xb2] sm:$0xff]
        %v4559 = vld [vmem:[%s4350 + $0xc2] sm:$0xff]
        %v4560 = vld [vmem:[%s4350 + $0xca] sm:$0xff]
        %v4561 = vld [vmem:[%s4350 + $0xda] sm:$0xff]
        %v4562 = vld [vmem:[%s4350 + $0xe2] sm:$0xff]
        %v4563 = vld [vmem:[%s4350 + $0xf2] sm:$0xff]
        %v4564 = vld [vmem:[%s4350 + $0xfa] sm:$0xff]
        %v4565 = vld [vmem:[%s4350 + $0x10a] sm:$0xff]
        %v4566 = vld [vmem:[%s4350 + $0x112] sm:$0xff]
        %v4567 = vld [vmem:[%s4350 + $0x122] sm:$0xff]
        %v4568 = vld [vmem:[%s4350 + $0x12a] sm:$0xff]
        %v4569 = vld [vmem:[%s4350 + $0x13a] sm:$0xff]
        %v4570 = vld [vmem:[%s4350 + $0x142] sm:$0xff]
        %v4571 = vld [vmem:[%s4350 + $0x152] sm:$0xff]
        %v4572 = vld [vmem:[%s4350 + $0x15a] sm:$0xff]
        %v4573 = vld [vmem:[%s4350 + $0x16a] sm:$0xff]
        %v4574 = vld [vmem:[%s4350 + $0x172] sm:$0xff]
        %s4575 = scalar_lea.vmem [#allocation2], 48
        %v4576 = vld [vmem:[%s4575] sm:$0xff]
        %v4577 = vld [vmem:[%s4575 + $0x8] sm:$0xff]
        %v4578 = vld [vmem:[%s4575 + $0x18] sm:$0xff]
        %v4579 = vld [vmem:[%s4575 + $0x20] sm:$0xff]
        %v4580 = vld [vmem:[%s4575 + $0x30] sm:$0xff]
        %v4581 = vld [vmem:[%s4575 + $0x38] sm:$0xff]
        %v4582 = vld [vmem:[%s4575 + $0x48] sm:$0xff]
        %v4583 = vld [vmem:[%s4575 + $0x50] sm:$0xff]
        %v4584 = vld [vmem:[%s4575 + $0x60] sm:$0xff]
        %v4585 = vld [vmem:[%s4575 + $0x68] sm:$0xff]
        %v4586 = vld [vmem:[%s4575 + $0x78] sm:$0xff]
        %v4587 = vld [vmem:[%s4575 + $0x80] sm:$0xff]
        %v4588 = vld [vmem:[%s4575 + $0x90] sm:$0xff]
        %v4589 = vld [vmem:[%s4575 + $0x98] sm:$0xff]
        %v4590 = vld [vmem:[%s4575 + $0xa8] sm:$0xff]
        %v4591 = vld [vmem:[%s4575 + $0xb0] sm:$0xff]
        %v4592 = vld [vmem:[%s4575 + $0xc0] sm:$0xff]
        %v4593 = vld [vmem:[%s4575 + $0xc8] sm:$0xff]
        %v4594 = vld [vmem:[%s4575 + $0xd8] sm:$0xff]
        %v4595 = vld [vmem:[%s4575 + $0xe0] sm:$0xff]
        %v4596 = vld [vmem:[%s4575 + $0xf0] sm:$0xff]
        %v4597 = vld [vmem:[%s4575 + $0xf8] sm:$0xff]
        %v4598 = vld [vmem:[%s4575 + $0x108] sm:$0xff]
        %v4599 = vld [vmem:[%s4575 + $0x110] sm:$0xff]
        %v4600 = vld [vmem:[%s4575 + $0x120] sm:$0xff]
        %v4601 = vld [vmem:[%s4575 + $0x128] sm:$0xff]
        %v4602 = vld [vmem:[%s4575 + $0x138] sm:$0xff]
        %v4603 = vld [vmem:[%s4575 + $0x140] sm:$0xff]
        %v4604 = vld [vmem:[%s4575 + $0x150] sm:$0xff]
        %v4605 = vld [vmem:[%s4575 + $0x158] sm:$0xff]
        %v4606 = vld [vmem:[%s4575 + $0x168] sm:$0xff]
        %v4607 = vld [vmem:[%s4575 + $0x170] sm:$0xff]
        %v4608 = vld [vmem:[%s4575 + $0x1] sm:$0xff]
        %v4609 = vld [vmem:[%s4575 + $0x9] sm:$0xff]
        %v4610 = vld [vmem:[%s4575 + $0x19] sm:$0xff]
        %v4611 = vld [vmem:[%s4575 + $0x21] sm:$0xff]
        %v4612 = vld [vmem:[%s4575 + $0x31] sm:$0xff]
        %v4613 = vld [vmem:[%s4575 + $0x39] sm:$0xff]
        %v4614 = vld [vmem:[%s4575 + $0x49] sm:$0xff]
        %v4615 = vld [vmem:[%s4575 + $0x51] sm:$0xff]
        %v4616 = vld [vmem:[%s4575 + $0x61] sm:$0xff]
        %v4617 = vld [vmem:[%s4575 + $0x69] sm:$0xff]
        %v4618 = vld [vmem:[%s4575 + $0x79] sm:$0xff]
        %v4619 = vld [vmem:[%s4575 + $0x81] sm:$0xff]
        %v4620 = vld [vmem:[%s4575 + $0x91] sm:$0xff]
        %v4621 = vld [vmem:[%s4575 + $0x99] sm:$0xff]
        %v4622 = vld [vmem:[%s4575 + $0xa9] sm:$0xff]
        %v4623 = vld [vmem:[%s4575 + $0xb1] sm:$0xff]
        %v4624 = vld [vmem:[%s4575 + $0xc1] sm:$0xff]
        %v4625 = vld [vmem:[%s4575 + $0xc9] sm:$0xff]
        %v4626 = vld [vmem:[%s4575 + $0xd9] sm:$0xff]
        %v4627 = vld [vmem:[%s4575 + $0xe1] sm:$0xff]
        %v4628 = vld [vmem:[%s4575 + $0xf1] sm:$0xff]
        %v4629 = vld [vmem:[%s4575 + $0xf9] sm:$0xff]
        %v4630 = vld [vmem:[%s4575 + $0x109] sm:$0xff]
        %v4631 = vld [vmem:[%s4575 + $0x111] sm:$0xff]
        %v4632 = vld [vmem:[%s4575 + $0x121] sm:$0xff]
        %v4633 = vld [vmem:[%s4575 + $0x129] sm:$0xff]
        %v4634 = vld [vmem:[%s4575 + $0x139] sm:$0xff]
        %v4635 = vld [vmem:[%s4575 + $0x141] sm:$0xff]
        %v4636 = vld [vmem:[%s4575 + $0x151] sm:$0xff]
        %v4637 = vld [vmem:[%s4575 + $0x159] sm:$0xff]
        %v4638 = vld [vmem:[%s4575 + $0x169] sm:$0xff]
        %v4639 = vld [vmem:[%s4575 + $0x171] sm:$0xff]
        %v4640 = vld [vmem:[%s4575 + $0x2] sm:$0xff]
        %v4641 = vld [vmem:[%s4575 + $0xa] sm:$0xff]
        %v4642 = vld [vmem:[%s4575 + $0x1a] sm:$0xff]
        %v4643 = vld [vmem:[%s4575 + $0x22] sm:$0xff]
        %v4644 = vld [vmem:[%s4575 + $0x32] sm:$0xff]
        %v4645 = vld [vmem:[%s4575 + $0x3a] sm:$0xff]
        %v4646 = vld [vmem:[%s4575 + $0x4a] sm:$0xff]
        %v4647 = vld [vmem:[%s4575 + $0x52] sm:$0xff]
        %v4648 = vld [vmem:[%s4575 + $0x62] sm:$0xff]
        %v4649 = vld [vmem:[%s4575 + $0x6a] sm:$0xff]
        %v4650 = vld [vmem:[%s4575 + $0x7a] sm:$0xff]
        %v4651 = vld [vmem:[%s4575 + $0x82] sm:$0xff]
        %v4652 = vld [vmem:[%s4575 + $0x92] sm:$0xff]
        %v4653 = vld [vmem:[%s4575 + $0x9a] sm:$0xff]
        %v4654 = vld [vmem:[%s4575 + $0xaa] sm:$0xff]
        %v4655 = vld [vmem:[%s4575 + $0xb2] sm:$0xff]
        %v4656 = vld [vmem:[%s4575 + $0xc2] sm:$0xff]
        %v4657 = vld [vmem:[%s4575 + $0xca] sm:$0xff]
        %v4658 = vld [vmem:[%s4575 + $0xda] sm:$0xff]
        %v4659 = vld [vmem:[%s4575 + $0xe2] sm:$0xff]
        %v4660 = vld [vmem:[%s4575 + $0xf2] sm:$0xff]
        %v4661 = vld [vmem:[%s4575 + $0xfa] sm:$0xff]
        %v4662 = vld [vmem:[%s4575 + $0x10a] sm:$0xff]
        %v4663 = vld [vmem:[%s4575 + $0x112] sm:$0xff]
        %v4664 = vld [vmem:[%s4575 + $0x122] sm:$0xff]
        %v4665 = vld [vmem:[%s4575 + $0x12a] sm:$0xff]
        %v4666 = vld [vmem:[%s4575 + $0x13a] sm:$0xff]
        %v4667 = vld [vmem:[%s4575 + $0x142] sm:$0xff]
        %v4668 = vld [vmem:[%s4575 + $0x152] sm:$0xff]
        %v4669 = vld [vmem:[%s4575 + $0x15a] sm:$0xff]
        %v4670 = vld [vmem:[%s4575 + $0x16a] sm:$0xff]
        %v4671 = vld [vmem:[%s4575 + $0x172] sm:$0xff]
        %v4672 = vpack.c.bf16 %v4384, %v4383
        %v4673 = vpack.c.bf16 %v4416, %v4415
        %v4674 = vpack.c.bf16 %v4448, %v4447
        %v4675 = vpack.c.bf16 %v4480, %v4479
        %v4676 = vpack.c.bf16 %v4512, %v4511
        %v4677 = vpack.c.bf16 %v4544, %v4543
        %v4678 = vpack.c.bf16 %v4577, %v4576
        %v4679 = vpack.c.bf16 %v4609, %v4608
        %v4680 = vpack.c.bf16 %v4641, %v4640
        %v4681 = vpack.c.bf16 %v4386, %v4385
        %v4682 = vpack.c.bf16 %v4418, %v4417
        %v4683 = vpack.c.bf16 %v4450, %v4449
        %v4684 = vpack.c.bf16 %v4482, %v4481
        %v4685 = vpack.c.bf16 %v4514, %v4513
        %v4686 = vpack.c.bf16 %v4546, %v4545
        %v4687 = vpack.c.bf16 %v4579, %v4578
        %v4688 = vpack.c.bf16 %v4611, %v4610
        %v4689 = vpack.c.bf16 %v4643, %v4642
        %v4690 = vpack.c.bf16 %v4388, %v4387
        %v4691 = vpack.c.bf16 %v4420, %v4419
        %v4692 = vpack.c.bf16 %v4452, %v4451
        %v4693 = vpack.c.bf16 %v4484, %v4483
        %v4694 = vpack.c.bf16 %v4516, %v4515
        %v4695 = vpack.c.bf16 %v4548, %v4547
        %v4696 = vpack.c.bf16 %v4581, %v4580
        %v4697 = vpack.c.bf16 %v4613, %v4612
        %v4698 = vpack.c.bf16 %v4645, %v4644
        %v4699 = vpack.c.bf16 %v4390, %v4389
        %v4700 = vpack.c.bf16 %v4422, %v4421
        %v4701 = vpack.c.bf16 %v4454, %v4453
        %v4702 = vpack.c.bf16 %v4486, %v4485
        %v4703 = vpack.c.bf16 %v4518, %v4517
        %v4704 = vpack.c.bf16 %v4550, %v4549
        %v4705 = vpack.c.bf16 %v4583, %v4582
        %v4706 = vpack.c.bf16 %v4615, %v4614
        %v4707 = vpack.c.bf16 %v4647, %v4646
        %v4708 = vpack.c.bf16 %v4392, %v4391
        %v4709 = vpack.c.bf16 %v4424, %v4423
        %v4710 = vpack.c.bf16 %v4456, %v4455
        %v4711 = vpack.c.bf16 %v4488, %v4487
        %v4712 = vpack.c.bf16 %v4520, %v4519
        %v4713 = vpack.c.bf16 %v4552, %v4551
        %v4714 = vpack.c.bf16 %v4585, %v4584
        %v4715 = vpack.c.bf16 %v4617, %v4616
        %v4716 = vpack.c.bf16 %v4649, %v4648
        %v4717 = vpack.c.bf16 %v4394, %v4393
        %v4718 = vpack.c.bf16 %v4426, %v4425
        %v4719 = vpack.c.bf16 %v4458, %v4457
        %v4720 = vpack.c.bf16 %v4490, %v4489
        %v4721 = vpack.c.bf16 %v4522, %v4521
        %v4722 = vpack.c.bf16 %v4554, %v4553
        %v4723 = vpack.c.bf16 %v4587, %v4586
        %v4724 = vpack.c.bf16 %v4619, %v4618
        %v4725 = vpack.c.bf16 %v4651, %v4650
        %v4726 = vpack.c.bf16 %v4396, %v4395
        %v4727 = vpack.c.bf16 %v4428, %v4427
        %v4728 = vpack.c.bf16 %v4460, %v4459
        %v4729 = vpack.c.bf16 %v4492, %v4491
        %v4730 = vpack.c.bf16 %v4524, %v4523
        %v4731 = vpack.c.bf16 %v4556, %v4555
        %v4732 = vpack.c.bf16 %v4589, %v4588
        %v4733 = vpack.c.bf16 %v4621, %v4620
        %v4734 = vpack.c.bf16 %v4653, %v4652
        %v4735 = vpack.c.bf16 %v4398, %v4397
        %v4736 = vpack.c.bf16 %v4430, %v4429
        %v4737 = vpack.c.bf16 %v4462, %v4461
        %v4738 = vpack.c.bf16 %v4494, %v4493
        %v4739 = vpack.c.bf16 %v4526, %v4525
        %v4740 = vpack.c.bf16 %v4558, %v4557
        %v4741 = vpack.c.bf16 %v4591, %v4590
        %v4742 = vpack.c.bf16 %v4623, %v4622
        %v4743 = vpack.c.bf16 %v4655, %v4654
        %v4744 = vpack.c.bf16 %v4400, %v4399
        %v4745 = vpack.c.bf16 %v4432, %v4431
        %v4746 = vpack.c.bf16 %v4464, %v4463
        %v4747 = vpack.c.bf16 %v4496, %v4495
        %v4748 = vpack.c.bf16 %v4528, %v4527
        %v4749 = vpack.c.bf16 %v4560, %v4559
        %v4750 = vpack.c.bf16 %v4593, %v4592
        %v4751 = vpack.c.bf16 %v4625, %v4624
        %v4752 = vpack.c.bf16 %v4657, %v4656
        %v4753 = vpack.c.bf16 %v4402, %v4401
        %v4754 = vpack.c.bf16 %v4434, %v4433
        %v4755 = vpack.c.bf16 %v4466, %v4465
        %v4756 = vpack.c.bf16 %v4498, %v4497
        %v4757 = vpack.c.bf16 %v4530, %v4529
        %v4758 = vpack.c.bf16 %v4562, %v4561
        %v4759 = vpack.c.bf16 %v4595, %v4594
        %v4760 = vpack.c.bf16 %v4627, %v4626
        %v4761 = vpack.c.bf16 %v4659, %v4658
        %v4762 = vpack.c.bf16 %v4404, %v4403
        %v4763 = vpack.c.bf16 %v4436, %v4435
        %v4764 = vpack.c.bf16 %v4468, %v4467
        %v4765 = vpack.c.bf16 %v4500, %v4499
        %v4766 = vpack.c.bf16 %v4532, %v4531
        %v4767 = vpack.c.bf16 %v4564, %v4563
        %v4768 = vpack.c.bf16 %v4597, %v4596
        %v4769 = vpack.c.bf16 %v4629, %v4628
        %v4770 = vpack.c.bf16 %v4661, %v4660
        %v4771 = vpack.c.bf16 %v4406, %v4405
        %v4772 = vpack.c.bf16 %v4438, %v4437
        %v4773 = vpack.c.bf16 %v4470, %v4469
        %v4774 = vpack.c.bf16 %v4502, %v4501
        %v4775 = vpack.c.bf16 %v4534, %v4533
        %v4776 = vpack.c.bf16 %v4566, %v4565
        %v4777 = vpack.c.bf16 %v4599, %v4598
        %v4778 = vpack.c.bf16 %v4631, %v4630
        %v4779 = vpack.c.bf16 %v4663, %v4662
        %v4780 = vpack.c.bf16 %v4408, %v4407
        %v4781 = vpack.c.bf16 %v4440, %v4439
        %v4782 = vpack.c.bf16 %v4472, %v4471
        %v4783 = vpack.c.bf16 %v4504, %v4503
        %v4784 = vpack.c.bf16 %v4536, %v4535
        %v4785 = vpack.c.bf16 %v4568, %v4567
        %v4786 = vpack.c.bf16 %v4601, %v4600
        %v4787 = vpack.c.bf16 %v4633, %v4632
        %v4788 = vpack.c.bf16 %v4665, %v4664
        %v4789 = vpack.c.bf16 %v4410, %v4409
        %v4790 = vpack.c.bf16 %v4442, %v4441
        %v4791 = vpack.c.bf16 %v4474, %v4473
        %v4792 = vpack.c.bf16 %v4506, %v4505
        %v4793 = vpack.c.bf16 %v4538, %v4537
        %v4794 = vpack.c.bf16 %v4570, %v4569
        %v4795 = vpack.c.bf16 %v4603, %v4602
        %v4796 = vpack.c.bf16 %v4635, %v4634
        %v4797 = vpack.c.bf16 %v4667, %v4666
        %v4798 = vpack.c.bf16 %v4412, %v4411
        %v4799 = vpack.c.bf16 %v4444, %v4443
        %v4800 = vpack.c.bf16 %v4476, %v4475
        %v4801 = vpack.c.bf16 %v4508, %v4507
        %v4802 = vpack.c.bf16 %v4540, %v4539
        %v4803 = vpack.c.bf16 %v4572, %v4571
        %v4804 = vpack.c.bf16 %v4605, %v4604
        %v4805 = vpack.c.bf16 %v4637, %v4636
        %v4806 = vpack.c.bf16 %v4669, %v4668
        %v4807 = vpack.c.bf16 %v4414, %v4413
        %v4808 = vpack.c.bf16 %v4446, %v4445
        %v4809 = vpack.c.bf16 %v4478, %v4477
        %v4810 = vpack.c.bf16 %v4510, %v4509
        %v4811 = vpack.c.bf16 %v4542, %v4541
        %v4812 = vpack.c.bf16 %v4574, %v4573
        %v4813 = vpack.c.bf16 %v4607, %v4606
        %v4814 = vpack.c.bf16 %v4639, %v4638
        %v4815 = vpack.c.bf16 %v4671, %v4670
        %v4816 = vld [vmem:[#allocation6] sm:$0xf]
        %v4817 = vld [vmem:[#allocation6 + $0x4] sm:$0xf]
        %v4818 = vld [vmem:[#allocation6 + $0x8] sm:$0xf]
        %v4819 = vld [vmem:[#allocation6 + $0xc] sm:$0xf]
        %v4820 = vld [vmem:[#allocation6 + $0x10] sm:$0xf]
        %v4821 = vld [vmem:[#allocation6 + $0x14] sm:$0xf]
        %v4822 = vld [vmem:[#allocation6 + $0x18] sm:$0xf]
        %v4823 = vld [vmem:[#allocation6 + $0x1c] sm:$0xf]
        %v4824 = vld [vmem:[#allocation6 + $0x20] sm:$0xf]
        %v4825 = vld [vmem:[#allocation6 + $0x24] sm:$0xf]
        %v4826 = vld [vmem:[#allocation6 + $0x28] sm:$0xf]
        %v4827 = vld [vmem:[#allocation6 + $0x2c] sm:$0xf]
        %v4828 = vld [vmem:[#allocation6 + $0x30] sm:$0xf]
        %v4829 = vld [vmem:[#allocation6 + $0x34] sm:$0xf]
        %v4830 = vld [vmem:[#allocation6 + $0x38] sm:$0xf]
        %v4831 = vld [vmem:[#allocation6 + $0x3c] sm:$0xf]
        %v4832 = vld [vmem:[#allocation6 + $0x40] sm:$0xf]
        %v4833 = vld [vmem:[#allocation6 + $0x44] sm:$0xf]
        %v4834 = vld [vmem:[#allocation6 + $0x48] sm:$0xf]
        %v4835 = vld [vmem:[#allocation6 + $0x4c] sm:$0xf]
        %v4836 = vld [vmem:[#allocation6 + $0x50] sm:$0xf]
        %v4837 = vld [vmem:[#allocation6 + $0x54] sm:$0xf]
        %v4838 = vld [vmem:[#allocation6 + $0x58] sm:$0xf]
        %v4839 = vld [vmem:[#allocation6 + $0x5c] sm:$0xf]
        %v4840 = vld [vmem:[#allocation6 + $0x60] sm:$0xf]
        %v4841 = vld [vmem:[#allocation6 + $0x64] sm:$0xf]
        %v4842 = vld [vmem:[#allocation6 + $0x68] sm:$0xf]
        %v4843 = vld [vmem:[#allocation6 + $0x6c] sm:$0xf]
        %v4844 = vld [vmem:[#allocation6 + $0x70] sm:$0xf]
        %v4845 = vld [vmem:[#allocation6 + $0x74] sm:$0xf]
        %v4846 = vld [vmem:[#allocation6 + $0x78] sm:$0xf]
        %v4847 = vld [vmem:[#allocation6 + $0x7c] sm:$0xf]
        %v4848 = vld [vmem:[#allocation6 + $0x80] sm:$0xf]
        %v4849 = vld [vmem:[#allocation6 + $0x84] sm:$0xf]
        %v4850 = vld [vmem:[#allocation6 + $0x88] sm:$0xf]
        %v4851 = vld [vmem:[#allocation6 + $0x8c] sm:$0xf]
        %v4852 = vld [vmem:[#allocation6 + $0x90] sm:$0xf]
        %v4853 = vld [vmem:[#allocation6 + $0x94] sm:$0xf]
        %v4854 = vld [vmem:[#allocation6 + $0x98] sm:$0xf]
        %v4855 = vld [vmem:[#allocation6 + $0x9c] sm:$0xf]
        %v4856 = vld [vmem:[#allocation6 + $0xa0] sm:$0xf]
        %v4857 = vld [vmem:[#allocation6 + $0xa4] sm:$0xf]
        %v4858 = vld [vmem:[#allocation6 + $0xa8] sm:$0xf]
        %v4859 = vld [vmem:[#allocation6 + $0xac] sm:$0xf]
        %v4860 = vld [vmem:[#allocation6 + $0xb0] sm:$0xf]
        %v4861 = vld [vmem:[#allocation6 + $0xb4] sm:$0xf]
        %v4862 = vld [vmem:[#allocation6 + $0xb8] sm:$0xf]
        %v4863 = vld [vmem:[#allocation6 + $0xbc] sm:$0xf]
        %v4864 = vld [vmem:[#allocation6 + $0xc0] sm:$0xf]
        %v4865 = vld [vmem:[#allocation6 + $0xc4] sm:$0xf]
        %v4866 = vld [vmem:[#allocation6 + $0xc8] sm:$0xf]
        %v4867 = vld [vmem:[#allocation6 + $0xcc] sm:$0xf]
        %v4868 = vld [vmem:[#allocation6 + $0xd0] sm:$0xf]
        %v4869 = vld [vmem:[#allocation6 + $0xd4] sm:$0xf]
        %v4870 = vld [vmem:[#allocation6 + $0xd8] sm:$0xf]
        %v4871 = vld [vmem:[#allocation6 + $0xdc] sm:$0xf]
        %v4872 = vld [vmem:[#allocation6 + $0xe0] sm:$0xf]
        %v4873 = vld [vmem:[#allocation6 + $0xe4] sm:$0xf]
        %v4874 = vld [vmem:[#allocation6 + $0xe8] sm:$0xf]
        %v4875 = vld [vmem:[#allocation6 + $0xec] sm:$0xf]
        %v4876 = vld [vmem:[#allocation6 + $0xf0] sm:$0xf]
        %v4877 = vld [vmem:[#allocation6 + $0xf4] sm:$0xf]
        %v4878 = vld [vmem:[#allocation6 + $0xf8] sm:$0xf]
        %v4879 = vld [vmem:[#allocation6 + $0xfc] sm:$0xf]
        %v4880 = vld [vmem:[#allocation6 + $0x100] sm:$0xf]
        %v4881 = vld [vmem:[#allocation6 + $0x104] sm:$0xf]
        %v4882 = vld [vmem:[#allocation6 + $0x108] sm:$0xf]
        %v4883 = vld [vmem:[#allocation6 + $0x10c] sm:$0xf]
        %v4884 = vld [vmem:[#allocation6 + $0x110] sm:$0xf]
        %v4885 = vld [vmem:[#allocation6 + $0x114] sm:$0xf]
        %v4886 = vld [vmem:[#allocation6 + $0x118] sm:$0xf]
        %v4887 = vld [vmem:[#allocation6 + $0x11c] sm:$0xf]
        %v4888 = vld [vmem:[#allocation6 + $0x120] sm:$0xf]
        %v4889 = vld [vmem:[#allocation6 + $0x124] sm:$0xf]
        %v4890 = vld [vmem:[#allocation6 + $0x128] sm:$0xf]
        %v4891 = vld [vmem:[#allocation6 + $0x12c] sm:$0xf]
        %v4892 = vld [vmem:[#allocation6 + $0x130] sm:$0xf]
        %v4893 = vld [vmem:[#allocation6 + $0x134] sm:$0xf]
        %v4894 = vld [vmem:[#allocation6 + $0x138] sm:$0xf]
        %v4895 = vld [vmem:[#allocation6 + $0x13c] sm:$0xf]
        %v4896 = vld [vmem:[#allocation6 + $0x140] sm:$0xf]
        %v4897 = vld [vmem:[#allocation6 + $0x144] sm:$0xf]
        %v4898 = vld [vmem:[#allocation6 + $0x148] sm:$0xf]
        %v4899 = vld [vmem:[#allocation6 + $0x14c] sm:$0xf]
        %v4900 = vld [vmem:[#allocation6 + $0x150] sm:$0xf]
        %v4901 = vld [vmem:[#allocation6 + $0x154] sm:$0xf]
        %v4902 = vld [vmem:[#allocation6 + $0x158] sm:$0xf]
        %v4903 = vld [vmem:[#allocation6 + $0x15c] sm:$0xf]
        %v4904 = vld [vmem:[#allocation6 + $0x160] sm:$0xf]
        %v4905 = vld [vmem:[#allocation6 + $0x164] sm:$0xf]
        %v4906 = vld [vmem:[#allocation6 + $0x168] sm:$0xf]
        %v4907 = vld [vmem:[#allocation6 + $0x16c] sm:$0xf]
        %v4908 = vld [vmem:[#allocation6 + $0x170] sm:$0xf]
        %v4909 = vld [vmem:[#allocation6 + $0x174] sm:$0xf]
        %v4910 = vld [vmem:[#allocation6 + $0x178] sm:$0xf]
        %v4911 = vld [vmem:[#allocation6 + $0x17c] sm:$0xf]
        %v4912 = vld [vmem:[#allocation6 + $0x180] sm:$0xf]
        %v4913 = vld [vmem:[#allocation6 + $0x184] sm:$0xf]
        %v4914 = vld [vmem:[#allocation6 + $0x188] sm:$0xf]
        %v4915 = vld [vmem:[#allocation6 + $0x18c] sm:$0xf]
        %v4916 = vld [vmem:[#allocation6 + $0x190] sm:$0xf]
        %v4917 = vld [vmem:[#allocation6 + $0x194] sm:$0xf]
        %v4918 = vld [vmem:[#allocation6 + $0x198] sm:$0xf]
        %v4919 = vld [vmem:[#allocation6 + $0x19c] sm:$0xf]
        %v4920 = vld [vmem:[#allocation6 + $0x1a0] sm:$0xf]
        %v4921 = vld [vmem:[#allocation6 + $0x1a4] sm:$0xf]
        %v4922 = vld [vmem:[#allocation6 + $0x1a8] sm:$0xf]
        %v4923 = vld [vmem:[#allocation6 + $0x1ac] sm:$0xf]
        %v4924 = vld [vmem:[#allocation6 + $0x1b0] sm:$0xf]
        %v4925 = vld [vmem:[#allocation6 + $0x1b4] sm:$0xf]
        %v4926 = vld [vmem:[#allocation6 + $0x1b8] sm:$0xf]
        %v4927 = vld [vmem:[#allocation6 + $0x1bc] sm:$0xf]
        %v4928 = vld [vmem:[#allocation6 + $0x1c0] sm:$0xf]
        %v4929 = vld [vmem:[#allocation6 + $0x1c4] sm:$0xf]
        %v4930 = vld [vmem:[#allocation6 + $0x1c8] sm:$0xf]
        %v4931 = vld [vmem:[#allocation6 + $0x1cc] sm:$0xf]
        %v4932 = vld [vmem:[#allocation6 + $0x1d0] sm:$0xf]
        %v4933 = vld [vmem:[#allocation6 + $0x1d4] sm:$0xf]
        %v4934 = vld [vmem:[#allocation6 + $0x1d8] sm:$0xf]
        %v4935 = vld [vmem:[#allocation6 + $0x1dc] sm:$0xf]
        %v4936 = vld [vmem:[#allocation6 + $0x1e0] sm:$0xf]
        %v4937 = vld [vmem:[#allocation6 + $0x1e4] sm:$0xf]
        %v4938 = vld [vmem:[#allocation6 + $0x1e8] sm:$0xf]
        %v4939 = vld [vmem:[#allocation6 + $0x1ec] sm:$0xf]
        %v4940 = vld [vmem:[#allocation6 + $0x1f0] sm:$0xf]
        %v4941 = vld [vmem:[#allocation6 + $0x1f4] sm:$0xf]
        %v4942 = vld [vmem:[#allocation6 + $0x1f8] sm:$0xf]
        %v4943 = vld [vmem:[#allocation6 + $0x1fc] sm:$0xf]
        %v4944 = vld [vmem:[#allocation6 + $0x200] sm:$0xf]
        %v4945 = vld [vmem:[#allocation6 + $0x204] sm:$0xf]
        %v4946 = vld [vmem:[#allocation6 + $0x208] sm:$0xf]
        %v4947 = vld [vmem:[#allocation6 + $0x20c] sm:$0xf]
        %v4948 = vld [vmem:[#allocation6 + $0x210] sm:$0xf]
        %v4949 = vld [vmem:[#allocation6 + $0x214] sm:$0xf]
        %v4950 = vld [vmem:[#allocation6 + $0x218] sm:$0xf]
        %v4951 = vld [vmem:[#allocation6 + $0x21c] sm:$0xf]
        %v4952 = vld [vmem:[#allocation6 + $0x220] sm:$0xf]
        %v4953 = vld [vmem:[#allocation6 + $0x224] sm:$0xf]
        %v4954 = vld [vmem:[#allocation6 + $0x228] sm:$0xf]
        %v4955 = vld [vmem:[#allocation6 + $0x22c] sm:$0xf]
        %v4956 = vld [vmem:[#allocation6 + $0x230] sm:$0xf]
        %v4957 = vld [vmem:[#allocation6 + $0x234] sm:$0xf]
        %v4958 = vld [vmem:[#allocation6 + $0x238] sm:$0xf]
        %v4959 = vld [vmem:[#allocation6 + $0x23c] sm:$0xf]
        %v5104 = vunpack.c.l.b16 %v4816
        %v5105 = vunpack.c.l.b16 %v4817
        %v5106 = vunpack.c.l.b16 %v4818
        %v5107 = vunpack.c.l.b16 %v4819
        %v5108 = vunpack.c.l.b16 %v4820
        %v5109 = vunpack.c.l.b16 %v4821
        %v5110 = vunpack.c.l.b16 %v4822
        %v5111 = vunpack.c.l.b16 %v4823
        %v5112 = vunpack.c.l.b16 %v4824
        %v5113 = vunpack.c.l.b16 %v4825
        %v5114 = vunpack.c.l.b16 %v4826
        %v5115 = vunpack.c.l.b16 %v4827
        %v5116 = vunpack.c.l.b16 %v4828
        %v5117 = vunpack.c.l.b16 %v4829
        %v5118 = vunpack.c.l.b16 %v4830
        %v5119 = vunpack.c.l.b16 %v4831
        %v5120 = vunpack.c.l.b16 %v4832
        %v5121 = vunpack.c.l.b16 %v4833
        %v5122 = vunpack.c.l.b16 %v4834
        %v5123 = vunpack.c.l.b16 %v4835
        %v5124 = vunpack.c.l.b16 %v4836
        %v5125 = vunpack.c.l.b16 %v4837
        %v5126 = vunpack.c.l.b16 %v4838
        %v5127 = vunpack.c.l.b16 %v4839
        %v5128 = vunpack.c.l.b16 %v4840
        %v5129 = vunpack.c.l.b16 %v4841
        %v5130 = vunpack.c.l.b16 %v4842
        %v5131 = vunpack.c.l.b16 %v4843
        %v5132 = vunpack.c.l.b16 %v4844
        %v5133 = vunpack.c.l.b16 %v4845
        %v5134 = vunpack.c.l.b16 %v4846
        %v5135 = vunpack.c.l.b16 %v4847
        %v5136 = vunpack.c.l.b16 %v4848
        %v5137 = vunpack.c.l.b16 %v4849
        %v5138 = vunpack.c.l.b16 %v4850
        %v5139 = vunpack.c.l.b16 %v4851
        %v5140 = vunpack.c.l.b16 %v4852
        %v5141 = vunpack.c.l.b16 %v4853
        %v5142 = vunpack.c.l.b16 %v4854
        %v5143 = vunpack.c.l.b16 %v4855
        %v5144 = vunpack.c.l.b16 %v4856
        %v5145 = vunpack.c.l.b16 %v4857
        %v5146 = vunpack.c.l.b16 %v4858
        %v5147 = vunpack.c.l.b16 %v4859
        %v5148 = vunpack.c.l.b16 %v4860
        %v5149 = vunpack.c.l.b16 %v4861
        %v5150 = vunpack.c.l.b16 %v4862
        %v5151 = vunpack.c.l.b16 %v4863
        %v5152 = vunpack.c.l.b16 %v4864
        %v5153 = vunpack.c.l.b16 %v4865
        %v5154 = vunpack.c.l.b16 %v4866
        %v5155 = vunpack.c.l.b16 %v4867
        %v5156 = vunpack.c.l.b16 %v4868
        %v5157 = vunpack.c.l.b16 %v4869
        %v5158 = vunpack.c.l.b16 %v4870
        %v5159 = vunpack.c.l.b16 %v4871
        %v5160 = vunpack.c.l.b16 %v4872
        %v5161 = vunpack.c.l.b16 %v4873
        %v5162 = vunpack.c.l.b16 %v4874
        %v5163 = vunpack.c.l.b16 %v4875
        %v5164 = vunpack.c.l.b16 %v4876
        %v5165 = vunpack.c.l.b16 %v4877
        %v5166 = vunpack.c.l.b16 %v4878
        %v5167 = vunpack.c.l.b16 %v4879
        %v5168 = vunpack.c.l.b16 %v4880
        %v5169 = vunpack.c.l.b16 %v4881
        %v5170 = vunpack.c.l.b16 %v4882
        %v5171 = vunpack.c.l.b16 %v4883
        %v5172 = vunpack.c.l.b16 %v4884
        %v5173 = vunpack.c.l.b16 %v4885
        %v5174 = vunpack.c.l.b16 %v4886
        %v5175 = vunpack.c.l.b16 %v4887
        %v5176 = vunpack.c.l.b16 %v4888
        %v5177 = vunpack.c.l.b16 %v4889
        %v5178 = vunpack.c.l.b16 %v4890
        %v5179 = vunpack.c.l.b16 %v4891
        %v5180 = vunpack.c.l.b16 %v4892
        %v5181 = vunpack.c.l.b16 %v4893
        %v5182 = vunpack.c.l.b16 %v4894
        %v5183 = vunpack.c.l.b16 %v4895
        %v5184 = vunpack.c.l.b16 %v4896
        %v5185 = vunpack.c.l.b16 %v4897
        %v5186 = vunpack.c.l.b16 %v4898
        %v5187 = vunpack.c.l.b16 %v4899
        %v5188 = vunpack.c.l.b16 %v4900
        %v5189 = vunpack.c.l.b16 %v4901
        %v5190 = vunpack.c.l.b16 %v4902
        %v5191 = vunpack.c.l.b16 %v4903
        %v5192 = vunpack.c.l.b16 %v4904
        %v5193 = vunpack.c.l.b16 %v4905
        %v5194 = vunpack.c.l.b16 %v4906
        %v5195 = vunpack.c.l.b16 %v4907
        %v5196 = vunpack.c.l.b16 %v4908
        %v5197 = vunpack.c.l.b16 %v4909
        %v5198 = vunpack.c.l.b16 %v4910
        %v5199 = vunpack.c.l.b16 %v4911
        %v5200 = vunpack.c.l.b16 %v4912
        %v5201 = vunpack.c.l.b16 %v4913
        %v5202 = vunpack.c.l.b16 %v4914
        %v5203 = vunpack.c.l.b16 %v4915
        %v5204 = vunpack.c.l.b16 %v4916
        %v5205 = vunpack.c.l.b16 %v4917
        %v5206 = vunpack.c.l.b16 %v4918
        %v5207 = vunpack.c.l.b16 %v4919
        %v5208 = vunpack.c.l.b16 %v4920
        %v5209 = vunpack.c.l.b16 %v4921
        %v5210 = vunpack.c.l.b16 %v4922
        %v5211 = vunpack.c.l.b16 %v4923
        %v5212 = vunpack.c.l.b16 %v4924
        %v5213 = vunpack.c.l.b16 %v4925
        %v5214 = vunpack.c.l.b16 %v4926
        %v5215 = vunpack.c.l.b16 %v4927
        %v5216 = vunpack.c.l.b16 %v4928
        %v5217 = vunpack.c.l.b16 %v4929
        %v5218 = vunpack.c.l.b16 %v4930
        %v5219 = vunpack.c.l.b16 %v4931
        %v5220 = vunpack.c.l.b16 %v4932
        %v5221 = vunpack.c.l.b16 %v4933
        %v5222 = vunpack.c.l.b16 %v4934
        %v5223 = vunpack.c.l.b16 %v4935
        %v5224 = vunpack.c.l.b16 %v4936
        %v5225 = vunpack.c.l.b16 %v4937
        %v5226 = vunpack.c.l.b16 %v4938
        %v5227 = vunpack.c.l.b16 %v4939
        %v5228 = vunpack.c.l.b16 %v4940
        %v5229 = vunpack.c.l.b16 %v4941
        %v5230 = vunpack.c.l.b16 %v4942
        %v5231 = vunpack.c.l.b16 %v4943
        %v5232 = vunpack.c.l.b16 %v4944
        %v5233 = vunpack.c.l.b16 %v4945
        %v5234 = vunpack.c.l.b16 %v4946
        %v5235 = vunpack.c.l.b16 %v4947
        %v5236 = vunpack.c.l.b16 %v4948
        %v5237 = vunpack.c.l.b16 %v4949
        %v5238 = vunpack.c.l.b16 %v4950
        %v5239 = vunpack.c.l.b16 %v4951
        %v5240 = vunpack.c.l.b16 %v4952
        %v5241 = vunpack.c.l.b16 %v4953
        %v5242 = vunpack.c.l.b16 %v4954
        %v5243 = vunpack.c.l.b16 %v4955
        %v5244 = vunpack.c.l.b16 %v4956
        %v5245 = vunpack.c.l.b16 %v4957
        %v5246 = vunpack.c.l.b16 %v4958
        %v5247 = vunpack.c.l.b16 %v4959
        %v5248 = vpack.c.b16 %v5105, %v5104
        %v5249 = vpack.c.b16 %v5107, %v5106
        %v5250 = vpack.c.b16 %v5109, %v5108
        %v5251 = vpack.c.b16 %v5111, %v5110
        %v5252 = vpack.c.b16 %v5113, %v5112
        %v5253 = vpack.c.b16 %v5115, %v5114
        %v5254 = vpack.c.b16 %v5117, %v5116
        %v5255 = vpack.c.b16 %v5119, %v5118
        %v5256 = vpack.c.b16 %v5121, %v5120
        %v5257 = vpack.c.b16 %v5123, %v5122
        %v5258 = vpack.c.b16 %v5125, %v5124
        %v5259 = vpack.c.b16 %v5127, %v5126
        %v5260 = vpack.c.b16 %v5129, %v5128
        %v5261 = vpack.c.b16 %v5131, %v5130
        %v5262 = vpack.c.b16 %v5133, %v5132
        %v5263 = vpack.c.b16 %v5135, %v5134
        %v5264 = vpack.c.b16 %v5137, %v5136
        %v5265 = vpack.c.b16 %v5139, %v5138
        %v5266 = vpack.c.b16 %v5141, %v5140
        %v5267 = vpack.c.b16 %v5143, %v5142
        %v5268 = vpack.c.b16 %v5145, %v5144
        %v5269 = vpack.c.b16 %v5147, %v5146
        %v5270 = vpack.c.b16 %v5149, %v5148
        %v5271 = vpack.c.b16 %v5151, %v5150
        %v5272 = vpack.c.b16 %v5153, %v5152
        %v5273 = vpack.c.b16 %v5155, %v5154
        %v5274 = vpack.c.b16 %v5157, %v5156
        %v5275 = vpack.c.b16 %v5159, %v5158
        %v5276 = vpack.c.b16 %v5161, %v5160
        %v5277 = vpack.c.b16 %v5163, %v5162
        %v5278 = vpack.c.b16 %v5165, %v5164
        %v5279 = vpack.c.b16 %v5167, %v5166
        %v5280 = vpack.c.b16 %v5169, %v5168
        %v5281 = vpack.c.b16 %v5171, %v5170
        %v5282 = vpack.c.b16 %v5173, %v5172
        %v5283 = vpack.c.b16 %v5175, %v5174
        %v5284 = vpack.c.b16 %v5177, %v5176
        %v5285 = vpack.c.b16 %v5179, %v5178
        %v5286 = vpack.c.b16 %v5181, %v5180
        %v5287 = vpack.c.b16 %v5183, %v5182
        %v5288 = vpack.c.b16 %v5185, %v5184
        %v5289 = vpack.c.b16 %v5187, %v5186
        %v5290 = vpack.c.b16 %v5189, %v5188
        %v5291 = vpack.c.b16 %v5191, %v5190
        %v5292 = vpack.c.b16 %v5193, %v5192
        %v5293 = vpack.c.b16 %v5195, %v5194
        %v5294 = vpack.c.b16 %v5197, %v5196
        %v5295 = vpack.c.b16 %v5199, %v5198
        %v5296 = vpack.c.b16 %v5201, %v5200
        %v5297 = vpack.c.b16 %v5203, %v5202
        %v5298 = vpack.c.b16 %v5205, %v5204
        %v5299 = vpack.c.b16 %v5207, %v5206
        %v5300 = vpack.c.b16 %v5209, %v5208
        %v5301 = vpack.c.b16 %v5211, %v5210
        %v5302 = vpack.c.b16 %v5213, %v5212
        %v5303 = vpack.c.b16 %v5215, %v5214
        %v5304 = vpack.c.b16 %v5217, %v5216
        %v5305 = vpack.c.b16 %v5219, %v5218
        %v5306 = vpack.c.b16 %v5221, %v5220
        %v5307 = vpack.c.b16 %v5223, %v5222
        %v5308 = vpack.c.b16 %v5225, %v5224
        %v5309 = vpack.c.b16 %v5227, %v5226
        %v5310 = vpack.c.b16 %v5229, %v5228
        %v5311 = vpack.c.b16 %v5231, %v5230
        %v5312 = vpack.c.b16 %v5233, %v5232
        %v5313 = vpack.c.b16 %v5235, %v5234
        %v5314 = vpack.c.b16 %v5237, %v5236
        %v5315 = vpack.c.b16 %v5239, %v5238
        %v5316 = vpack.c.b16 %v5241, %v5240
        %v5317 = vpack.c.b16 %v5243, %v5242
        %v5318 = vpack.c.b16 %v5245, %v5244
        %v5319 = vpack.c.b16 %v5247, %v5246
        %5392 = vmatprep.subr.bf16.mxu0 0
        %5393 = vmatpush1.bf16.msra.mxu0 %v5255
        %5394 = vmatprep.subr.bf16.mxu0 0
        %5395 = vmatpush1.bf16.msra.mxu0 %v5254
        %5396 = vmatprep.subr.bf16.mxu0 0
        %5397 = vmatpush1.bf16.msra.mxu0 %v5253
        %5398 = vmatprep.subr.bf16.mxu0 0
        %5399 = vmatpush1.bf16.msra.mxu0 %v5252
        %5400 = vmatprep.subr.bf16.mxu0 0
        %5401 = vmatpush1.bf16.msra.mxu0 %v5251
        %5402 = vmatprep.subr.bf16.mxu0 0
        %5403 = vmatpush1.bf16.msra.mxu0 %v5250
        %5404 = vmatprep.subr.bf16.mxu0 0
        %5405 = vmatpush1.bf16.msra.mxu0 %v5249
        %5406 = vmatprep.subr.bf16.mxu0 0
        %5407 = vmatpush1.bf16.msra.mxu0 %v5248
        %5408 = vmatprep.subr.bf16.mxu0 0
        %5409 = vmatpush2.bf16.msra.mxu0 %v5263
        %5410 = vmatprep.subr.bf16.mxu0 0
        %5411 = vmatpush2.bf16.msra.mxu0 %v5262
        %5412 = vmatprep.subr.bf16.mxu0 0
        %5413 = vmatpush2.bf16.msra.mxu0 %v5261
        %5414 = vmatprep.subr.bf16.mxu0 0
        %5415 = vmatpush2.bf16.msra.mxu0 %v5260
        %5416 = vmatprep.subr.bf16.mxu0 0
        %5417 = vmatpush2.bf16.msra.mxu0 %v5259
        %5418 = vmatprep.subr.bf16.mxu0 0
        %5419 = vmatpush2.bf16.msra.mxu0 %v5258
        %5420 = vmatprep.subr.bf16.mxu0 0
        %5421 = vmatpush2.bf16.msra.mxu0 %v5257
        %5422 = vmatprep.subr.bf16.mxu0 0
        %5423 = vmatpush2.bf16.msra.mxu0 %v5256
        %5424 = vmatprep.mubr.bf16.mxu0 %v4673
        %5425 = vmatmul.mubr.bf16.gmra.mxu0 %v4672
        %v5426 = vpop.f32.mrf.mxu0
        %v5427 = vadd.f32 0.0, %v5426
        %v5428 = vpop.f32.mrf.mxu0
        %v5429 = vpop.f32.mrf.mxu0
        %v5430 = vadd.f32 0.0, %v5429
        %v5431 = vpop.f32.mrf.mxu0
        %5432 = vmatprep.mubr.bf16.mxu0 %v4682
        %5433 = vmatmul.mubr.bf16.gmra.mxu0 %v4681
        %v5434 = vpop.f32.mrf.mxu0
        %v5435 = vadd.f32 0.0, %v5434
        %v5436 = vpop.f32.mrf.mxu0
        %v5437 = vpop.f32.mrf.mxu0
        %v5438 = vadd.f32 0.0, %v5437
        %v5439 = vpop.f32.mrf.mxu0
        %5440 = vmatprep.mubr.bf16.mxu0 %v4691
        %5441 = vmatmul.mubr.bf16.gmra.mxu0 %v4690
        %v5442 = vpop.f32.mrf.mxu0
        %v5443 = vadd.f32 0.0, %v5442
        %v5444 = vpop.f32.mrf.mxu0
        %v5445 = vpop.f32.mrf.mxu0
        %v5446 = vadd.f32 0.0, %v5445
        %v5447 = vpop.f32.mrf.mxu0
        %5448 = vmatprep.mubr.bf16.mxu0 %v4700
        %5449 = vmatmul.mubr.bf16.gmra.mxu0 %v4699
        %v5450 = vpop.f32.mrf.mxu0
        %v5451 = vadd.f32 0.0, %v5450
        %v5452 = vpop.f32.mrf.mxu0
        %v5453 = vpop.f32.mrf.mxu0
        %v5454 = vadd.f32 0.0, %v5453
        %v5455 = vpop.f32.mrf.mxu0
        %5456 = vmatprep.mubr.bf16.mxu0 %v4709
        %5457 = vmatmul.mubr.bf16.gmra.mxu0 %v4708
        %v5458 = vpop.f32.mrf.mxu0
        %v5459 = vadd.f32 0.0, %v5458
        %v5460 = vpop.f32.mrf.mxu0
        %v5461 = vpop.f32.mrf.mxu0
        %v5462 = vadd.f32 0.0, %v5461
        %v5463 = vpop.f32.mrf.mxu0
        %5464 = vmatprep.mubr.bf16.mxu0 %v4718
        %5465 = vmatmul.mubr.bf16.gmra.mxu0 %v4717
        %v5466 = vpop.f32.mrf.mxu0
        %v5467 = vadd.f32 0.0, %v5466
        %v5468 = vpop.f32.mrf.mxu0
        %v5469 = vpop.f32.mrf.mxu0
        %v5470 = vadd.f32 0.0, %v5469
        %v5471 = vpop.f32.mrf.mxu0
        %5472 = vmatprep.mubr.bf16.mxu0 %v4727
        %5473 = vmatmul.mubr.bf16.gmra.mxu0 %v4726
        %v5474 = vpop.f32.mrf.mxu0
        %v5475 = vadd.f32 0.0, %v5474
        %v5476 = vpop.f32.mrf.mxu0
        %v5477 = vpop.f32.mrf.mxu0
        %v5478 = vadd.f32 0.0, %v5477
        %v5479 = vpop.f32.mrf.mxu0
        %5480 = vmatprep.mubr.bf16.mxu0 %v4736
        %5481 = vmatmul.mubr.bf16.gmra.mxu0 %v4735
        %v5482 = vpop.f32.mrf.mxu0
        %v5483 = vadd.f32 0.0, %v5482
        %v5484 = vpop.f32.mrf.mxu0
        %v5485 = vpop.f32.mrf.mxu0
        %v5486 = vadd.f32 0.0, %v5485
        %v5487 = vpop.f32.mrf.mxu0
        %5488 = vmatprep.mubr.bf16.mxu0 %v4745
        %5489 = vmatmul.mubr.bf16.gmra.mxu0 %v4744
        %v5490 = vpop.f32.mrf.mxu0
        %v5491 = vadd.f32 0.0, %v5490
        %v5492 = vpop.f32.mrf.mxu0
        %v5493 = vpop.f32.mrf.mxu0
        %v5494 = vadd.f32 0.0, %v5493
        %v5495 = vpop.f32.mrf.mxu0
        %5496 = vmatprep.mubr.bf16.mxu0 %v4754
        %5497 = vmatmul.mubr.bf16.gmra.mxu0 %v4753
        %v5498 = vpop.f32.mrf.mxu0
        %v5499 = vadd.f32 0.0, %v5498
        %v5500 = vpop.f32.mrf.mxu0
        %v5501 = vpop.f32.mrf.mxu0
        %v5502 = vadd.f32 0.0, %v5501
        %v5503 = vpop.f32.mrf.mxu0
        %5504 = vmatprep.mubr.bf16.mxu0 %v4763
        %5505 = vmatmul.mubr.bf16.gmra.mxu0 %v4762
        %v5506 = vpop.f32.mrf.mxu0
        %v5507 = vadd.f32 0.0, %v5506
        %v5508 = vpop.f32.mrf.mxu0
        %v5509 = vpop.f32.mrf.mxu0
        %v5510 = vadd.f32 0.0, %v5509
        %v5511 = vpop.f32.mrf.mxu0
        %5512 = vmatprep.mubr.bf16.mxu0 %v4772
        %5513 = vmatmul.mubr.bf16.gmra.mxu0 %v4771
        %v5514 = vpop.f32.mrf.mxu0
        %v5515 = vadd.f32 0.0, %v5514
        %v5516 = vpop.f32.mrf.mxu0
        %v5517 = vpop.f32.mrf.mxu0
        %v5518 = vadd.f32 0.0, %v5517
        %v5519 = vpop.f32.mrf.mxu0
        %5520 = vmatprep.mubr.bf16.mxu0 %v4781
        %5521 = vmatmul.mubr.bf16.gmra.mxu0 %v4780
        %v5522 = vpop.f32.mrf.mxu0
        %v5523 = vadd.f32 0.0, %v5522
        %v5524 = vpop.f32.mrf.mxu0
        %v5525 = vpop.f32.mrf.mxu0
        %v5526 = vadd.f32 0.0, %v5525
        %v5527 = vpop.f32.mrf.mxu0
        %5528 = vmatprep.mubr.bf16.mxu0 %v4790
        %5529 = vmatmul.mubr.bf16.gmra.mxu0 %v4789
        %v5530 = vpop.f32.mrf.mxu0
        %v5531 = vadd.f32 0.0, %v5530
        %v5532 = vpop.f32.mrf.mxu0
        %v5533 = vpop.f32.mrf.mxu0
        %v5534 = vadd.f32 0.0, %v5533
        %v5535 = vpop.f32.mrf.mxu0
        %5536 = vmatprep.mubr.bf16.mxu0 %v4799
        %5537 = vmatmul.mubr.bf16.gmra.mxu0 %v4798
        %v5538 = vpop.f32.mrf.mxu0
        %v5539 = vadd.f32 0.0, %v5538
        %v5540 = vpop.f32.mrf.mxu0
        %v5541 = vpop.f32.mrf.mxu0
        %v5542 = vadd.f32 0.0, %v5541
        %v5543 = vpop.f32.mrf.mxu0
        %5544 = vmatprep.mubr.bf16.mxu0 %v4808
        %5545 = vmatmul.mubr.bf16.gmra.mxu0 %v4807
        %v5546 = vpop.f32.mrf.mxu0
        %v5547 = vadd.f32 0.0, %v5546
        %v5548 = vpop.f32.mrf.mxu0
        %v5549 = vpop.f32.mrf.mxu0
        %v5550 = vadd.f32 0.0, %v5549
        %v5551 = vpop.f32.mrf.mxu0
        %5552 = vdwg.mxu0
        %5553 = vmatprep.subr.bf16.mxu0 0
        %5554 = vmatpush1.bf16.msra.mxu0 %v5271
        %5555 = vmatprep.subr.bf16.mxu0 0
        %5556 = vmatpush1.bf16.msra.mxu0 %v5270
        %5557 = vmatprep.subr.bf16.mxu0 0
        %5558 = vmatpush1.bf16.msra.mxu0 %v5269
        %5559 = vmatprep.subr.bf16.mxu0 0
        %5560 = vmatpush1.bf16.msra.mxu0 %v5268
        %5561 = vmatprep.subr.bf16.mxu0 0
        %5562 = vmatpush1.bf16.msra.mxu0 %v5267
        %5563 = vmatprep.subr.bf16.mxu0 0
        %5564 = vmatpush1.bf16.msra.mxu0 %v5266
        %5565 = vmatprep.subr.bf16.mxu0 0
        %5566 = vmatpush1.bf16.msra.mxu0 %v5265
        %5567 = vmatprep.subr.bf16.mxu0 0
        %5568 = vmatpush1.bf16.msra.mxu0 %v5264
        %5569 = vmatprep.subr.bf16.mxu0 0
        %5570 = vmatpush2.bf16.msra.mxu0 %v5279
        %5571 = vmatprep.subr.bf16.mxu0 0
        %5572 = vmatpush2.bf16.msra.mxu0 %v5278
        %5573 = vmatprep.subr.bf16.mxu0 0
        %5574 = vmatpush2.bf16.msra.mxu0 %v5277
        %5575 = vmatprep.subr.bf16.mxu0 0
        %5576 = vmatpush2.bf16.msra.mxu0 %v5276
        %5577 = vmatprep.subr.bf16.mxu0 0
        %5578 = vmatpush2.bf16.msra.mxu0 %v5275
        %5579 = vmatprep.subr.bf16.mxu0 0
        %5580 = vmatpush2.bf16.msra.mxu0 %v5274
        %5581 = vmatprep.subr.bf16.mxu0 0
        %5582 = vmatpush2.bf16.msra.mxu0 %v5273
        %5583 = vmatprep.subr.bf16.mxu0 0
        %5584 = vmatpush2.bf16.msra.mxu0 %v5272
        %5585 = vmatprep.mubr.bf16.mxu0 %v4675
        %5586 = vmatmul.mubr.bf16.gmra.mxu0 %v4674
        %v5587 = vpop.f32.mrf.mxu0
        %v5588 = vadd.f32 %v5427, %v5587
        %v5589 = vpop.f32.mrf.mxu0
        %v5590 = vpop.f32.mrf.mxu0
        %v5591 = vadd.f32 %v5430, %v5590
        %v5592 = vpop.f32.mrf.mxu0
        %5593 = vmatprep.mubr.bf16.mxu0 %v4684
        %5594 = vmatmul.mubr.bf16.gmra.mxu0 %v4683
        %v5595 = vpop.f32.mrf.mxu0
        %v5596 = vadd.f32 %v5435, %v5595
        %v5597 = vpop.f32.mrf.mxu0
        %v5598 = vpop.f32.mrf.mxu0
        %v5599 = vadd.f32 %v5438, %v5598
        %v5600 = vpop.f32.mrf.mxu0
        %5601 = vmatprep.mubr.bf16.mxu0 %v4693
        %5602 = vmatmul.mubr.bf16.gmra.mxu0 %v4692
        %v5603 = vpop.f32.mrf.mxu0
        %v5604 = vadd.f32 %v5443, %v5603
        %v5605 = vpop.f32.mrf.mxu0
        %v5606 = vpop.f32.mrf.mxu0
        %v5607 = vadd.f32 %v5446, %v5606
        %v5608 = vpop.f32.mrf.mxu0
        %5609 = vmatprep.mubr.bf16.mxu0 %v4702
        %5610 = vmatmul.mubr.bf16.gmra.mxu0 %v4701
        %v5611 = vpop.f32.mrf.mxu0
        %v5612 = vadd.f32 %v5451, %v5611
        %v5613 = vpop.f32.mrf.mxu0
        %v5614 = vpop.f32.mrf.mxu0
        %v5615 = vadd.f32 %v5454, %v5614
        %v5616 = vpop.f32.mrf.mxu0
        %5617 = vmatprep.mubr.bf16.mxu0 %v4711
        %5618 = vmatmul.mubr.bf16.gmra.mxu0 %v4710
        %v5619 = vpop.f32.mrf.mxu0
        %v5620 = vadd.f32 %v5459, %v5619
        %v5621 = vpop.f32.mrf.mxu0
        %v5622 = vpop.f32.mrf.mxu0
        %v5623 = vadd.f32 %v5462, %v5622
        %v5624 = vpop.f32.mrf.mxu0
        %5625 = vmatprep.mubr.bf16.mxu0 %v4720
        %5626 = vmatmul.mubr.bf16.gmra.mxu0 %v4719
        %v5627 = vpop.f32.mrf.mxu0
        %v5628 = vadd.f32 %v5467, %v5627
        %v5629 = vpop.f32.mrf.mxu0
        %v5630 = vpop.f32.mrf.mxu0
        %v5631 = vadd.f32 %v5470, %v5630
        %v5632 = vpop.f32.mrf.mxu0
        %5633 = vmatprep.mubr.bf16.mxu0 %v4729
        %5634 = vmatmul.mubr.bf16.gmra.mxu0 %v4728
        %v5635 = vpop.f32.mrf.mxu0
        %v5636 = vadd.f32 %v5475, %v5635
        %v5637 = vpop.f32.mrf.mxu0
        %v5638 = vpop.f32.mrf.mxu0
        %v5639 = vadd.f32 %v5478, %v5638
        %v5640 = vpop.f32.mrf.mxu0
        %5641 = vmatprep.mubr.bf16.mxu0 %v4738
        %5642 = vmatmul.mubr.bf16.gmra.mxu0 %v4737
        %v5643 = vpop.f32.mrf.mxu0
        %v5644 = vadd.f32 %v5483, %v5643
        %v5645 = vpop.f32.mrf.mxu0
        %v5646 = vpop.f32.mrf.mxu0
        %v5647 = vadd.f32 %v5486, %v5646
        %v5648 = vpop.f32.mrf.mxu0
        %5649 = vmatprep.mubr.bf16.mxu0 %v4747
        %5650 = vmatmul.mubr.bf16.gmra.mxu0 %v4746
        %v5651 = vpop.f32.mrf.mxu0
        %v5652 = vadd.f32 %v5491, %v5651
        %v5653 = vpop.f32.mrf.mxu0
        %v5654 = vpop.f32.mrf.mxu0
        %v5655 = vadd.f32 %v5494, %v5654
        %v5656 = vpop.f32.mrf.mxu0
        %5657 = vmatprep.mubr.bf16.mxu0 %v4756
        %5658 = vmatmul.mubr.bf16.gmra.mxu0 %v4755
        %v5659 = vpop.f32.mrf.mxu0
        %v5660 = vadd.f32 %v5499, %v5659
        %v5661 = vpop.f32.mrf.mxu0
        %v5662 = vpop.f32.mrf.mxu0
        %v5663 = vadd.f32 %v5502, %v5662
        %v5664 = vpop.f32.mrf.mxu0
        %5665 = vmatprep.mubr.bf16.mxu0 %v4765
        %5666 = vmatmul.mubr.bf16.gmra.mxu0 %v4764
        %v5667 = vpop.f32.mrf.mxu0
        %v5668 = vadd.f32 %v5507, %v5667
        %v5669 = vpop.f32.mrf.mxu0
        %v5670 = vpop.f32.mrf.mxu0
        %v5671 = vadd.f32 %v5510, %v5670
        %v5672 = vpop.f32.mrf.mxu0
        %5673 = vmatprep.mubr.bf16.mxu0 %v4774
        %5674 = vmatmul.mubr.bf16.gmra.mxu0 %v4773
        %v5675 = vpop.f32.mrf.mxu0
        %v5676 = vadd.f32 %v5515, %v5675
        %v5677 = vpop.f32.mrf.mxu0
        %v5678 = vpop.f32.mrf.mxu0
        %v5679 = vadd.f32 %v5518, %v5678
        %v5680 = vpop.f32.mrf.mxu0
        %5681 = vmatprep.mubr.bf16.mxu0 %v4783
        %5682 = vmatmul.mubr.bf16.gmra.mxu0 %v4782
        %v5683 = vpop.f32.mrf.mxu0
        %v5684 = vadd.f32 %v5523, %v5683
        %v5685 = vpop.f32.mrf.mxu0
        %v5686 = vpop.f32.mrf.mxu0
        %v5687 = vadd.f32 %v5526, %v5686
        %v5688 = vpop.f32.mrf.mxu0
        %5689 = vmatprep.mubr.bf16.mxu0 %v4792
        %5690 = vmatmul.mubr.bf16.gmra.mxu0 %v4791
        %v5691 = vpop.f32.mrf.mxu0
        %v5692 = vadd.f32 %v5531, %v5691
        %v5693 = vpop.f32.mrf.mxu0
        %v5694 = vpop.f32.mrf.mxu0
        %v5695 = vadd.f32 %v5534, %v5694
        %v5696 = vpop.f32.mrf.mxu0
        %5697 = vmatprep.mubr.bf16.mxu0 %v4801
        %5698 = vmatmul.mubr.bf16.gmra.mxu0 %v4800
        %v5699 = vpop.f32.mrf.mxu0
        %v5700 = vadd.f32 %v5539, %v5699
        %v5701 = vpop.f32.mrf.mxu0
        %v5702 = vpop.f32.mrf.mxu0
        %v5703 = vadd.f32 %v5542, %v5702
        %v5704 = vpop.f32.mrf.mxu0
        %5705 = vmatprep.mubr.bf16.mxu0 %v4810
        %5706 = vmatmul.mubr.bf16.gmra.mxu0 %v4809
        %v5707 = vpop.f32.mrf.mxu0
        %v5708 = vadd.f32 %v5547, %v5707
        %v5709 = vpop.f32.mrf.mxu0
        %v5710 = vpop.f32.mrf.mxu0
        %v5711 = vadd.f32 %v5550, %v5710
        %v5712 = vpop.f32.mrf.mxu0
        %5713 = vdwg.mxu0
        %5714 = vmatprep.subr.bf16.mxu0 0
        %5715 = vmatpush1.bf16.msra.mxu0 %v5287
        %5716 = vmatprep.subr.bf16.mxu0 0
        %5717 = vmatpush1.bf16.msra.mxu0 %v5286
        %5718 = vmatprep.subr.bf16.mxu0 0
        %5719 = vmatpush1.bf16.msra.mxu0 %v5285
        %5720 = vmatprep.subr.bf16.mxu0 0
        %5721 = vmatpush1.bf16.msra.mxu0 %v5284
        %5722 = vmatprep.subr.bf16.mxu0 0
        %5723 = vmatpush1.bf16.msra.mxu0 %v5283
        %5724 = vmatprep.subr.bf16.mxu0 0
        %5725 = vmatpush1.bf16.msra.mxu0 %v5282
        %5726 = vmatprep.subr.bf16.mxu0 0
        %5727 = vmatpush1.bf16.msra.mxu0 %v5281
        %5728 = vmatprep.subr.bf16.mxu0 0
        %5729 = vmatpush1.bf16.msra.mxu0 %v5280
        %5730 = vmatprep.subr.bf16.mxu0 0
        %5731 = vmatpush2.bf16.msra.mxu0 %v5295
        %5732 = vmatprep.subr.bf16.mxu0 0
        %5733 = vmatpush2.bf16.msra.mxu0 %v5294
        %5734 = vmatprep.subr.bf16.mxu0 0
        %5735 = vmatpush2.bf16.msra.mxu0 %v5293
        %5736 = vmatprep.subr.bf16.mxu0 0
        %5737 = vmatpush2.bf16.msra.mxu0 %v5292
        %5738 = vmatprep.subr.bf16.mxu0 0
        %5739 = vmatpush2.bf16.msra.mxu0 %v5291
        %5740 = vmatprep.subr.bf16.mxu0 0
        %5741 = vmatpush2.bf16.msra.mxu0 %v5290
        %5742 = vmatprep.subr.bf16.mxu0 0
        %5743 = vmatpush2.bf16.msra.mxu0 %v5289
        %5744 = vmatprep.subr.bf16.mxu0 0
        %5745 = vmatpush2.bf16.msra.mxu0 %v5288
        %5746 = vmatprep.mubr.bf16.mxu0 %v4677
        %5747 = vmatmul.mubr.bf16.gmra.mxu0 %v4676
        %v5748 = vpop.f32.mrf.mxu0
        %v5749 = vadd.f32 %v5588, %v5748
        %v5750 = vpop.f32.mrf.mxu0
        %v5751 = vpop.f32.mrf.mxu0
        %v5752 = vadd.f32 %v5591, %v5751
        %v5753 = vpop.f32.mrf.mxu0
        %5754 = vmatprep.mubr.bf16.mxu0 %v4686
        %5755 = vmatmul.mubr.bf16.gmra.mxu0 %v4685
        %v5756 = vpop.f32.mrf.mxu0
        %v5757 = vadd.f32 %v5596, %v5756
        %v5758 = vpop.f32.mrf.mxu0
        %v5759 = vpop.f32.mrf.mxu0
        %v5760 = vadd.f32 %v5599, %v5759
        %v5761 = vpop.f32.mrf.mxu0
        %5762 = vmatprep.mubr.bf16.mxu0 %v4695
        %5763 = vmatmul.mubr.bf16.gmra.mxu0 %v4694
        %v5764 = vpop.f32.mrf.mxu0
        %v5765 = vadd.f32 %v5604, %v5764
        %v5766 = vpop.f32.mrf.mxu0
        %v5767 = vpop.f32.mrf.mxu0
        %v5768 = vadd.f32 %v5607, %v5767
        %v5769 = vpop.f32.mrf.mxu0
        %5770 = vmatprep.mubr.bf16.mxu0 %v4704
        %5771 = vmatmul.mubr.bf16.gmra.mxu0 %v4703
        %v5772 = vpop.f32.mrf.mxu0
        %v5773 = vadd.f32 %v5612, %v5772
        %v5774 = vpop.f32.mrf.mxu0
        %v5775 = vpop.f32.mrf.mxu0
        %v5776 = vadd.f32 %v5615, %v5775
        %v5777 = vpop.f32.mrf.mxu0
        %5778 = vmatprep.mubr.bf16.mxu0 %v4713
        %5779 = vmatmul.mubr.bf16.gmra.mxu0 %v4712
        %v5780 = vpop.f32.mrf.mxu0
        %v5781 = vadd.f32 %v5620, %v5780
        %v5782 = vpop.f32.mrf.mxu0
        %v5783 = vpop.f32.mrf.mxu0
        %v5784 = vadd.f32 %v5623, %v5783
        %v5785 = vpop.f32.mrf.mxu0
        %5786 = vmatprep.mubr.bf16.mxu0 %v4722
        %5787 = vmatmul.mubr.bf16.gmra.mxu0 %v4721
        %v5788 = vpop.f32.mrf.mxu0
        %v5789 = vadd.f32 %v5628, %v5788
        %v5790 = vpop.f32.mrf.mxu0
        %v5791 = vpop.f32.mrf.mxu0
        %v5792 = vadd.f32 %v5631, %v5791
        %v5793 = vpop.f32.mrf.mxu0
        %5794 = vmatprep.mubr.bf16.mxu0 %v4731
        %5795 = vmatmul.mubr.bf16.gmra.mxu0 %v4730
        %v5796 = vpop.f32.mrf.mxu0
        %v5797 = vadd.f32 %v5636, %v5796
        %v5798 = vpop.f32.mrf.mxu0
        %v5799 = vpop.f32.mrf.mxu0
        %v5800 = vadd.f32 %v5639, %v5799
        %v5801 = vpop.f32.mrf.mxu0
        %5802 = vmatprep.mubr.bf16.mxu0 %v4740
        %5803 = vmatmul.mubr.bf16.gmra.mxu0 %v4739
        %v5804 = vpop.f32.mrf.mxu0
        %v5805 = vadd.f32 %v5644, %v5804
        %v5806 = vpop.f32.mrf.mxu0
        %v5807 = vpop.f32.mrf.mxu0
        %v5808 = vadd.f32 %v5647, %v5807
        %v5809 = vpop.f32.mrf.mxu0
        %5810 = vmatprep.mubr.bf16.mxu0 %v4749
        %5811 = vmatmul.mubr.bf16.gmra.mxu0 %v4748
        %v5812 = vpop.f32.mrf.mxu0
        %v5813 = vadd.f32 %v5652, %v5812
        %v5814 = vpop.f32.mrf.mxu0
        %v5815 = vpop.f32.mrf.mxu0
        %v5816 = vadd.f32 %v5655, %v5815
        %v5817 = vpop.f32.mrf.mxu0
        %5818 = vmatprep.mubr.bf16.mxu0 %v4758
        %5819 = vmatmul.mubr.bf16.gmra.mxu0 %v4757
        %v5820 = vpop.f32.mrf.mxu0
        %v5821 = vadd.f32 %v5660, %v5820
        %v5822 = vpop.f32.mrf.mxu0
        %v5823 = vpop.f32.mrf.mxu0
        %v5824 = vadd.f32 %v5663, %v5823
        %v5825 = vpop.f32.mrf.mxu0
        %5826 = vmatprep.mubr.bf16.mxu0 %v4767
        %5827 = vmatmul.mubr.bf16.gmra.mxu0 %v4766
        %v5828 = vpop.f32.mrf.mxu0
        %v5829 = vadd.f32 %v5668, %v5828
        %v5830 = vpop.f32.mrf.mxu0
        %v5831 = vpop.f32.mrf.mxu0
        %v5832 = vadd.f32 %v5671, %v5831
        %v5833 = vpop.f32.mrf.mxu0
        %5834 = vmatprep.mubr.bf16.mxu0 %v4776
        %5835 = vmatmul.mubr.bf16.gmra.mxu0 %v4775
        %v5836 = vpop.f32.mrf.mxu0
        %v5837 = vadd.f32 %v5676, %v5836
        %v5838 = vpop.f32.mrf.mxu0
        %v5839 = vpop.f32.mrf.mxu0
        %v5840 = vadd.f32 %v5679, %v5839
        %v5841 = vpop.f32.mrf.mxu0
        %5842 = vmatprep.mubr.bf16.mxu0 %v4785
        %5843 = vmatmul.mubr.bf16.gmra.mxu0 %v4784
        %v5844 = vpop.f32.mrf.mxu0
        %v5845 = vadd.f32 %v5684, %v5844
        %v5846 = vpop.f32.mrf.mxu0
        %v5847 = vpop.f32.mrf.mxu0
        %v5848 = vadd.f32 %v5687, %v5847
        %v5849 = vpop.f32.mrf.mxu0
        %5850 = vmatprep.mubr.bf16.mxu0 %v4794
        %5851 = vmatmul.mubr.bf16.gmra.mxu0 %v4793
        %v5852 = vpop.f32.mrf.mxu0
        %v5853 = vadd.f32 %v5692, %v5852
        %v5854 = vpop.f32.mrf.mxu0
        %v5855 = vpop.f32.mrf.mxu0
        %v5856 = vadd.f32 %v5695, %v5855
        %v5857 = vpop.f32.mrf.mxu0
        %5858 = vmatprep.mubr.bf16.mxu0 %v4803
        %5859 = vmatmul.mubr.bf16.gmra.mxu0 %v4802
        %v5860 = vpop.f32.mrf.mxu0
        %v5861 = vadd.f32 %v5700, %v5860
        %v5862 = vpop.f32.mrf.mxu0
        %v5863 = vpop.f32.mrf.mxu0
        %v5864 = vadd.f32 %v5703, %v5863
        %v5865 = vpop.f32.mrf.mxu0
        %5866 = vmatprep.mubr.bf16.mxu0 %v4812
        %5867 = vmatmul.mubr.bf16.gmra.mxu0 %v4811
        %v5868 = vpop.f32.mrf.mxu0
        %v5869 = vadd.f32 %v5708, %v5868
        %v5870 = vpop.f32.mrf.mxu0
        %v5871 = vpop.f32.mrf.mxu0
        %v5872 = vadd.f32 %v5711, %v5871
        %v5873 = vpop.f32.mrf.mxu0
        %5874 = vdwg.mxu0
        %5875 = vmatprep.subr.bf16.mxu0 0
        %5876 = vmatpush1.bf16.msra.mxu0 %v5303
        %5877 = vmatprep.subr.bf16.mxu0 0
        %5878 = vmatpush1.bf16.msra.mxu0 %v5302
        %5879 = vmatprep.subr.bf16.mxu0 0
        %5880 = vmatpush1.bf16.msra.mxu0 %v5301
        %5881 = vmatprep.subr.bf16.mxu0 0
        %5882 = vmatpush1.bf16.msra.mxu0 %v5300
        %5883 = vmatprep.subr.bf16.mxu0 0
        %5884 = vmatpush1.bf16.msra.mxu0 %v5299
        %5885 = vmatprep.subr.bf16.mxu0 0
        %5886 = vmatpush1.bf16.msra.mxu0 %v5298
        %5887 = vmatprep.subr.bf16.mxu0 0
        %5888 = vmatpush1.bf16.msra.mxu0 %v5297
        %5889 = vmatprep.subr.bf16.mxu0 0
        %5890 = vmatpush1.bf16.msra.mxu0 %v5296
        %5891 = vmatprep.subr.bf16.mxu0 0
        %5892 = vmatpush2.bf16.msra.mxu0 %v5311
        %5893 = vmatprep.subr.bf16.mxu0 0
        %5894 = vmatpush2.bf16.msra.mxu0 %v5310
        %5895 = vmatprep.subr.bf16.mxu0 0
        %5896 = vmatpush2.bf16.msra.mxu0 %v5309
        %5897 = vmatprep.subr.bf16.mxu0 0
        %5898 = vmatpush2.bf16.msra.mxu0 %v5308
        %5899 = vmatprep.subr.bf16.mxu0 0
        %5900 = vmatpush2.bf16.msra.mxu0 %v5307
        %5901 = vmatprep.subr.bf16.mxu0 0
        %5902 = vmatpush2.bf16.msra.mxu0 %v5306
        %5903 = vmatprep.subr.bf16.mxu0 0
        %5904 = vmatpush2.bf16.msra.mxu0 %v5305
        %5905 = vmatprep.subr.bf16.mxu0 0
        %5906 = vmatpush2.bf16.msra.mxu0 %v5304
        %5907 = vmatprep.mubr.bf16.mxu0 %v4679
        %5908 = vmatmul.mubr.bf16.gmra.mxu0 %v4678
        %v5909 = vpop.f32.mrf.mxu0
        %v5910 = vadd.f32 %v5749, %v5909
        %v5911 = vpop.f32.mrf.mxu0
        %v5912 = vpop.f32.mrf.mxu0
        %v5913 = vadd.f32 %v5752, %v5912
        %v5914 = vpop.f32.mrf.mxu0
        %5915 = vmatprep.mubr.bf16.mxu0 %v4688
        %5916 = vmatmul.mubr.bf16.gmra.mxu0 %v4687
        %v5917 = vpop.f32.mrf.mxu0
        %v5918 = vadd.f32 %v5757, %v5917
        %v5919 = vpop.f32.mrf.mxu0
        %v5920 = vpop.f32.mrf.mxu0
        %v5921 = vadd.f32 %v5760, %v5920
        %v5922 = vpop.f32.mrf.mxu0
        %5923 = vmatprep.mubr.bf16.mxu0 %v4697
        %5924 = vmatmul.mubr.bf16.gmra.mxu0 %v4696
        %v5925 = vpop.f32.mrf.mxu0
        %v5926 = vadd.f32 %v5765, %v5925
        %v5927 = vpop.f32.mrf.mxu0
        %v5928 = vpop.f32.mrf.mxu0
        %v5929 = vadd.f32 %v5768, %v5928
        %v5930 = vpop.f32.mrf.mxu0
        %5931 = vmatprep.mubr.bf16.mxu0 %v4706
        %5932 = vmatmul.mubr.bf16.gmra.mxu0 %v4705
        %v5933 = vpop.f32.mrf.mxu0
        %v5934 = vadd.f32 %v5773, %v5933
        %v5935 = vpop.f32.mrf.mxu0
        %v5936 = vpop.f32.mrf.mxu0
        %v5937 = vadd.f32 %v5776, %v5936
        %v5938 = vpop.f32.mrf.mxu0
        %5939 = vmatprep.mubr.bf16.mxu0 %v4715
        %5940 = vmatmul.mubr.bf16.gmra.mxu0 %v4714
        %v5941 = vpop.f32.mrf.mxu0
        %v5942 = vadd.f32 %v5781, %v5941
        %v5943 = vpop.f32.mrf.mxu0
        %v5944 = vpop.f32.mrf.mxu0
        %v5945 = vadd.f32 %v5784, %v5944
        %v5946 = vpop.f32.mrf.mxu0
        %5947 = vmatprep.mubr.bf16.mxu0 %v4724
        %5948 = vmatmul.mubr.bf16.gmra.mxu0 %v4723
        %v5949 = vpop.f32.mrf.mxu0
        %v5950 = vadd.f32 %v5789, %v5949
        %v5951 = vpop.f32.mrf.mxu0
        %v5952 = vpop.f32.mrf.mxu0
        %v5953 = vadd.f32 %v5792, %v5952
        %v5954 = vpop.f32.mrf.mxu0
        %5955 = vmatprep.mubr.bf16.mxu0 %v4733
        %5956 = vmatmul.mubr.bf16.gmra.mxu0 %v4732
        %v5957 = vpop.f32.mrf.mxu0
        %v5958 = vadd.f32 %v5797, %v5957
        %v5959 = vpop.f32.mrf.mxu0
        %v5960 = vpop.f32.mrf.mxu0
        %v5961 = vadd.f32 %v5800, %v5960
        %v5962 = vpop.f32.mrf.mxu0
        %5963 = vmatprep.mubr.bf16.mxu0 %v4742
        %5964 = vmatmul.mubr.bf16.gmra.mxu0 %v4741
        %v5965 = vpop.f32.mrf.mxu0
        %v5966 = vadd.f32 %v5805, %v5965
        %v5967 = vpop.f32.mrf.mxu0
        %v5968 = vpop.f32.mrf.mxu0
        %v5969 = vadd.f32 %v5808, %v5968
        %v5970 = vpop.f32.mrf.mxu0
        %5971 = vmatprep.mubr.bf16.mxu0 %v4751
        %5972 = vmatmul.mubr.bf16.gmra.mxu0 %v4750
        %v5973 = vpop.f32.mrf.mxu0
        %v5974 = vadd.f32 %v5813, %v5973
        %v5975 = vpop.f32.mrf.mxu0
        %v5976 = vpop.f32.mrf.mxu0
        %v5977 = vadd.f32 %v5816, %v5976
        %v5978 = vpop.f32.mrf.mxu0
        %5979 = vmatprep.mubr.bf16.mxu0 %v4760
        %5980 = vmatmul.mubr.bf16.gmra.mxu0 %v4759
        %v5981 = vpop.f32.mrf.mxu0
        %v5982 = vadd.f32 %v5821, %v5981
        %v5983 = vpop.f32.mrf.mxu0
        %v5984 = vpop.f32.mrf.mxu0
        %v5985 = vadd.f32 %v5824, %v5984
        %v5986 = vpop.f32.mrf.mxu0
        %5987 = vmatprep.mubr.bf16.mxu0 %v4769
        %5988 = vmatmul.mubr.bf16.gmra.mxu0 %v4768
        %v5989 = vpop.f32.mrf.mxu0
        %v5990 = vadd.f32 %v5829, %v5989
        %v5991 = vpop.f32.mrf.mxu0
        %v5992 = vpop.f32.mrf.mxu0
        %v5993 = vadd.f32 %v5832, %v5992
        %v5994 = vpop.f32.mrf.mxu0
        %5995 = vmatprep.mubr.bf16.mxu0 %v4778
        %5996 = vmatmul.mubr.bf16.gmra.mxu0 %v4777
        %v5997 = vpop.f32.mrf.mxu0
        %v5998 = vadd.f32 %v5837, %v5997
        %v5999 = vpop.f32.mrf.mxu0
        %v6000 = vpop.f32.mrf.mxu0
        %v6001 = vadd.f32 %v5840, %v6000
        %v6002 = vpop.f32.mrf.mxu0
        %6003 = vmatprep.mubr.bf16.mxu0 %v4787
        %6004 = vmatmul.mubr.bf16.gmra.mxu0 %v4786
        %v6005 = vpop.f32.mrf.mxu0
        %v6006 = vadd.f32 %v5845, %v6005
        %v6007 = vpop.f32.mrf.mxu0
        %v6008 = vpop.f32.mrf.mxu0
        %v6009 = vadd.f32 %v5848, %v6008
        %v6010 = vpop.f32.mrf.mxu0
        %6011 = vmatprep.mubr.bf16.mxu0 %v4796
        %6012 = vmatmul.mubr.bf16.gmra.mxu0 %v4795
        %v6013 = vpop.f32.mrf.mxu0
        %v6014 = vadd.f32 %v5853, %v6013
        %v6015 = vpop.f32.mrf.mxu0
        %v6016 = vpop.f32.mrf.mxu0
        %v6017 = vadd.f32 %v5856, %v6016
        %v6018 = vpop.f32.mrf.mxu0
        %6019 = vmatprep.mubr.bf16.mxu0 %v4805
        %6020 = vmatmul.mubr.bf16.gmra.mxu0 %v4804
        %v6021 = vpop.f32.mrf.mxu0
        %v6022 = vadd.f32 %v5861, %v6021
        %v6023 = vpop.f32.mrf.mxu0
        %v6024 = vpop.f32.mrf.mxu0
        %v6025 = vadd.f32 %v5864, %v6024
        %v6026 = vpop.f32.mrf.mxu0
        %6027 = vmatprep.mubr.bf16.mxu0 %v4814
        %6028 = vmatmul.mubr.bf16.gmra.mxu0 %v4813
        %v6029 = vpop.f32.mrf.mxu0
        %v6030 = vadd.f32 %v5869, %v6029
        %v6031 = vpop.f32.mrf.mxu0
        %v6032 = vpop.f32.mrf.mxu0
        %v6033 = vadd.f32 %v5872, %v6032
        %v6034 = vpop.f32.mrf.mxu0
        %6035 = vdwg.mxu0
        %6036 = vmatprep.subr.bf16.mxu0 0
        %6037 = vmatpush1.bf16.msra.mxu0 %v5319
        %6038 = vmatprep.subr.bf16.mxu0 0
        %6039 = vmatpush1.bf16.msra.mxu0 %v5318
        %6040 = vmatprep.subr.bf16.mxu0 0
        %6041 = vmatpush1.bf16.msra.mxu0 %v5317
        %6042 = vmatprep.subr.bf16.mxu0 0
        %6043 = vmatpush1.bf16.msra.mxu0 %v5316
        %6044 = vmatprep.subr.bf16.mxu0 0
        %6045 = vmatpush1.bf16.msra.mxu0 %v5315
        %6046 = vmatprep.subr.bf16.mxu0 0
        %6047 = vmatpush1.bf16.msra.mxu0 %v5314
        %6048 = vmatprep.subr.bf16.mxu0 0
        %6049 = vmatpush1.bf16.msra.mxu0 %v5313
        %6050 = vmatprep.subr.bf16.mxu0 0
        %6051 = vmatpush1.bf16.msra.mxu0 %v5312
        %6052 = vmatprep.subr.bf16.mxu0 0
        %6053 = vmatpush2.bf16.msra.mxu0 0
        %6054 = vmatprep.subr.bf16.mxu0 0
        %6055 = vmatpush2.bf16.msra.mxu0 0
        %6056 = vmatprep.subr.bf16.mxu0 0
        %6057 = vmatpush2.bf16.msra.mxu0 0
        %6058 = vmatprep.subr.bf16.mxu0 0
        %6059 = vmatpush2.bf16.msra.mxu0 0
        %6060 = vmatprep.subr.bf16.mxu0 0
        %6061 = vmatpush2.bf16.msra.mxu0 0
        %6062 = vmatprep.subr.bf16.mxu0 0
        %6063 = vmatpush2.bf16.msra.mxu0 0
        %6064 = vmatprep.subr.bf16.mxu0 0
        %6065 = vmatpush2.bf16.msra.mxu0 0
        %6066 = vmatprep.subr.bf16.mxu0 0
        %6067 = vmatpush2.bf16.msra.mxu0 0
        %6068 = vmatprep.mubr.bf16.mxu0 0
        %6069 = vmatmul.mubr.bf16.gmra.mxu0 %v4680
        %v6070 = vpop.f32.mrf.mxu0
        %v6071 = vadd.f32 %v5910, %v6070
        %v6072 = vpop.f32.mrf.mxu0
        %v6073 = vpop.f32.mrf.mxu0
        %v6074 = vadd.f32 %v5913, %v6073
        %v6075 = vpop.f32.mrf.mxu0
        %6076 = vmatprep.mubr.bf16.mxu0 0
        %6077 = vmatmul.mubr.bf16.gmra.mxu0 %v4689
        %v6078 = vpop.f32.mrf.mxu0
        %v6079 = vadd.f32 %v5918, %v6078
        %v6080 = vpop.f32.mrf.mxu0
        %v6081 = vpop.f32.mrf.mxu0
        %v6082 = vadd.f32 %v5921, %v6081
        %v6083 = vpop.f32.mrf.mxu0
        %6084 = vmatprep.mubr.bf16.mxu0 0
        %6085 = vmatmul.mubr.bf16.gmra.mxu0 %v4698
        %v6086 = vpop.f32.mrf.mxu0
        %v6087 = vadd.f32 %v5926, %v6086
        %v6088 = vpop.f32.mrf.mxu0
        %v6089 = vpop.f32.mrf.mxu0
        %v6090 = vadd.f32 %v5929, %v6089
        %v6091 = vpop.f32.mrf.mxu0
        %6092 = vmatprep.mubr.bf16.mxu0 0
        %6093 = vmatmul.mubr.bf16.gmra.mxu0 %v4707
        %v6094 = vpop.f32.mrf.mxu0
        %v6095 = vadd.f32 %v5934, %v6094
        %v6096 = vpop.f32.mrf.mxu0
        %v6097 = vpop.f32.mrf.mxu0
        %v6098 = vadd.f32 %v5937, %v6097
        %v6099 = vpop.f32.mrf.mxu0
        %6100 = vmatprep.mubr.bf16.mxu0 0
        %6101 = vmatmul.mubr.bf16.gmra.mxu0 %v4716
        %v6102 = vpop.f32.mrf.mxu0
        %v6103 = vadd.f32 %v5942, %v6102
        %v6104 = vpop.f32.mrf.mxu0
        %v6105 = vpop.f32.mrf.mxu0
        %v6106 = vadd.f32 %v5945, %v6105
        %v6107 = vpop.f32.mrf.mxu0
        %6108 = vmatprep.mubr.bf16.mxu0 0
        %6109 = vmatmul.mubr.bf16.gmra.mxu0 %v4725
        %v6110 = vpop.f32.mrf.mxu0
        %v6111 = vadd.f32 %v5950, %v6110
        %v6112 = vpop.f32.mrf.mxu0
        %v6113 = vpop.f32.mrf.mxu0
        %v6114 = vadd.f32 %v5953, %v6113
        %v6115 = vpop.f32.mrf.mxu0
        %6116 = vmatprep.mubr.bf16.mxu0 0
        %6117 = vmatmul.mubr.bf16.gmra.mxu0 %v4734
        %v6118 = vpop.f32.mrf.mxu0
        %v6119 = vadd.f32 %v5958, %v6118
        %v6120 = vpop.f32.mrf.mxu0
        %v6121 = vpop.f32.mrf.mxu0
        %v6122 = vadd.f32 %v5961, %v6121
        %v6123 = vpop.f32.mrf.mxu0
        %6124 = vmatprep.mubr.bf16.mxu0 0
        %6125 = vmatmul.mubr.bf16.gmra.mxu0 %v4743
        %v6126 = vpop.f32.mrf.mxu0
        %v6127 = vadd.f32 %v5966, %v6126
        %v6128 = vpop.f32.mrf.mxu0
        %v6129 = vpop.f32.mrf.mxu0
        %v6130 = vadd.f32 %v5969, %v6129
        %v6131 = vpop.f32.mrf.mxu0
        %6132 = vmatprep.mubr.bf16.mxu0 0
        %6133 = vmatmul.mubr.bf16.gmra.mxu0 %v4752
        %v6134 = vpop.f32.mrf.mxu0
        %v6135 = vadd.f32 %v5974, %v6134
        %v6136 = vpop.f32.mrf.mxu0
        %v6137 = vpop.f32.mrf.mxu0
        %v6138 = vadd.f32 %v5977, %v6137
        %v6139 = vpop.f32.mrf.mxu0
        %6140 = vmatprep.mubr.bf16.mxu0 0
        %6141 = vmatmul.mubr.bf16.gmra.mxu0 %v4761
        %v6142 = vpop.f32.mrf.mxu0
        %v6143 = vadd.f32 %v5982, %v6142
        %v6144 = vpop.f32.mrf.mxu0
        %v6145 = vpop.f32.mrf.mxu0
        %v6146 = vadd.f32 %v5985, %v6145
        %v6147 = vpop.f32.mrf.mxu0
        %6148 = vmatprep.mubr.bf16.mxu0 0
        %6149 = vmatmul.mubr.bf16.gmra.mxu0 %v4770
        %v6150 = vpop.f32.mrf.mxu0
        %v6151 = vadd.f32 %v5990, %v6150
        %v6152 = vpop.f32.mrf.mxu0
        %v6153 = vpop.f32.mrf.mxu0
        %v6154 = vadd.f32 %v5993, %v6153
        %v6155 = vpop.f32.mrf.mxu0
        %6156 = vmatprep.mubr.bf16.mxu0 0
        %6157 = vmatmul.mubr.bf16.gmra.mxu0 %v4779
        %v6158 = vpop.f32.mrf.mxu0
        %v6159 = vadd.f32 %v5998, %v6158
        %v6160 = vpop.f32.mrf.mxu0
        %v6161 = vpop.f32.mrf.mxu0
        %v6162 = vadd.f32 %v6001, %v6161
        %v6163 = vpop.f32.mrf.mxu0
        %6164 = vmatprep.mubr.bf16.mxu0 0
        %6165 = vmatmul.mubr.bf16.gmra.mxu0 %v4788
        %v6166 = vpop.f32.mrf.mxu0
        %v6167 = vadd.f32 %v6006, %v6166
        %v6168 = vpop.f32.mrf.mxu0
        %v6169 = vpop.f32.mrf.mxu0
        %v6170 = vadd.f32 %v6009, %v6169
        %v6171 = vpop.f32.mrf.mxu0
        %6172 = vmatprep.mubr.bf16.mxu0 0
        %6173 = vmatmul.mubr.bf16.gmra.mxu0 %v4797
        %v6174 = vpop.f32.mrf.mxu0
        %v6175 = vadd.f32 %v6014, %v6174
        %v6176 = vpop.f32.mrf.mxu0
        %v6177 = vpop.f32.mrf.mxu0
        %v6178 = vadd.f32 %v6017, %v6177
        %v6179 = vpop.f32.mrf.mxu0
        %6180 = vmatprep.mubr.bf16.mxu0 0
        %6181 = vmatmul.mubr.bf16.gmra.mxu0 %v4806
        %v6182 = vpop.f32.mrf.mxu0
        %v6183 = vadd.f32 %v6022, %v6182
        %v6184 = vpop.f32.mrf.mxu0
        %v6185 = vpop.f32.mrf.mxu0
        %v6186 = vadd.f32 %v6025, %v6185
        %v6187 = vpop.f32.mrf.mxu0
        %6188 = vmatprep.mubr.bf16.mxu0 0
        %6189 = vmatmul.mubr.bf16.gmra.mxu0 %v4815
        %v6190 = vpop.f32.mrf.mxu0
        %v6191 = vadd.f32 %v6030, %v6190
        %v6192 = vpop.f32.mrf.mxu0
        %v6193 = vpop.f32.mrf.mxu0
        %v6194 = vadd.f32 %v6033, %v6193
        %v6195 = vpop.f32.mrf.mxu0
        %6196 = vdwg.mxu0
        %v6197 = vld [vmem:[%s6] sm:$0x1]
        %v6199 = vlaneseq
        %v6200 = vshrl.u32 %v6199, 7
        %v6201 = vsub.s32 0, %v6200
        %v6202 = vrot.slane %v6197, %v6201
        %v6204 = vmul.f32 %v6071, %v6202
        %v6205 = vmul.f32 %v6074, %v6202
        %v6206 = vmul.f32 %v6079, %v6202
        %v6207 = vmul.f32 %v6082, %v6202
        %v6208 = vmul.f32 %v6087, %v6202
        %v6209 = vmul.f32 %v6090, %v6202
        %v6210 = vmul.f32 %v6095, %v6202
        %v6211 = vmul.f32 %v6098, %v6202
        %v6212 = vmul.f32 %v6103, %v6202
        %v6213 = vmul.f32 %v6106, %v6202
        %v6214 = vmul.f32 %v6111, %v6202
        %v6215 = vmul.f32 %v6114, %v6202
        %v6216 = vmul.f32 %v6119, %v6202
        %v6217 = vmul.f32 %v6122, %v6202
        %v6218 = vmul.f32 %v6127, %v6202
        %v6219 = vmul.f32 %v6130, %v6202
        %v6220 = vmul.f32 %v6135, %v6202
        %v6221 = vmul.f32 %v6138, %v6202
        %v6222 = vmul.f32 %v6143, %v6202
        %v6223 = vmul.f32 %v6146, %v6202
        %v6224 = vmul.f32 %v6151, %v6202
        %v6225 = vmul.f32 %v6154, %v6202
        %v6226 = vmul.f32 %v6159, %v6202
        %v6227 = vmul.f32 %v6162, %v6202
        %v6228 = vmul.f32 %v6167, %v6202
        %v6229 = vmul.f32 %v6170, %v6202
        %v6230 = vmul.f32 %v6175, %v6202
        %v6231 = vmul.f32 %v6178, %v6202
        %v6232 = vmul.f32 %v6183, %v6202
        %v6233 = vmul.f32 %v6186, %v6202
        %v6234 = vmul.f32 %v6191, %v6202
        %v6235 = vmul.f32 %v6194, %v6202
        %v6236 = vld [vmem:[%s7] sm:$0x1]
        %v6238 = vlaneseq
        %v6239 = vshrl.u32 %v6238, 7
        %v6240 = vsub.s32 0, %v6239
        %v6241 = vrot.slane %v6236, %v6240
        %v6243 = vadd.f32 %v6204, %v6241
        %v6244 = vadd.f32 %v6205, %v6241
        %v6245 = vadd.f32 %v6206, %v6241
        %v6246 = vadd.f32 %v6207, %v6241
        %v6247 = vadd.f32 %v6208, %v6241
        %v6248 = vadd.f32 %v6209, %v6241
        %v6249 = vadd.f32 %v6210, %v6241
        %v6250 = vadd.f32 %v6211, %v6241
        %v6251 = vadd.f32 %v6212, %v6241
        %v6252 = vadd.f32 %v6213, %v6241
        %v6253 = vadd.f32 %v6214, %v6241
        %v6254 = vadd.f32 %v6215, %v6241
        %v6255 = vadd.f32 %v6216, %v6241
        %v6256 = vadd.f32 %v6217, %v6241
        %v6257 = vadd.f32 %v6218, %v6241
        %v6258 = vadd.f32 %v6219, %v6241
        %v6259 = vadd.f32 %v6220, %v6241
        %v6260 = vadd.f32 %v6221, %v6241
        %v6261 = vadd.f32 %v6222, %v6241
        %v6262 = vadd.f32 %v6223, %v6241
        %v6263 = vadd.f32 %v6224, %v6241
        %v6264 = vadd.f32 %v6225, %v6241
        %v6265 = vadd.f32 %v6226, %v6241
        %v6266 = vadd.f32 %v6227, %v6241
        %v6267 = vadd.f32 %v6228, %v6241
        %v6268 = vadd.f32 %v6229, %v6241
        %v6269 = vadd.f32 %v6230, %v6241
        %v6270 = vadd.f32 %v6231, %v6241
        %v6271 = vadd.f32 %v6232, %v6241
        %v6272 = vadd.f32 %v6233, %v6241
        %v6273 = vadd.f32 %v6234, %v6241
        %v6274 = vadd.f32 %v6235, %v6241
        %v6275 = vld [vmem:[%s312] sm:$0xff]
        %v6276 = vld [vmem:[%s312 + $0x8] sm:$0xff]
        %v6277 = vld [vmem:[%s312 + $0x10] sm:$0xff]
        %v6278 = vld [vmem:[%s312 + $0x18] sm:$0xff]
        %v6279 = vld [vmem:[%s312 + $0x20] sm:$0xff]
        %v6280 = vld [vmem:[%s312 + $0x28] sm:$0xff]
        %v6281 = vld [vmem:[%s312 + $0x30] sm:$0xff]
        %v6282 = vld [vmem:[%s312 + $0x38] sm:$0xff]
        %v6283 = vld [vmem:[%s312 + $0x40] sm:$0xff]
        %v6284 = vld [vmem:[%s312 + $0x48] sm:$0xff]
        %v6285 = vld [vmem:[%s312 + $0x50] sm:$0xff]
        %v6286 = vld [vmem:[%s312 + $0x58] sm:$0xff]
        %v6287 = vld [vmem:[%s312 + $0x60] sm:$0xff]
        %v6288 = vld [vmem:[%s312 + $0x68] sm:$0xff]
        %v6289 = vld [vmem:[%s312 + $0x70] sm:$0xff]
        %v6290 = vld [vmem:[%s312 + $0x78] sm:$0xff]
        %v6291 = vld [vmem:[%s312 + $0x80] sm:$0xff]
        %v6292 = vld [vmem:[%s312 + $0x88] sm:$0xff]
        %v6293 = vld [vmem:[%s312 + $0x90] sm:$0xff]
        %v6294 = vld [vmem:[%s312 + $0x98] sm:$0xff]
        %v6295 = vld [vmem:[%s312 + $0xa0] sm:$0xff]
        %v6296 = vld [vmem:[%s312 + $0xa8] sm:$0xff]
        %v6297 = vld [vmem:[%s312 + $0xb0] sm:$0xff]
        %v6298 = vld [vmem:[%s312 + $0xb8] sm:$0xff]
        %v6299 = vld [vmem:[%s312 + $0xc0] sm:$0xff]
        %v6300 = vld [vmem:[%s312 + $0xc8] sm:$0xff]
        %v6301 = vld [vmem:[%s312 + $0xd0] sm:$0xff]
        %v6302 = vld [vmem:[%s312 + $0xd8] sm:$0xff]
        %v6303 = vld [vmem:[%s312 + $0xe0] sm:$0xff]
        %v6304 = vld [vmem:[%s312 + $0xe8] sm:$0xff]
        %v6305 = vld [vmem:[%s312 + $0xf0] sm:$0xff]
        %v6306 = vld [vmem:[%s312 + $0xf8] sm:$0xff]
        %v6307 = vadd.f32 %v6243, %v6275
        %v6308 = vadd.f32 %v6244, %v6276
        %v6309 = vadd.f32 %v6245, %v6277
        %v6310 = vadd.f32 %v6246, %v6278
        %v6311 = vadd.f32 %v6247, %v6279
        %v6312 = vadd.f32 %v6248, %v6280
        %v6313 = vadd.f32 %v6249, %v6281
        %v6314 = vadd.f32 %v6250, %v6282
        %v6315 = vadd.f32 %v6251, %v6283
        %v6316 = vadd.f32 %v6252, %v6284
        %v6317 = vadd.f32 %v6253, %v6285
        %v6318 = vadd.f32 %v6254, %v6286
        %v6319 = vadd.f32 %v6255, %v6287
        %v6320 = vadd.f32 %v6256, %v6288
        %v6321 = vadd.f32 %v6257, %v6289
        %v6322 = vadd.f32 %v6258, %v6290
        %v6323 = vadd.f32 %v6259, %v6291
        %v6324 = vadd.f32 %v6260, %v6292
        %v6325 = vadd.f32 %v6261, %v6293
        %v6326 = vadd.f32 %v6262, %v6294
        %v6327 = vadd.f32 %v6263, %v6295
        %v6328 = vadd.f32 %v6264, %v6296
        %v6329 = vadd.f32 %v6265, %v6297
        %v6330 = vadd.f32 %v6266, %v6298
        %v6331 = vadd.f32 %v6267, %v6299
        %v6332 = vadd.f32 %v6268, %v6300
        %v6333 = vadd.f32 %v6269, %v6301
        %v6334 = vadd.f32 %v6270, %v6302
        %v6335 = vadd.f32 %v6271, %v6303
        %v6336 = vadd.f32 %v6272, %v6304
        %v6337 = vadd.f32 %v6273, %v6305
        %v6338 = vadd.f32 %v6274, %v6306
        %v6339 = vmax.f32 %v6307, 0.0
        %v6340 = vmax.f32 %v6308, 0.0
        %v6341 = vmax.f32 %v6309, 0.0
        %v6342 = vmax.f32 %v6310, 0.0
        %v6343 = vmax.f32 %v6311, 0.0
        %v6344 = vmax.f32 %v6312, 0.0
        %v6345 = vmax.f32 %v6313, 0.0
        %v6346 = vmax.f32 %v6314, 0.0
        %v6347 = vmax.f32 %v6315, 0.0
        %v6348 = vmax.f32 %v6316, 0.0
        %v6349 = vmax.f32 %v6317, 0.0
        %v6350 = vmax.f32 %v6318, 0.0
        %v6351 = vmax.f32 %v6319, 0.0
        %v6352 = vmax.f32 %v6320, 0.0
        %v6353 = vmax.f32 %v6321, 0.0
        %v6354 = vmax.f32 %v6322, 0.0
        %v6355 = vmax.f32 %v6323, 0.0
        %v6356 = vmax.f32 %v6324, 0.0
        %v6357 = vmax.f32 %v6325, 0.0
        %v6358 = vmax.f32 %v6326, 0.0
        %v6359 = vmax.f32 %v6327, 0.0
        %v6360 = vmax.f32 %v6328, 0.0
        %v6361 = vmax.f32 %v6329, 0.0
        %v6362 = vmax.f32 %v6330, 0.0
        %v6363 = vmax.f32 %v6331, 0.0
        %v6364 = vmax.f32 %v6332, 0.0
        %v6365 = vmax.f32 %v6333, 0.0
        %v6366 = vmax.f32 %v6334, 0.0
        %v6367 = vmax.f32 %v6335, 0.0
        %v6368 = vmax.f32 %v6336, 0.0
        %v6369 = vmax.f32 %v6337, 0.0
        %v6370 = vmax.f32 %v6338, 0.0
        %6371 = vst [vmem:[%s353] sm:$0xff] %v6339
        %6372 = vst [vmem:[%s353 + $0x8] sm:$0xff] %v6340
        %6373 = vst [vmem:[%s353 + $0x10] sm:$0xff] %v6341
        %6374 = vst [vmem:[%s353 + $0x18] sm:$0xff] %v6342
        %6375 = vst [vmem:[%s353 + $0x20] sm:$0xff] %v6343
        %6376 = vst [vmem:[%s353 + $0x28] sm:$0xff] %v6344
        %6377 = vst [vmem:[%s353 + $0x30] sm:$0xff] %v6345
        %6378 = vst [vmem:[%s353 + $0x38] sm:$0xff] %v6346
        %6379 = vst [vmem:[%s353 + $0x40] sm:$0xff] %v6347
        %6380 = vst [vmem:[%s353 + $0x48] sm:$0xff] %v6348
        %6381 = vst [vmem:[%s353 + $0x50] sm:$0xff] %v6349
        %6382 = vst [vmem:[%s353 + $0x58] sm:$0xff] %v6350
        %6383 = vst [vmem:[%s353 + $0x60] sm:$0xff] %v6351
        %6384 = vst [vmem:[%s353 + $0x68] sm:$0xff] %v6352
        %6385 = vst [vmem:[%s353 + $0x70] sm:$0xff] %v6353
        %6386 = vst [vmem:[%s353 + $0x78] sm:$0xff] %v6354
        %6387 = vst [vmem:[%s353 + $0x80] sm:$0xff] %v6355
        %6388 = vst [vmem:[%s353 + $0x88] sm:$0xff] %v6356
        %6389 = vst [vmem:[%s353 + $0x90] sm:$0xff] %v6357
        %6390 = vst [vmem:[%s353 + $0x98] sm:$0xff] %v6358
        %6391 = vst [vmem:[%s353 + $0xa0] sm:$0xff] %v6359
        %6392 = vst [vmem:[%s353 + $0xa8] sm:$0xff] %v6360
        %6393 = vst [vmem:[%s353 + $0xb0] sm:$0xff] %v6361
        %6394 = vst [vmem:[%s353 + $0xb8] sm:$0xff] %v6362
        %6395 = vst [vmem:[%s353 + $0xc0] sm:$0xff] %v6363
        %6396 = vst [vmem:[%s353 + $0xc8] sm:$0xff] %v6364
        %6397 = vst [vmem:[%s353 + $0xd0] sm:$0xff] %v6365
        %6398 = vst [vmem:[%s353 + $0xd8] sm:$0xff] %v6366
        %6399 = vst [vmem:[%s353 + $0xe0] sm:$0xff] %v6367
        %6400 = vst [vmem:[%s353 + $0xe8] sm:$0xff] %v6368
        %6401 = vst [vmem:[%s353 + $0xf0] sm:$0xff] %v6369
        %6402 = vst [vmem:[%s353 + $0xf8] sm:$0xff] %v6370
        %s6403 = sand.u32 %s212, 1
        %s6404 = scalar_lea.sflag [#allocation5], %s6403
        %s6405 = sand.u32 %s212, 1
        %s6406 = smul.addr %s6405, 256
        %s6407 = scalar_lea.vmem [#allocation8], %s6406
        // Predicated region
        $region61: #{tpu_custom_call.1} parent=51 // pred_check
          %p6408 = pneg %p222
        $region62: #{tpu_custom_call.1} parent=51 // pred_check_branch
          %6410 = sbr.rel (%p6408) target = $region64
        $region63: #{tpu_custom_call.1} parent=51 // pred_region
          %s6412 = ssub.s32 4096, 4096
          %6413 = vsyncadd %s6404, %s6412
          %s6414 = smul.addr %s26, 32
          %s6415 = smul.addr %s6414, 128
          %s6416 = scalar_lea.hbm %s8, %s6415
          %s6417 = sshll.u32 %s6407, 4
          %s6418 = int_to_ptr.vmem [resolvable:$true] %s6417
          %6423 = dma.vmem_to_hbm [thread:$0]  %s6418, 4096, %s6416, %s6404, 128, 128, 8
        $region64: #{tpu_custom_call.1} parent=51 // pred_fallthru
          _
      $region52: #{tpu_custom_call.1} parent=5 // pred_fallthru
        _
      %p6424 = scmp.le.s32.totalorder 2, %s21
      // Predicated region
      $region65: #{tpu_custom_call.1} parent=5 // pred_check
        %p6425 = pneg %p6424
      $region66: #{tpu_custom_call.1} parent=5 // pred_check_branch
        %6427 = sbr.rel (%p6425) target = $region68
      $region67: #{tpu_custom_call.1} parent=5 // pred_region
        %s6428 = ssub.s32 %s21, 2
        // Predicated region
        $region69: #{tpu_custom_call.1} parent=67 // pred_check
          %p6429 = pneg %p228
        $region70: #{tpu_custom_call.1} parent=67 // pred_check_branch
          %6431 = sbr.rel (%p6429) target = $region72
        $region71: #{tpu_custom_call.1} parent=67 // pred_region
          %s6432 = sand.u32 %s213, 1
          %s6433 = scalar_lea.sflag [#allocation5], %s6432
          %s6434 = sand.u32 %s213, 1
          %s6435 = smul.addr %s6434, 256
          %s6436 = scalar_lea.vmem [#allocation8], %s6435
          %6437 = dma.done %s6433, 4096
        $region72: #{tpu_custom_call.1} parent=67 // pred_fallthru
          _
      $region68: #{tpu_custom_call.1} parent=5 // pred_fallthru
        _
    $region6: #{tpu_custom_call.1} parent=1 // loop_footer
      %s25 = sadd.s32 1, %s21
    $region7: #{tpu_custom_call.1} parent=1 // loop_footer_branch
      %20 = sbr.rel target = $region3
    $region8: #{tpu_custom_call.1} parent=1 // loop_exit
      _
    %6438 = vsyncpa [#allocation4], 1
    %s6439 = scalar_lea.sflag [#allocation4], 1
    %6440 = vsyncpa %s6439, 1
    %6441 = vsyncpa [#allocation7], 1
    %6442 = vsyncpa [#allocation5], 1
    %s6443 = scalar_lea.sflag [#allocation5], 1
    %6444 = vsyncpa %s6443, 1

</llo_original>
